<compile_context>
chip_gen: v7x
topology: tpu7x:2x2x1
jax: 0.10.0
libtpu: 0.0.40
codegen_flags: <defaults>
</compile_context>

<pallas_src>
import math
import functools

import jax
import jax.numpy as jnp
from jax.experimental import pallas as pl
from jax.experimental.pallas import tpu as pltpu

BN_EPS = 1e-5
TM1 = 512                      # pass-1 (matmul) rows per grid step
TM2 = 1024                     # pass-2 (normalize) rows per grid step (mem-bound)
LANE = 128                     # pad K and Cout to multiples of 128 (lane-dense tiles)
VMEM_LIMIT = 48 * 1024 * 1024  # scoped-VMEM limit; safe on v5e/v6e/v7x at these tiles


def _round_up(v, m):
    return -(-v // m) * m


# ---------------------------------------------------------------------------
# Pallas kernels
# ---------------------------------------------------------------------------
def _make_conv_stats_kernel(n_parts):
    """Pass 1: split-K bf16 matmul -> bf16 conv tile + per-tile (sum, sumsq) f32 partials."""

    def kernel(*refs):
        x_refs = refs[:n_parts]                     # each (TM1, kpad_p) bf16
        w_refs = refs[n_parts:2 * n_parts]          # each (kpad_p, Cpad) bf16
        conv_ref = refs[2 * n_parts]                # (TM1, Cpad) bf16
        stats_ref = refs[2 * n_parts + 1]           # (1, 2, Cpad) f32
        # Initialize the accumulator directly from the first dot (no zero-fill).
        acc = jnp.dot(x_refs[0][...], w_refs[0][...],
                      preferred_element_type=jnp.float32)
        for xr, wr in zip(x_refs[1:], w_refs[1:]):
            acc = acc + jnp.dot(xr[...], wr[...], preferred_element_type=jnp.float32)
        conv_ref[...] = acc.astype(conv_ref.dtype)
        # Exact f32 stats from the f32 accumulator; two direct row stores (no concat).
        stats_ref[:, 0:1, :] = jnp.sum(acc, axis=0, keepdims=True)[None]
        stats_ref[:, 1:2, :] = jnp.sum(acc * acc, axis=0, keepdims=True)[None]

    return kernel


def _bn_relu_kernel(y_ref, s_ref, t_ref, o_ref):
    # Pass 2: y = relu(conv * scale + shift); scale/shift fold BN (train-mode stats).
    y = y_ref[...].astype(jnp.float32)
    o_ref[...] = jnp.maximum(y * s_ref[...] + t_ref[...], 0.0).astype(o_ref.dtype)


def _bn_relu_res_kernel(y_ref, s_ref, t_ref, r_ref, o_ref):
    # Same, with the RSU residual add (hx1d + hxin) fused in.
    y = y_ref[...].astype(jnp.float32)
    out = jnp.maximum(y * s_ref[...] + t_ref[...], 0.0) + r_ref[...].astype(jnp.float32)
    o_ref[...] = out.astype(o_ref.dtype)


# ---------------------------------------------------------------------------
# JAX glue: im2col (bf16), ceil-mode 2x2 max pool, bilinear upsample as matmuls
# ---------------------------------------------------------------------------
def _im2col(x, dil):
    # x: (N, H, W, C) bf16 -> (N*H*W, 9*C) bf16, tap order (dy, dx, c).
    n, h, w, c = x.shape
    xp = jnp.pad(x, ((0, 0), (dil, dil), (dil, dil), (0, 0)))
    cols = []
    for dy in range(3):
        for dx in range(3):
            cols.append(xp[:, dy * dil:dy * dil + h, dx * dil:dx * dil + w, :])
    return jnp.concatenate(cols, axis=-1).reshape(n * h * w, 9 * c)


def _maxpool2_ceil(x):
    # MaxPool2d(kernel=2, stride=2, ceil_mode=True) on NHWC (bf16 in/out).
    n, h, w, c = x.shape
    hp, wp = -(-h // 2) * 2, -(-w // 2) * 2
    x = jnp.pad(x, ((0, 0), (0, hp - h), (0, wp - w), (0, 0)),
                constant_values=-jnp.inf)
    return x.reshape(n, hp // 2, 2, wp // 2, 2, c).max(axis=(2, 4))


def _interp_matrix(out_size, in_size):
    # align_corners=False bilinear interpolation weights as a dense (out, in) matrix.
    pos = jnp.maximum(
        (jnp.arange(out_size, dtype=jnp.float32) + 0.5) * (in_size / out_size) - 0.5, 0.0)
    i0 = jnp.floor(pos).astype(jnp.int32)
    i1 = jnp.minimum(i0 + 1, in_size - 1)
    w1 = pos - i0.astype(jnp.float32)
    w0 = 1.0 - w1
    eye = jnp.eye(in_size, dtype=jnp.float32)
    return eye[i0] * w0[:, None] + eye[i1] * w1[:, None]


def _upsample_bilinear(x, oh, ow):
    # F.upsample(mode='bilinear') semantics (align_corners=False), via two matmuls.
    _, h, w, _ = x.shape
    mh = _interp_matrix(oh, h)
    mw = _interp_matrix(ow, w)
    y = jnp.einsum('oh,nhwc->nowc', mh, x.astype(jnp.float32))
    y = jnp.einsum('pw,nowc->nopc', mw, y)
    return y.astype(jnp.bfloat16)


# ---------------------------------------------------------------------------
# RBC block = Conv(3x3, dilation=d, padding=d) + BN(train) + ReLU
# ---------------------------------------------------------------------------
def _rbc_apply(params, x_parts, dil=1, residual_padded=None, return_padded=False):
    """x_parts: list of NHWC bf16 tensors whose channels are (virtually) concatenated.

    residual_padded: optional (Mpad, Cpad) bf16 buffer (already in pass-2 layout).
    """
    n, h, w, _ = x_parts[0].shape
    cout = params["w"].shape[-1]
    m = n * h * w
    mpad = _round_up(m, max(TM1, TM2))        # TM2 is a multiple of TM1
    mt1 = mpad // TM1
    mt2 = mpad // TM2
    cpad = _round_up(cout, LANE)

    # Split weight along Cin to match the separate inputs (avoids HBM concat copy).
    w_full = params["w"]                                      # (3, 3, Cin_total, Cout)
    cins = [p.shape[-1] for p in x_parts]
    offs = [0]
    for c in cins:
        offs.append(offs[-1] + c)

    x_ops, w_ops, kpads = [], [], []
    for part, c, off in zip(x_parts, cins, offs[:-1]):
        k = 9 * c
        kpad = _round_up(k, LANE)
        # im2col + pad entirely in bf16 so the 9x-expanded intermediate is 2 B/elem.
        xcol = _im2col(part.astype(jnp.bfloat16), dil)        # (M, 9*c) bf16
        xcol = jnp.pad(xcol, ((0, mpad - m), (0, kpad - k)))
        x_ops.append(xcol)
        wmat = w_full[:, :, off:off + c, :].reshape(k, cout).astype(jnp.bfloat16)
        wmat = jnp.pad(wmat, ((0, kpad - k), (0, cpad - cout)))
        w_ops.append(wmat)
        kpads.append(kpad)

    # ---- pass 1: tiled matmul + per-tile channel sums -------------------------------
    n_parts = len(x_parts)
    kernel1 = _make_conv_stats_kernel(n_parts)
    in_specs1 = ([pl.BlockSpec((TM1, kp), lambda i: (i, 0)) for kp in kpads] +
                 [pl.BlockSpec((kp, cpad), lambda i: (0, 0)) for kp in kpads])
    out_shape1 = (jax.ShapeDtypeStruct((mpad, cpad), jnp.bfloat16),
                  jax.ShapeDtypeStruct((mt1, 2, cpad), jnp.float32))
    out_specs1 = (pl.BlockSpec((TM1, cpad), lambda i: (i, 0)),
                  pl.BlockSpec((1, 2, cpad), lambda i: (i, 0, 0)))
    flops1 = 2 * mpad * sum(kpads) * cpad
    bytes1 = (sum(mpad * kp * 2 for kp in kpads)
              + sum(kp * cpad * 2 for kp in kpads)
              + mpad * cpad * 2 + mt1 * 2 * cpad * 4)
    conv_out, stats = pl.pallas_call(
        kernel1,
        out_shape=out_shape1,
        grid=(mt1,),
        in_specs=in_specs1,
        out_specs=out_specs1,
        compiler_params=pltpu.CompilerParams(
            dimension_semantics=("parallel",),
            vmem_limit_bytes=VMEM_LIMIT),
        cost_estimate=pl.CostEstimate(flops=flops1, transcendentals=0,
                                      bytes_accessed=bytes1),
    )(*x_ops, *w_ops)

    # ---- batch statistics (tiny reduction, plain JAX) -------------------------------
    # Zero-padded rows contribute 0 to both sums, so dividing by the true M is exact.
    tot = jnp.sum(stats, axis=0)                              # (2, Cpad)
    mean = tot[0, :cout] / m
    var = jnp.maximum(tot[1, :cout] / m - mean * mean, 0.0)   # biased (train-mode) var
    # NOTE: the nn.Conv2d bias cancels exactly in (conv - mean) under train-mode BN,
    # so it is intentionally never added.
    scale = params["gamma"][0] * jax.lax.rsqrt(var + BN_EPS)
    shift = params["beta"][0] - mean * scale
    scale = jnp.pad(scale, (0, cpad - cout)).reshape(1, cpad)
    shift = jnp.pad(shift, (0, cpad - cout)).reshape(1, cpad)

    # ---- pass 2: tiled normalize + ReLU (+ residual), all bf16 streams --------------
    args = [conv_out, scale, shift]
    in_specs2 = [pl.BlockSpec((TM2, cpad), lambda i: (i, 0)),
                 pl.BlockSpec((1, cpad), lambda i: (0, 0)),
                 pl.BlockSpec((1, cpad), lambda i: (0, 0))]
    if residual_padded is not None:
        assert residual_padded.shape == (mpad, cpad), (residual_padded.shape, mpad, cpad)
        args.append(residual_padded)
        in_specs2.append(pl.BlockSpec((TM2, cpad), lambda i: (i, 0)))
        kernel2 = _bn_relu_res_kernel
        n_streams = 4
    else:
        kernel2 = _bn_relu_kernel
        n_streams = 3
    y = pl.pallas_call(
        kernel2,
        out_shape=jax.ShapeDtypeStruct((mpad, cpad), jnp.bfloat16),
        grid=(mt2,),
        in_specs=in_specs2,
        out_specs=pl.BlockSpec((TM2, cpad), lambda i: (i, 0)),
        input_output_aliases={0: 0},              # reuse conv_out buffer in place
        compiler_params=pltpu.CompilerParams(
            dimension_semantics=("parallel",),
            vmem_limit_bytes=VMEM_LIMIT),
        cost_estimate=pl.CostEstimate(
            flops=3 * mpad * cpad, transcendentals=0,
            bytes_accessed=n_streams * mpad * cpad * 2 + 2 * cpad * 4),
    )(*args)

    out_nhwc = y[:m, :cout].reshape(n, h, w, cout)
    if return_padded:
        return out_nhwc, y
    return out_nhwc


# ---------------------------------------------------------------------------
# RSU4 forward
# ---------------------------------------------------------------------------
def rsu4_forward(params, x_nchw):
    x = jnp.transpose(x_nchw, (0, 2, 3, 1)).astype(jnp.bfloat16)   # NCHW -> NHWC bf16

    # hxin also returned in its padded pass-2 layout for the fused residual add.
    hxin, hxin_pad = _rbc_apply(params["in"], [x], 1, return_padded=True)
    hx1 = _rbc_apply(params["c1"], [hxin], 1)
    hx = _maxpool2_ceil(hx1)
    hx2 = _rbc_apply(params["c2"], [hx], 1)
    hx = _maxpool2_ceil(hx2)
    hx3 = _rbc_apply(params["c3"], [hx], 1)
    hx4 = _rbc_apply(params["c4"], [hx3], 2)                       # dirate=2

    # Decoder: channel-concat expressed as split-K contraction inside the kernel.
    hx3d = _rbc_apply(params["c3d"], [hx4, hx3], 1)
    hx3dup = _upsample_bilinear(hx3d, hx2.shape[1], hx2.shape[2])
    hx2d = _rbc_apply(params["c2d"], [hx3dup, hx2], 1)
    hx2dup = _upsample_bilinear(hx2d, hx1.shape[1], hx1.shape[2])
    hx1d = _rbc_apply(params["c1d"], [hx2dup, hx1], 1,
                      residual_padded=hxin_pad)                    # + hxin fused

    return jnp.transpose(hx1d, (0, 3, 1, 2)).astype(jnp.float32)   # NHWC -> NCHW


# ---------------------------------------------------------------------------
# Deterministic parameter construction (synthetic, matching __init__ shapes)
# ---------------------------------------------------------------------------
def _make_rbc_params(key, cin, cout):
    k_w, k_b = jax.random.split(key)
    fan_in = 9 * cin
    w = jax.random.normal(k_w, (3, 3, cin, cout), jnp.float32) / math.sqrt(fan_in)
    # Conv bias exists in the module but cancels under train-mode BN -> never used.
    b = jax.random.normal(k_b, (1, cout), jnp.float32) * 0.1
    gamma = jnp.ones((1, cout), jnp.float32)                  # BN weight init = 1
    beta = jnp.zeros((1, cout), jnp.float32)                  # BN bias init = 0
    return {"w": w, "b": b, "gamma": gamma, "beta": beta}


def make_rsu4_params(key, in_ch, mid_ch, out_ch):
    names_and_io = [
        ("in", in_ch, out_ch),
        ("c1", out_ch, mid_ch),
        ("c2", mid_ch, mid_ch),
        ("c3", mid_ch, mid_ch),
        ("c4", mid_ch, mid_ch),
        ("c3d", mid_ch * 2, mid_ch),
        ("c2d", mid_ch * 2, mid_ch),
        ("c1d", mid_ch * 2, out_ch),
    ]
    keys = jax.random.split(key, len(names_and_io))
    return {name: _make_rbc_params(k, ci, co)
            for k, (name, ci, co) in zip(keys, names_and_io)}


if __name__ == "__main__":
    key = jax.random.PRNGKey(0)
    k_params, k_x = jax.random.split(key)

    N, IN_CH, MID_CH, OUT_CH, H, W = 2, 4, 8, 4, 16, 16
    params = make_rsu4_params(k_params, IN_CH, MID_CH, OUT_CH)
    x = jax.random.normal(k_x, (N, IN_CH, H, W), jnp.float32)   # NCHW like PyTorch

    fwd = jax.jit(functools.partial(rsu4_forward, params))
    out = fwd(x)
    jax.block_until_ready(out)

    assert out.shape == (N, OUT_CH, H, W), out.shape
    assert jnp.all(jnp.isfinite(out))
    print("KERNEL_OK")
</pallas_src>

<mosaic_0001>
module attributes {stable_mosaic.version = 11 : i64} {
  func.func @kernel(%arg0: i32, %arg1: memref<512x128xbf16, #tpu.memory_space<vmem>>, %arg2: memref<128x128xbf16, #tpu.memory_space<vmem>>, %arg3: memref<512x128xbf16, #tpu.memory_space<vmem>>, %arg4: memref<1x2x128xf32, #tpu.memory_space<vmem>>) attributes {dimension_semantics = [#tpu.dimension_semantics<parallel>], iteration_bounds = array<i64: 2>, scalar_prefetch = 0 : i64, scratch_operands = 0 : i64, tpu.core_type = #tpu.core_type<tc>, window_params = [{transform_indices = @transform_0, window_bounds = array<i64: 512, 128>}, {pipeline_mode = #tpu.pipeline_mode<synchronous>, transform_indices = @transform_1, window_bounds = array<i64: 128, 128>}, {transform_indices = @transform_2, window_bounds = array<i64: 512, 128>}, {transform_indices = @transform_3, window_bounds = array<i64: 1, 2, 128>}]} {
    %c0 = arith.constant 0 : index
    %c0_0 = arith.constant 0 : index
    %0 = vector.load %arg1[%c0, %c0_0] : memref<512x128xbf16, #tpu.memory_space<vmem>>, vector<512x128xbf16>
    %c0_1 = arith.constant 0 : index
    %c0_2 = arith.constant 0 : index
    %1 = vector.load %arg2[%c0_1, %c0_2] : memref<128x128xbf16, #tpu.memory_space<vmem>>, vector<128x128xbf16>
    %cst = arith.constant dense<0.000000e+00> : vector<512x128xf32>
    %2 = tpu.matmul %0, %1, %cst {dimension_numbers = #tpu.dot_dimension_numbers<[1], [0], [0], [1], [0, 0, 1, 1], [], []>} : vector<512x128xbf16>, vector<128x128xbf16>, vector<512x128xf32> -> vector<512x128xf32>
    %3 = arith.truncf %2 : vector<512x128xf32> to vector<512x128xbf16>
    %c0_3 = arith.constant 0 : index
    %c0_4 = arith.constant 0 : index
    %4 = vector.load %arg3[%c0_3, %c0_4] : memref<512x128xbf16, #tpu.memory_space<vmem>>, vector<512x128xbf16>
    tpu.vector_store %arg3[%c0_3, %c0_4], %3 {strides = array<i32>} : memref<512x128xbf16, #tpu.memory_space<vmem>>, vector<512x128xbf16>,
    %cst_5 = arith.constant dense<0.000000e+00> : vector<128xf32>
    %5 = vector.multi_reduction <add>, %2, %cst_5 [0] : vector<512x128xf32> to vector<128xf32>
    %6 = vector.shape_cast %5 : vector<128xf32> to vector<1x128xf32>
    %7 = vector.shape_cast %6 : vector<1x128xf32> to vector<1x1x128xf32>
    %c0_6 = arith.constant 0 : index
    %c0_7 = arith.constant 0 : index
    %c0_8 = arith.constant 0 : index
    %8 = vector.load %arg4[%c0_6, %c0_7, %c0_8] : memref<1x2x128xf32, #tpu.memory_space<vmem>>, vector<1x1x128xf32>
    tpu.vector_store %arg4[%c0_6, %c0_7, %c0_8], %7 {strides = array<i32>} : memref<1x2x128xf32, #tpu.memory_space<vmem>>, vector<1x1x128xf32>,
    %9 = arith.mulf %2, %2 : vector<512x128xf32>
    %cst_9 = arith.constant dense<0.000000e+00> : vector<128xf32>
    %10 = vector.multi_reduction <add>, %9, %cst_9 [0] : vector<512x128xf32> to vector<128xf32>
    %11 = vector.shape_cast %10 : vector<128xf32> to vector<1x128xf32>
    %12 = vector.shape_cast %11 : vector<1x128xf32> to vector<1x1x128xf32>
    %c0_10 = arith.constant 0 : index
    %c1 = arith.constant 1 : index
    %c0_11 = arith.constant 0 : index
    %13 = vector.load %arg4[%c0_10, %c1, %c0_11] : memref<1x2x128xf32, #tpu.memory_space<vmem>>, vector<1x1x128xf32>
    tpu.vector_store %arg4[%c0_10, %c1, %c0_11], %12 {strides = array<i32>} : memref<1x2x128xf32, #tpu.memory_space<vmem>>, vector<1x1x128xf32>,
    return
  }
  func.func @transform_0(%arg0: i32) -> (i32, i32) {
    %c0_i32 = arith.constant 0 : i32
    %c0_i32_0 = arith.constant 0 : i32
    return %arg0, %c0_i32 : i32, i32
  }
  func.func @transform_1(%arg0: i32) -> (i32, i32) {
    %c0_i32 = arith.constant 0 : i32
    %c0_i32_0 = arith.constant 0 : i32
    %c0_i32_1 = arith.constant 0 : i32
    return %c0_i32, %c0_i32_0 : i32, i32
  }
  func.func @transform_2(%arg0: i32) -> (i32, i32) {
    %c0_i32 = arith.constant 0 : i32
    %c0_i32_0 = arith.constant 0 : i32
    return %arg0, %c0_i32 : i32, i32
  }
  func.func @transform_3(%arg0: i32) -> (i32, i32, i32) {
    %c0_i32 = arith.constant 0 : i32
    %c0_i32_0 = arith.constant 0 : i32
    %c0_i32_1 = arith.constant 0 : i32
    return %arg0, %c0_i32, %c0_i32_0 : i32, i32, i32
  }
}

module attributes {stable_mosaic.version = 11 : i64} {
  func.func @_bn_relu_kernel(%arg0: i32, %arg1: memref<1024x128xbf16, #tpu.memory_space<vmem>>, %arg2: memref<1x128xf32, #tpu.memory_space<vmem>>, %arg3: memref<1x128xf32, #tpu.memory_space<vmem>>, %arg4: memref<1024x128xbf16, #tpu.memory_space<vmem>>) attributes {dimension_semantics = [#tpu.dimension_semantics<parallel>], iteration_bounds = array<i64: 1>, scalar_prefetch = 0 : i64, scratch_operands = 0 : i64, tpu.core_type = #tpu.core_type<tc>, window_params = [{transform_indices = @transform_0, window_bounds = array<i64: 1024, 128>}, {pipeline_mode = #tpu.pipeline_mode<synchronous>, transform_indices = @transform_1, window_bounds = array<i64: 1, 128>}, {pipeline_mode = #tpu.pipeline_mode<synchronous>, transform_indices = @transform_2, window_bounds = array<i64: 1, 128>}, {transform_indices = @transform_3, window_bounds = array<i64: 1024, 128>}]} {
    %c0 = arith.constant 0 : index
    %c0_0 = arith.constant 0 : index
    %0 = vector.load %arg1[%c0, %c0_0] : memref<1024x128xbf16, #tpu.memory_space<vmem>>, vector<1024x128xbf16>
    %1 = arith.extf %0 : vector<1024x128xbf16> to vector<1024x128xf32>
    %c0_1 = arith.constant 0 : index
    %c0_2 = arith.constant 0 : index
    %2 = vector.load %arg2[%c0_1, %c0_2] : memref<1x128xf32, #tpu.memory_space<vmem>>, vector<1x128xf32>
    %3 = vector.broadcast %2 : vector<1x128xf32> to vector<1024x128xf32>
    %4 = arith.mulf %1, %3 : vector<1024x128xf32>
    %c0_3 = arith.constant 0 : index
    %c0_4 = arith.constant 0 : index
    %5 = vector.load %arg3[%c0_3, %c0_4] : memref<1x128xf32, #tpu.memory_space<vmem>>, vector<1x128xf32>
    %6 = vector.broadcast %5 : vector<1x128xf32> to vector<1024x128xf32>
    %7 = arith.addf %4, %6 : vector<1024x128xf32>
    %cst = arith.constant 0.000000e+00 : f32
    %8 = vector.broadcast %cst : f32 to vector<1024x128xf32>
    %9 = arith.maximumf %7, %8 : vector<1024x128xf32>
    %10 = arith.truncf %9 : vector<1024x128xf32> to vector<1024x128xbf16>
    %c0_5 = arith.constant 0 : index
    %c0_6 = arith.constant 0 : index
    %11 = vector.load %arg4[%c0_5, %c0_6] : memref<1024x128xbf16, #tpu.memory_space<vmem>>, vector<1024x128xbf16>
    tpu.vector_store %arg4[%c0_5, %c0_6], %10 {strides = array<i32>} : memref<1024x128xbf16, #tpu.memory_space<vmem>>, vector<1024x128xbf16>,
    return
  }
  func.func @transform_0(%arg0: i32) -> (i32, i32) {
    %c0_i32 = arith.constant 0 : i32
    %c0_i32_0 = arith.constant 0 : i32
    return %arg0, %c0_i32 : i32, i32
  }
  func.func @transform_1(%arg0: i32) -> (i32, i32) {
    %c0_i32 = arith.constant 0 : i32
    %c0_i32_0 = arith.constant 0 : i32
    %c0_i32_1 = arith.constant 0 : i32
    return %c0_i32, %c0_i32_0 : i32, i32
  }
  func.func @transform_2(%arg0: i32) -> (i32, i32) {
    %c0_i32 = arith.constant 0 : i32
    %c0_i32_0 = arith.constant 0 : i32
    %c0_i32_1 = arith.constant 0 : i32
    return %c0_i32, %c0_i32_0 : i32, i32
  }
  func.func @transform_3(%arg0: i32) -> (i32, i32) {
    %c0_i32 = arith.constant 0 : i32
    %c0_i32_0 = arith.constant 0 : i32
    return %arg0, %c0_i32 : i32, i32
  }
}

module attributes {stable_mosaic.version = 11 : i64} {
  func.func @kernel(%arg0: i32, %arg1: memref<512x128xbf16, #tpu.memory_space<vmem>>, %arg2: memref<512x128xbf16, #tpu.memory_space<vmem>>, %arg3: memref<128x128xbf16, #tpu.memory_space<vmem>>, %arg4: memref<128x128xbf16, #tpu.memory_space<vmem>>, %arg5: memref<512x128xbf16, #tpu.memory_space<vmem>>, %arg6: memref<1x2x128xf32, #tpu.memory_space<vmem>>) attributes {dimension_semantics = [#tpu.dimension_semantics<parallel>], iteration_bounds = array<i64: 2>, scalar_prefetch = 0 : i64, scratch_operands = 0 : i64, tpu.core_type = #tpu.core_type<tc>, window_params = [{transform_indices = @transform_0, window_bounds = array<i64: 512, 128>}, {transform_indices = @transform_1, window_bounds = array<i64: 512, 128>}, {pipeline_mode = #tpu.pipeline_mode<synchronous>, transform_indices = @transform_2, window_bounds = array<i64: 128, 128>}, {pipeline_mode = #tpu.pipeline_mode<synchronous>, transform_indices = @transform_3, window_bounds = array<i64: 128, 128>}, {transform_indices = @transform_4, window_bounds = array<i64: 512, 128>}, {transform_indices = @transform_5, window_bounds = array<i64: 1, 2, 128>}]} {
    %c0 = arith.constant 0 : index
    %c0_0 = arith.constant 0 : index
    %0 = vector.load %arg1[%c0, %c0_0] : memref<512x128xbf16, #tpu.memory_space<vmem>>, vector<512x128xbf16>
    %c0_1 = arith.constant 0 : index
    %c0_2 = arith.constant 0 : index
    %1 = vector.load %arg3[%c0_1, %c0_2] : memref<128x128xbf16, #tpu.memory_space<vmem>>, vector<128x128xbf16>
    %cst = arith.constant dense<0.000000e+00> : vector<512x128xf32>
    %2 = tpu.matmul %0, %1, %cst {dimension_numbers = #tpu.dot_dimension_numbers<[1], [0], [0], [1], [0, 0, 1, 1], [], []>} : vector<512x128xbf16>, vector<128x128xbf16>, vector<512x128xf32> -> vector<512x128xf32>
    %c0_3 = arith.constant 0 : index
    %c0_4 = arith.constant 0 : index
    %3 = vector.load %arg2[%c0_3, %c0_4] : memref<512x128xbf16, #tpu.memory_space<vmem>>, vector<512x128xbf16>
    %c0_5 = arith.constant 0 : index
    %c0_6 = arith.constant 0 : index
    %4 = vector.load %arg4[%c0_5, %c0_6] : memref<128x128xbf16, #tpu.memory_space<vmem>>, vector<128x128xbf16>
    %cst_7 = arith.constant dense<0.000000e+00> : vector<512x128xf32>
    %5 = tpu.matmul %3, %4, %cst_7 {dimension_numbers = #tpu.dot_dimension_numbers<[1], [0], [0], [1], [0, 0, 1, 1], [], []>} : vector<512x128xbf16>, vector<128x128xbf16>, vector<512x128xf32> -> vector<512x128xf32>
    %6 = arith.addf %2, %5 : vector<512x128xf32>
    %7 = arith.truncf %6 : vector<512x128xf32> to vector<512x128xbf16>
    %c0_8 = arith.constant 0 : index
    %c0_9 = arith.constant 0 : index
    %8 = vector.load %arg5[%c0_8, %c0_9] : memref<512x128xbf16, #tpu.memory_space<vmem>>, vector<512x128xbf16>
    tpu.vector_store %arg5[%c0_8, %c0_9], %7 {strides = array<i32>} : memref<512x128xbf16, #tpu.memory_space<vmem>>, vector<512x128xbf16>,
    %cst_10 = arith.constant dense<0.000000e+00> : vector<128xf32>
    %9 = vector.multi_reduction <add>, %6, %cst_10 [0] : vector<512x128xf32> to vector<128xf32>
    %10 = vector.shape_cast %9 : vector<128xf32> to vector<1x128xf32>
    %11 = vector.shape_cast %10 : vector<1x128xf32> to vector<1x1x128xf32>
    %c0_11 = arith.constant 0 : index
    %c0_12 = arith.constant 0 : index
    %c0_13 = arith.constant 0 : index
    %12 = vector.load %arg6[%c0_11, %c0_12, %c0_13] : memref<1x2x128xf32, #tpu.memory_space<vmem>>, vector<1x1x128xf32>
    tpu.vector_store %arg6[%c0_11, %c0_12, %c0_13], %11 {strides = array<i32>} : memref<1x2x128xf32, #tpu.memory_space<vmem>>, vector<1x1x128xf32>,
    %13 = arith.mulf %6, %6 : vector<512x128xf32>
    %cst_14 = arith.constant dense<0.000000e+00> : vector<128xf32>
    %14 = vector.multi_reduction <add>, %13, %cst_14 [0] : vector<512x128xf32> to vector<128xf32>
    %15 = vector.shape_cast %14 : vector<128xf32> to vector<1x128xf32>
    %16 = vector.shape_cast %15 : vector<1x128xf32> to vector<1x1x128xf32>
    %c0_15 = arith.constant 0 : index
    %c1 = arith.constant 1 : index
    %c0_16 = arith.constant 0 : index
    %17 = vector.load %arg6[%c0_15, %c1, %c0_16] : memref<1x2x128xf32, #tpu.memory_space<vmem>>, vector<1x1x128xf32>
    tpu.vector_store %arg6[%c0_15, %c1, %c0_16], %16 {strides = array<i32>} : memref<1x2x128xf32, #tpu.memory_space<vmem>>, vector<1x1x128xf32>,
    return
  }
  func.func @transform_0(%arg0: i32) -> (i32, i32) {
    %c0_i32 = arith.constant 0 : i32
    %c0_i32_0 = arith.constant 0 : i32
    return %arg0, %c0_i32 : i32, i32
  }
  func.func @transform_1(%arg0: i32) -> (i32, i32) {
    %c0_i32 = arith.constant 0 : i32
    %c0_i32_0 = arith.constant 0 : i32
    return %arg0, %c0_i32 : i32, i32
  }
  func.func @transform_2(%arg0: i32) -> (i32, i32) {
    %c0_i32 = arith.constant 0 : i32
    %c0_i32_0 = arith.constant 0 : i32
    %c0_i32_1 = arith.constant 0 : i32
    return %c0_i32, %c0_i32_0 : i32, i32
  }
  func.func @transform_3(%arg0: i32) -> (i32, i32) {
    %c0_i32 = arith.constant 0 : i32
    %c0_i32_0 = arith.constant 0 : i32
    %c0_i32_1 = arith.constant 0 : i32
    return %c0_i32, %c0_i32_0 : i32, i32
  }
  func.func @transform_4(%arg0: i32) -> (i32, i32) {
    %c0_i32 = arith.constant 0 : i32
    %c0_i32_0 = arith.constant 0 : i32
    return %arg0, %c0_i32 : i32, i32
  }
  func.func @transform_5(%arg0: i32) -> (i32, i32, i32) {
    %c0_i32 = arith.constant 0 : i32
    %c0_i32_0 = arith.constant 0 : i32
    %c0_i32_1 = arith.constant 0 : i32
    return %arg0, %c0_i32, %c0_i32_0 : i32, i32, i32
  }
}

module attributes {stable_mosaic.version = 11 : i64} {
  func.func @_bn_relu_res_kernel(%arg0: i32, %arg1: memref<1024x128xbf16, #tpu.memory_space<vmem>>, %arg2: memref<1x128xf32, #tpu.memory_space<vmem>>, %arg3: memref<1x128xf32, #tpu.memory_space<vmem>>, %arg4: memref<1024x128xbf16, #tpu.memory_space<vmem>>, %arg5: memref<1024x128xbf16, #tpu.memory_space<vmem>>) attributes {dimension_semantics = [#tpu.dimension_semantics<parallel>], iteration_bounds = array<i64: 1>, scalar_prefetch = 0 : i64, scratch_operands = 0 : i64, tpu.core_type = #tpu.core_type<tc>, window_params = [{transform_indices = @transform_0, window_bounds = array<i64: 1024, 128>}, {pipeline_mode = #tpu.pipeline_mode<synchronous>, transform_indices = @transform_1, window_bounds = array<i64: 1, 128>}, {pipeline_mode = #tpu.pipeline_mode<synchronous>, transform_indices = @transform_2, window_bounds = array<i64: 1, 128>}, {transform_indices = @transform_3, window_bounds = array<i64: 1024, 128>}, {transform_indices = @transform_4, window_bounds = array<i64: 1024, 128>}]} {
    %c0 = arith.constant 0 : index
    %c0_0 = arith.constant 0 : index
    %0 = vector.load %arg1[%c0, %c0_0] : memref<1024x128xbf16, #tpu.memory_space<vmem>>, vector<1024x128xbf16>
    %1 = arith.extf %0 : vector<1024x128xbf16> to vector<1024x128xf32>
    %c0_1 = arith.constant 0 : index
    %c0_2 = arith.constant 0 : index
    %2 = vector.load %arg2[%c0_1, %c0_2] : memref<1x128xf32, #tpu.memory_space<vmem>>, vector<1x128xf32>
    %3 = vector.broadcast %2 : vector<1x128xf32> to vector<1024x128xf32>
    %4 = arith.mulf %1, %3 : vector<1024x128xf32>
    %c0_3 = arith.constant 0 : index
    %c0_4 = arith.constant 0 : index
    %5 = vector.load %arg3[%c0_3, %c0_4] : memref<1x128xf32, #tpu.memory_space<vmem>>, vector<1x128xf32>
    %6 = vector.broadcast %5 : vector<1x128xf32> to vector<1024x128xf32>
    %7 = arith.addf %4, %6 : vector<1024x128xf32>
    %cst = arith.constant 0.000000e+00 : f32
    %8 = vector.broadcast %cst : f32 to vector<1024x128xf32>
    %9 = arith.maximumf %7, %8 : vector<1024x128xf32>
    %c0_5 = arith.constant 0 : index
    %c0_6 = arith.constant 0 : index
    %10 = vector.load %arg4[%c0_5, %c0_6] : memref<1024x128xbf16, #tpu.memory_space<vmem>>, vector<1024x128xbf16>
    %11 = arith.extf %10 : vector<1024x128xbf16> to vector<1024x128xf32>
    %12 = arith.addf %9, %11 : vector<1024x128xf32>
    %13 = arith.truncf %12 : vector<1024x128xf32> to vector<1024x128xbf16>
    %c0_7 = arith.constant 0 : index
    %c0_8 = arith.constant 0 : index
    %14 = vector.load %arg5[%c0_7, %c0_8] : memref<1024x128xbf16, #tpu.memory_space<vmem>>, vector<1024x128xbf16>
    tpu.vector_store %arg5[%c0_7, %c0_8], %13 {strides = array<i32>} : memref<1024x128xbf16, #tpu.memory_space<vmem>>, vector<1024x128xbf16>,
    return
  }
  func.func @transform_0(%arg0: i32) -> (i32, i32) {
    %c0_i32 = arith.constant 0 : i32
    %c0_i32_0 = arith.constant 0 : i32
    return %arg0, %c0_i32 : i32, i32
  }
  func.func @transform_1(%arg0: i32) -> (i32, i32) {
    %c0_i32 = arith.constant 0 : i32
    %c0_i32_0 = arith.constant 0 : i32
    %c0_i32_1 = arith.constant 0 : i32
    return %c0_i32, %c0_i32_0 : i32, i32
  }
  func.func @transform_2(%arg0: i32) -> (i32, i32) {
    %c0_i32 = arith.constant 0 : i32
    %c0_i32_0 = arith.constant 0 : i32
    %c0_i32_1 = arith.constant 0 : i32
    return %c0_i32, %c0_i32_0 : i32, i32
  }
  func.func @transform_3(%arg0: i32) -> (i32, i32) {
    %c0_i32 = arith.constant 0 : i32
    %c0_i32_0 = arith.constant 0 : i32
    return %arg0, %c0_i32 : i32, i32
  }
  func.func @transform_4(%arg0: i32) -> (i32, i32) {
    %c0_i32 = arith.constant 0 : i32
    %c0_i32_0 = arith.constant 0 : i32
    return %arg0, %c0_i32 : i32, i32
  }
}

</mosaic_0001>

<llo_original>
// kernel: rsu4_forward.16
$region0: #{rsu4_forward.16}
  #allocation0 [shape = 'u32[]', space=smem, size = 0x4, offset = 0x4, fixed_abs, tag = 'smem constant byte address 0x4 - core index']
  #allocation1 [shape = 'u32[144,128]{1,0:T(1,128)}', space=vmem, size = 0x12000, scoped, tag = 'internal scratch']
  %s0 = inlined_call_operand.vmem [shape: bf16[1024,128], index: 0, kind: input, shape index: {}]
  %s1 = inlined_call_operand.vmem [shape: bf16[128,128], index: 1, kind: input, shape index: {}]
  %s2 = inlined_call_operand.vmem [shape: bf16[1024,128], index: 2, kind: output, shape index: {0}]
  %s3 = inlined_call_operand.vmem [shape: f32[2,2,128], index: 3, kind: output, shape index: {1}]
  %4 = xla_tuple %s2, %s3
  %s5 = sld [smem:[#allocation0]]
  $region49: #{rsu4_forward.16} parent=0
    _
  %s7 = ssub.s32 1, %s5
  %s8 = scalar_select 0, %s7, %s5
  loop: start=0, step=1, limit=4
  $region2: #{rsu4_forward.16} parent=0 // loop_pre_header
    _
  $region3: #{rsu4_forward.16} parent=0 // loop_header
    %s10 = sphi 0, %s14
    %p11 = scmp.ge.s32.totalorder %s10, 4
    %s20 = sphi 0, %s22
    %s23 = sphi 0, %s20
    %s24 = sphi 0, %s23
    %s40 = sphi 0, %s24
    %s44 = sphi 0, %s44
    %s46 = sphi 0, %s44
    %s47 = sphi 0, %s46
    %s61 = sphi 0, %s47
    %s67 = sphi 0, %s69
    %s70 = sphi 0, %s67
    %s71 = sphi 0, %s70
    %s87 = sphi 0, %s71
    %s93 = sphi 0, %s95
    %s96 = sphi 0, %s93
    %s97 = sphi 0, %s96
    %s113 = sphi 0, %s97
  $region4: #{rsu4_forward.16} parent=0 // loop_header_branch
    %13 = sbr.rel (%p11) target = $region8
  $region5: #{rsu4_forward.16} parent=0 // loop_body
    %s15 = ssub.s32 %s10, 1
    %s16 = ssub.s32 %s10, 2
    %s17 = sadd.s32 %s10, 1
    %s18 = ssub.s32 %s10, %s17
    %p19 = scmp.eq.s32.totalorder %s18, 0
    %s21 = sadd.s32 %s20, 1
    %s22 = scalar_select %p19, %s20, %s21
    %p25 = pneg %p19
    %p26 = scmp.eq.s32.totalorder %s10, 1
    %p27 = por %p25, %p26
    %p28 = scmp.ne.s32.totalorder %s20, %s23
    %p29 = scmp.eq.s32.totalorder %s10, 0
    %p30 = por %p28, %p29
    %p31 = scmp.ne.s32.totalorder %s20, %s23
    %p32 = scmp.eq.s32.totalorder %s15, 1
    %p33 = por %p31, %p32
    %p34 = scmp.ne.s32.totalorder %s23, %s24
    %p35 = scmp.eq.s32.totalorder %s15, 0
    %p36 = por %p34, %p35
    %p37 = scmp.ne.s32.totalorder %s23, %s24
    %p38 = scmp.eq.s32.totalorder %s16, 1
    %p39 = por %p37, %p38
    %p41 = scmp.ne.s32.totalorder %s24, %s40
    %p42 = scmp.eq.s32.totalorder %s16, 0
    %p43 = por %p41, %p42
    %s45 = sadd.s32 %s44, 1
    %p48 = scmp.eq.s32.totalorder %s10, 1
    %p49 = scmp.ne.s32.totalorder %s44, %s46
    %p50 = scmp.eq.s32.totalorder %s10, 0
    %p51 = por %p49, %p50
    %p52 = scmp.ne.s32.totalorder %s44, %s46
    %p53 = scmp.eq.s32.totalorder %s15, 1
    %p54 = por %p52, %p53
    %p55 = scmp.ne.s32.totalorder %s46, %s47
    %p56 = scmp.eq.s32.totalorder %s15, 0
    %p57 = por %p55, %p56
    %p58 = scmp.ne.s32.totalorder %s46, %s47
    %p59 = scmp.eq.s32.totalorder %s16, 1
    %p60 = por %p58, %p59
    %p62 = scmp.ne.s32.totalorder %s47, %s61
    %p63 = scmp.eq.s32.totalorder %s16, 0
    %p64 = por %p62, %p63
    %s65 = ssub.s32 %s10, %s17
    %p66 = scmp.eq.s32.totalorder %s65, 0
    %s68 = sadd.s32 %s67, 1
    %s69 = scalar_select %p66, %s67, %s68
    %p72 = pneg %p66
    %p73 = scmp.eq.s32.totalorder %s10, 1
    %p74 = por %p72, %p73
    %p75 = scmp.ne.s32.totalorder %s67, %s70
    %p76 = scmp.eq.s32.totalorder %s10, 0
    %p77 = por %p75, %p76
    %p78 = scmp.ne.s32.totalorder %s67, %s70
    %p79 = scmp.eq.s32.totalorder %s15, 1
    %p80 = por %p78, %p79
    %p81 = scmp.ne.s32.totalorder %s70, %s71
    %p82 = scmp.eq.s32.totalorder %s15, 0
    %p83 = por %p81, %p82
    %p84 = scmp.ne.s32.totalorder %s70, %s71
    %p85 = scmp.eq.s32.totalorder %s16, 1
    %p86 = por %p84, %p85
    %p88 = scmp.ne.s32.totalorder %s71, %s87
    %p89 = scmp.eq.s32.totalorder %s16, 0
    %p90 = por %p88, %p89
    %s91 = ssub.s32 %s10, %s17
    %p92 = scmp.eq.s32.totalorder %s91, 0
    %s94 = sadd.s32 %s93, 1
    %s95 = scalar_select %p92, %s93, %s94
    %p98 = pneg %p92
    %p99 = scmp.eq.s32.totalorder %s10, 1
    %p100 = por %p98, %p99
    %p101 = scmp.ne.s32.totalorder %s93, %s96
    %p102 = scmp.eq.s32.totalorder %s10, 0
    %p103 = por %p101, %p102
    %p104 = scmp.ne.s32.totalorder %s93, %s96
    %p105 = scmp.eq.s32.totalorder %s15, 1
    %p106 = por %p104, %p105
    %p107 = scmp.ne.s32.totalorder %s96, %s97
    %p108 = scmp.eq.s32.totalorder %s15, 0
    %p109 = por %p107, %p108
    %p110 = scmp.ne.s32.totalorder %s96, %s97
    %p111 = scmp.eq.s32.totalorder %s16, 1
    %p112 = por %p110, %p111
    %p114 = scmp.ne.s32.totalorder %s97, %s113
    %p115 = scmp.eq.s32.totalorder %s16, 0
    %p116 = por %p114, %p115
    %p117 = scmp.le.s32.totalorder 1, %s10
    %p118 = scmp.lt.s32.totalorder %s10, 3
    %p119 = pnand %p117, %p118
    %p120 = pneg %p119
    // Predicated region
    $region9: #{rsu4_forward.16} parent=5 // pred_check
      _
    $region10: #{rsu4_forward.16} parent=5 // pred_check_branch
      %122 = sbr.rel (%p119) target = $region12
    $region11: #{rsu4_forward.16} parent=5 // pred_region
      %s123 = ssub.s32 %s10, 1
      // Predicated region
      $region13: #{rsu4_forward.16} parent=11 // pred_check
        %p124 = pneg %p57
      $region14: #{rsu4_forward.16} parent=11 // pred_check_branch
        %126 = sbr.rel (%p124) target = $region16
      $region15: #{rsu4_forward.16} parent=11 // pred_region
        _
      $region16: #{rsu4_forward.16} parent=11 // pred_fallthru
        _
    $region12: #{rsu4_forward.16} parent=5 // pred_fallthru
      _
    %p127 = scmp.lt.s32.totalorder %s10, 2
    // Predicated region
    $region17: #{rsu4_forward.16} parent=5 // pred_check
      %p128 = pneg %p127
    $region18: #{rsu4_forward.16} parent=5 // pred_check_branch
      %130 = sbr.rel (%p128) target = $region20
    $region19: #{rsu4_forward.16} parent=5 // pred_region
      // Predicated region
      $region21: #{rsu4_forward.16} parent=19 // pred_check
        %p131 = pneg %p30
      $region22: #{rsu4_forward.16} parent=19 // pred_check_branch
        %133 = sbr.rel (%p131) target = $region24
      $region23: #{rsu4_forward.16} parent=19 // pred_region
        %s134 = smul.u32 64, %s10
        %p135 = scmp.lt.s32.totalorder %s134, 127
        %s136 = scalar_select %p135, %s134, 127
        %s137 = smul.addr %s136, 4
        %s138 = scalar_lea.vmem %s0, %s137
        %s139 = smul.u32 64, %s10
      $region24: #{rsu4_forward.16} parent=19 // pred_fallthru
        _
    $region20: #{rsu4_forward.16} parent=5 // pred_fallthru
      _
    %p140 = scmp.le.s32.totalorder 1, %s10
    %p141 = scmp.lt.s32.totalorder %s10, 3
    %p142 = pnand %p140, %p141
    %p143 = pneg %p142
    // Predicated region
    $region25: #{rsu4_forward.16} parent=5 // pred_check
      _
    $region26: #{rsu4_forward.16} parent=5 // pred_check_branch
      %145 = sbr.rel (%p142) target = $region28
    $region27: #{rsu4_forward.16} parent=5 // pred_region
      %s146 = ssub.s32 %s10, 1
      %s147 = smul.u32 64, %s15
      %p148 = scmp.lt.s32.totalorder %s147, 127
      %s149 = scalar_select %p148, %s147, 127
      %s150 = smul.addr %s149, 4
      %s151 = scalar_lea.vmem %s0, %s150
      %p152 = pneg %p36
      %p153 = pneg %p33
      %p154 = pneg %p57
      %p155 = pneg %p54
      %p156 = pneg %p83
      %p157 = pneg %p80
      %s158 = smul.u32 64, %s15
      %p159 = scmp.lt.s32.totalorder %s158, 127
      %s160 = scalar_select %p159, %s158, 127
      %s161 = smul.addr %s160, 4
      %s162 = scalar_lea.vmem %s2, %s161
      %p163 = pneg %p109
      %p164 = pneg %p106
      %p165 = scmp.lt.s32.totalorder %s15, 1
      %s166 = scalar_select %p165, %s15, 1
      %s167 = smul.addr %s166, 2
      %s168 = scalar_lea.vmem %s3, %s167
      %s169 = smul.u32 64, %s15
      %p170 = scmp.lt.s32.totalorder %s169, 127
      %s171 = scalar_select %p170, %s169, 127
      %s172 = smul.addr %s171, 4
      %s173 = scalar_lea.vmem %s0, %s172
      %s174 = smul.u32 64, %s15
      %s175 = smul.u32 64, %s15
      %p176 = scmp.lt.s32.totalorder %s175, 127
      %s177 = scalar_select %p176, %s175, 127
      %s178 = smul.addr %s177, 4
      %s179 = scalar_lea.vmem %s2, %s178
      %s180 = smul.u32 64, %s15
      %p181 = scmp.lt.s32.totalorder %s15, 1
      %s182 = scalar_select %p181, %s15, 1
      %s183 = smul.addr %s182, 2
      %s184 = scalar_lea.vmem %s3, %s183
      %v186 = vld [vmem:[%s173] sm:$0xf]
      %v187 = vld [vmem:[%s173 + $0x4] sm:$0xf]
      %v188 = vld [vmem:[%s173 + $0x8] sm:$0xf]
      %v189 = vld [vmem:[%s173 + $0xc] sm:$0xf]
      %v190 = vld [vmem:[%s173 + $0x10] sm:$0xf]
      %v191 = vld [vmem:[%s173 + $0x14] sm:$0xf]
      %v192 = vld [vmem:[%s173 + $0x18] sm:$0xf]
      %v193 = vld [vmem:[%s173 + $0x1c] sm:$0xf]
      %v194 = vld [vmem:[%s173 + $0x20] sm:$0xf]
      %v195 = vld [vmem:[%s173 + $0x24] sm:$0xf]
      %v196 = vld [vmem:[%s173 + $0x28] sm:$0xf]
      %v197 = vld [vmem:[%s173 + $0x2c] sm:$0xf]
      %v198 = vld [vmem:[%s173 + $0x30] sm:$0xf]
      %v199 = vld [vmem:[%s173 + $0x34] sm:$0xf]
      %v200 = vld [vmem:[%s173 + $0x38] sm:$0xf]
      %v201 = vld [vmem:[%s173 + $0x3c] sm:$0xf]
      %v202 = vld [vmem:[%s173 + $0x40] sm:$0xf]
      %v203 = vld [vmem:[%s173 + $0x44] sm:$0xf]
      %v204 = vld [vmem:[%s173 + $0x48] sm:$0xf]
      %v205 = vld [vmem:[%s173 + $0x4c] sm:$0xf]
      %v206 = vld [vmem:[%s173 + $0x50] sm:$0xf]
      %v207 = vld [vmem:[%s173 + $0x54] sm:$0xf]
      %v208 = vld [vmem:[%s173 + $0x58] sm:$0xf]
      %v209 = vld [vmem:[%s173 + $0x5c] sm:$0xf]
      %v210 = vld [vmem:[%s173 + $0x60] sm:$0xf]
      %v211 = vld [vmem:[%s173 + $0x64] sm:$0xf]
      %v212 = vld [vmem:[%s173 + $0x68] sm:$0xf]
      %v213 = vld [vmem:[%s173 + $0x6c] sm:$0xf]
      %v214 = vld [vmem:[%s173 + $0x70] sm:$0xf]
      %v215 = vld [vmem:[%s173 + $0x74] sm:$0xf]
      %v216 = vld [vmem:[%s173 + $0x78] sm:$0xf]
      %v217 = vld [vmem:[%s173 + $0x7c] sm:$0xf]
      %v218 = vld [vmem:[%s173 + $0x80] sm:$0xf]
      %v219 = vld [vmem:[%s173 + $0x84] sm:$0xf]
      %v220 = vld [vmem:[%s173 + $0x88] sm:$0xf]
      %v221 = vld [vmem:[%s173 + $0x8c] sm:$0xf]
      %v222 = vld [vmem:[%s173 + $0x90] sm:$0xf]
      %v223 = vld [vmem:[%s173 + $0x94] sm:$0xf]
      %v224 = vld [vmem:[%s173 + $0x98] sm:$0xf]
      %v225 = vld [vmem:[%s173 + $0x9c] sm:$0xf]
      %v226 = vld [vmem:[%s173 + $0xa0] sm:$0xf]
      %v227 = vld [vmem:[%s173 + $0xa4] sm:$0xf]
      %v228 = vld [vmem:[%s173 + $0xa8] sm:$0xf]
      %v229 = vld [vmem:[%s173 + $0xac] sm:$0xf]
      %v230 = vld [vmem:[%s173 + $0xb0] sm:$0xf]
      %v231 = vld [vmem:[%s173 + $0xb4] sm:$0xf]
      %v232 = vld [vmem:[%s173 + $0xb8] sm:$0xf]
      %v233 = vld [vmem:[%s173 + $0xbc] sm:$0xf]
      %v234 = vld [vmem:[%s173 + $0xc0] sm:$0xf]
      %v235 = vld [vmem:[%s173 + $0xc4] sm:$0xf]
      %v236 = vld [vmem:[%s173 + $0xc8] sm:$0xf]
      %v237 = vld [vmem:[%s173 + $0xcc] sm:$0xf]
      %v238 = vld [vmem:[%s173 + $0xd0] sm:$0xf]
      %v239 = vld [vmem:[%s173 + $0xd4] sm:$0xf]
      %v240 = vld [vmem:[%s173 + $0xd8] sm:$0xf]
      %v241 = vld [vmem:[%s173 + $0xdc] sm:$0xf]
      %v242 = vld [vmem:[%s173 + $0xe0] sm:$0xf]
      %v243 = vld [vmem:[%s173 + $0xe4] sm:$0xf]
      %v244 = vld [vmem:[%s173 + $0xe8] sm:$0xf]
      %v245 = vld [vmem:[%s173 + $0xec] sm:$0xf]
      %v246 = vld [vmem:[%s173 + $0xf0] sm:$0xf]
      %v247 = vld [vmem:[%s173 + $0xf4] sm:$0xf]
      %v248 = vld [vmem:[%s173 + $0xf8] sm:$0xf]
      %v249 = vld [vmem:[%s173 + $0xfc] sm:$0xf]
      %v250 = vld [vmem:[%s1] sm:$0xf]
      %v251 = vld [vmem:[%s1 + $0x4] sm:$0xf]
      %v252 = vld [vmem:[%s1 + $0x8] sm:$0xf]
      %v253 = vld [vmem:[%s1 + $0xc] sm:$0xf]
      %v254 = vld [vmem:[%s1 + $0x10] sm:$0xf]
      %v255 = vld [vmem:[%s1 + $0x14] sm:$0xf]
      %v256 = vld [vmem:[%s1 + $0x18] sm:$0xf]
      %v257 = vld [vmem:[%s1 + $0x1c] sm:$0xf]
      %v258 = vld [vmem:[%s1 + $0x20] sm:$0xf]
      %v259 = vld [vmem:[%s1 + $0x24] sm:$0xf]
      %v260 = vld [vmem:[%s1 + $0x28] sm:$0xf]
      %v261 = vld [vmem:[%s1 + $0x2c] sm:$0xf]
      %v262 = vld [vmem:[%s1 + $0x30] sm:$0xf]
      %v263 = vld [vmem:[%s1 + $0x34] sm:$0xf]
      %v264 = vld [vmem:[%s1 + $0x38] sm:$0xf]
      %v265 = vld [vmem:[%s1 + $0x3c] sm:$0xf]
      %v330 = vunpack.c.l.b16 %v186
      %v331 = vunpack.c.l.b16 %v187
      %v332 = vunpack.c.l.b16 %v188
      %v333 = vunpack.c.l.b16 %v189
      %v334 = vunpack.c.l.b16 %v190
      %v335 = vunpack.c.l.b16 %v191
      %v336 = vunpack.c.l.b16 %v192
      %v337 = vunpack.c.l.b16 %v193
      %v338 = vunpack.c.l.b16 %v194
      %v339 = vunpack.c.l.b16 %v195
      %v340 = vunpack.c.l.b16 %v196
      %v341 = vunpack.c.l.b16 %v197
      %v342 = vunpack.c.l.b16 %v198
      %v343 = vunpack.c.l.b16 %v199
      %v344 = vunpack.c.l.b16 %v200
      %v345 = vunpack.c.l.b16 %v201
      %v346 = vunpack.c.l.b16 %v202
      %v347 = vunpack.c.l.b16 %v203
      %v348 = vunpack.c.l.b16 %v204
      %v349 = vunpack.c.l.b16 %v205
      %v350 = vunpack.c.l.b16 %v206
      %v351 = vunpack.c.l.b16 %v207
      %v352 = vunpack.c.l.b16 %v208
      %v353 = vunpack.c.l.b16 %v209
      %v354 = vunpack.c.l.b16 %v210
      %v355 = vunpack.c.l.b16 %v211
      %v356 = vunpack.c.l.b16 %v212
      %v357 = vunpack.c.l.b16 %v213
      %v358 = vunpack.c.l.b16 %v214
      %v359 = vunpack.c.l.b16 %v215
      %v360 = vunpack.c.l.b16 %v216
      %v361 = vunpack.c.l.b16 %v217
      %v362 = vunpack.c.l.b16 %v218
      %v363 = vunpack.c.l.b16 %v219
      %v364 = vunpack.c.l.b16 %v220
      %v365 = vunpack.c.l.b16 %v221
      %v366 = vunpack.c.l.b16 %v222
      %v367 = vunpack.c.l.b16 %v223
      %v368 = vunpack.c.l.b16 %v224
      %v369 = vunpack.c.l.b16 %v225
      %v370 = vunpack.c.l.b16 %v226
      %v371 = vunpack.c.l.b16 %v227
      %v372 = vunpack.c.l.b16 %v228
      %v373 = vunpack.c.l.b16 %v229
      %v374 = vunpack.c.l.b16 %v230
      %v375 = vunpack.c.l.b16 %v231
      %v376 = vunpack.c.l.b16 %v232
      %v377 = vunpack.c.l.b16 %v233
      %v378 = vunpack.c.l.b16 %v234
      %v379 = vunpack.c.l.b16 %v235
      %v380 = vunpack.c.l.b16 %v236
      %v381 = vunpack.c.l.b16 %v237
      %v382 = vunpack.c.l.b16 %v238
      %v383 = vunpack.c.l.b16 %v239
      %v384 = vunpack.c.l.b16 %v240
      %v385 = vunpack.c.l.b16 %v241
      %v386 = vunpack.c.l.b16 %v242
      %v387 = vunpack.c.l.b16 %v243
      %v388 = vunpack.c.l.b16 %v244
      %v389 = vunpack.c.l.b16 %v245
      %v390 = vunpack.c.l.b16 %v246
      %v391 = vunpack.c.l.b16 %v247
      %v392 = vunpack.c.l.b16 %v248
      %v393 = vunpack.c.l.b16 %v249
      %v394 = vpack.c.b16 %v331, %v330
      %v395 = vpack.c.b16 %v333, %v332
      %v396 = vpack.c.b16 %v335, %v334
      %v397 = vpack.c.b16 %v337, %v336
      %v398 = vpack.c.b16 %v339, %v338
      %v399 = vpack.c.b16 %v341, %v340
      %v400 = vpack.c.b16 %v343, %v342
      %v401 = vpack.c.b16 %v345, %v344
      %v402 = vpack.c.b16 %v347, %v346
      %v403 = vpack.c.b16 %v349, %v348
      %v404 = vpack.c.b16 %v351, %v350
      %v405 = vpack.c.b16 %v353, %v352
      %v406 = vpack.c.b16 %v355, %v354
      %v407 = vpack.c.b16 %v357, %v356
      %v408 = vpack.c.b16 %v359, %v358
      %v409 = vpack.c.b16 %v361, %v360
      %v410 = vpack.c.b16 %v363, %v362
      %v411 = vpack.c.b16 %v365, %v364
      %v412 = vpack.c.b16 %v367, %v366
      %v413 = vpack.c.b16 %v369, %v368
      %v414 = vpack.c.b16 %v371, %v370
      %v415 = vpack.c.b16 %v373, %v372
      %v416 = vpack.c.b16 %v375, %v374
      %v417 = vpack.c.b16 %v377, %v376
      %v418 = vpack.c.b16 %v379, %v378
      %v419 = vpack.c.b16 %v381, %v380
      %v420 = vpack.c.b16 %v383, %v382
      %v421 = vpack.c.b16 %v385, %v384
      %v422 = vpack.c.b16 %v387, %v386
      %v423 = vpack.c.b16 %v389, %v388
      %v424 = vpack.c.b16 %v391, %v390
      %v425 = vpack.c.b16 %v393, %v392
      %v474 = vunpack.c.l.b16 %v250
      %v475 = vunpack.c.l.b16 %v251
      %v476 = vunpack.c.l.b16 %v252
      %v477 = vunpack.c.l.b16 %v253
      %v478 = vunpack.c.l.b16 %v254
      %v479 = vunpack.c.l.b16 %v255
      %v480 = vunpack.c.l.b16 %v256
      %v481 = vunpack.c.l.b16 %v257
      %v482 = vunpack.c.l.b16 %v258
      %v483 = vunpack.c.l.b16 %v259
      %v484 = vunpack.c.l.b16 %v260
      %v485 = vunpack.c.l.b16 %v261
      %v486 = vunpack.c.l.b16 %v262
      %v487 = vunpack.c.l.b16 %v263
      %v488 = vunpack.c.l.b16 %v264
      %v489 = vunpack.c.l.b16 %v265
      %v490 = vpack.c.b16 %v475, %v474
      %v491 = vpack.c.b16 %v477, %v476
      %v492 = vpack.c.b16 %v479, %v478
      %v493 = vpack.c.b16 %v481, %v480
      %v494 = vpack.c.b16 %v483, %v482
      %v495 = vpack.c.b16 %v485, %v484
      %v496 = vpack.c.b16 %v487, %v486
      %v497 = vpack.c.b16 %v489, %v488
      %506 = vmatprep.subr.bf16.mxu0 0
      %507 = vmatpush1.bf16.msra.mxu0 %v490
      %508 = vmatprep.subr.bf16.mxu0 0
      %509 = vmatpush1.bf16.msra.mxu0 %v491
      %510 = vmatprep.subr.bf16.mxu0 0
      %511 = vmatpush1.bf16.msra.mxu0 %v492
      %512 = vmatprep.subr.bf16.mxu0 0
      %513 = vmatpush1.bf16.msra.mxu0 %v493
      %514 = vmatprep.subr.bf16.mxu0 0
      %515 = vmatpush1.bf16.msra.mxu0 %v494
      %516 = vmatprep.subr.bf16.mxu0 0
      %517 = vmatpush1.bf16.msra.mxu0 %v495
      %518 = vmatprep.subr.bf16.mxu0 0
      %519 = vmatpush1.bf16.msra.mxu0 %v496
      %520 = vmatprep.subr.bf16.mxu0 0
      %521 = vmatpush1.bf16.msra.mxu0 %v497
      %522 = vmatprep.subr.bf16.mxu0 0
      %523 = vmatpush1.bf16.msra.mxu0 0
      %524 = vmatprep.subr.bf16.mxu0 0
      %525 = vmatpush1.bf16.msra.mxu0 0
      %526 = vmatprep.subr.bf16.mxu0 0
      %527 = vmatpush1.bf16.msra.mxu0 0
      %528 = vmatprep.subr.bf16.mxu0 0
      %529 = vmatpush1.bf16.msra.mxu0 0
      %530 = vmatprep.subr.bf16.mxu0 0
      %531 = vmatpush1.bf16.msra.mxu0 0
      %532 = vmatprep.subr.bf16.mxu0 0
      %533 = vmatpush1.bf16.msra.mxu0 0
      %534 = vmatprep.subr.bf16.mxu0 0
      %535 = vmatpush1.bf16.msra.mxu0 0
      %536 = vmatprep.subr.bf16.mxu0 0
      %537 = vmatpush1.bf16.msra.mxu0 0
      %538 = vmatprep.mubr.bf16.mxu0 0
      %539 = vmatmul.mubr.bf16.gmra.mrb[0].mxu0 %v394
      %v540 = vpop.f32.mrb[0].mxu0
      %v541 = vadd.f32 0.0, %v540
      %v542 = vpop.f32.mrb[0].mxu0
      %v543 = vpop.f32.mrb[0].mxu0
      %v544 = vadd.f32 0.0, %v543
      %v545 = vpop.f32.mrb[0].mxu0
      %546 = vmatprep.mubr.bf16.mxu0 0
      %547 = vmatmul.mubr.bf16.gmra.mrb[0].mxu0 %v395
      %v548 = vpop.f32.mrb[0].mxu0
      %v549 = vadd.f32 0.0, %v548
      %v550 = vpop.f32.mrb[0].mxu0
      %v551 = vpop.f32.mrb[0].mxu0
      %v552 = vadd.f32 0.0, %v551
      %v553 = vpop.f32.mrb[0].mxu0
      %554 = vmatprep.mubr.bf16.mxu0 0
      %555 = vmatmul.mubr.bf16.gmra.mrb[0].mxu0 %v396
      %v556 = vpop.f32.mrb[0].mxu0
      %v557 = vadd.f32 0.0, %v556
      %v558 = vpop.f32.mrb[0].mxu0
      %v559 = vpop.f32.mrb[0].mxu0
      %v560 = vadd.f32 0.0, %v559
      %v561 = vpop.f32.mrb[0].mxu0
      %562 = vmatprep.mubr.bf16.mxu0 0
      %563 = vmatmul.mubr.bf16.gmra.mrb[0].mxu0 %v397
      %v564 = vpop.f32.mrb[0].mxu0
      %v565 = vadd.f32 0.0, %v564
      %v566 = vpop.f32.mrb[0].mxu0
      %v567 = vpop.f32.mrb[0].mxu0
      %v568 = vadd.f32 0.0, %v567
      %v569 = vpop.f32.mrb[0].mxu0
      %570 = vmatprep.mubr.bf16.mxu0 0
      %571 = vmatmul.mubr.bf16.gmra.mrb[0].mxu0 %v398
      %v572 = vpop.f32.mrb[0].mxu0
      %v573 = vadd.f32 0.0, %v572
      %v574 = vpop.f32.mrb[0].mxu0
      %v575 = vpop.f32.mrb[0].mxu0
      %v576 = vadd.f32 0.0, %v575
      %v577 = vpop.f32.mrb[0].mxu0
      %578 = vmatprep.mubr.bf16.mxu0 0
      %579 = vmatmul.mubr.bf16.gmra.mrb[0].mxu0 %v399
      %v580 = vpop.f32.mrb[0].mxu0
      %v581 = vadd.f32 0.0, %v580
      %v582 = vpop.f32.mrb[0].mxu0
      %v583 = vpop.f32.mrb[0].mxu0
      %v584 = vadd.f32 0.0, %v583
      %v585 = vpop.f32.mrb[0].mxu0
      %586 = vmatprep.mubr.bf16.mxu0 0
      %587 = vmatmul.mubr.bf16.gmra.mrb[0].mxu0 %v400
      %v588 = vpop.f32.mrb[0].mxu0
      %v589 = vadd.f32 0.0, %v588
      %v590 = vpop.f32.mrb[0].mxu0
      %v591 = vpop.f32.mrb[0].mxu0
      %v592 = vadd.f32 0.0, %v591
      %v593 = vpop.f32.mrb[0].mxu0
      %594 = vmatprep.mubr.bf16.mxu0 0
      %595 = vmatmul.mubr.bf16.gmra.mrb[0].mxu0 %v401
      %v596 = vpop.f32.mrb[0].mxu0
      %v597 = vadd.f32 0.0, %v596
      %v598 = vpop.f32.mrb[0].mxu0
      %v599 = vpop.f32.mrb[0].mxu0
      %v600 = vadd.f32 0.0, %v599
      %v601 = vpop.f32.mrb[0].mxu0
      %602 = vmatprep.mubr.bf16.mxu0 0
      %603 = vmatmul.mubr.bf16.gmra.mrb[0].mxu0 %v402
      %v604 = vpop.f32.mrb[0].mxu0
      %v605 = vadd.f32 0.0, %v604
      %v606 = vpop.f32.mrb[0].mxu0
      %v607 = vpop.f32.mrb[0].mxu0
      %v608 = vadd.f32 0.0, %v607
      %v609 = vpop.f32.mrb[0].mxu0
      %610 = vmatprep.mubr.bf16.mxu0 0
      %611 = vmatmul.mubr.bf16.gmra.mrb[0].mxu0 %v403
      %v612 = vpop.f32.mrb[0].mxu0
      %v613 = vadd.f32 0.0, %v612
      %v614 = vpop.f32.mrb[0].mxu0
      %v615 = vpop.f32.mrb[0].mxu0
      %v616 = vadd.f32 0.0, %v615
      %v617 = vpop.f32.mrb[0].mxu0
      %618 = vmatprep.mubr.bf16.mxu0 0
      %619 = vmatmul.mubr.bf16.gmra.mrb[0].mxu0 %v404
      %v620 = vpop.f32.mrb[0].mxu0
      %v621 = vadd.f32 0.0, %v620
      %v622 = vpop.f32.mrb[0].mxu0
      %v623 = vpop.f32.mrb[0].mxu0
      %v624 = vadd.f32 0.0, %v623
      %v625 = vpop.f32.mrb[0].mxu0
      %626 = vmatprep.mubr.bf16.mxu0 0
      %627 = vmatmul.mubr.bf16.gmra.mrb[0].mxu0 %v405
      %v628 = vpop.f32.mrb[0].mxu0
      %v629 = vadd.f32 0.0, %v628
      %v630 = vpop.f32.mrb[0].mxu0
      %v631 = vpop.f32.mrb[0].mxu0
      %v632 = vadd.f32 0.0, %v631
      %v633 = vpop.f32.mrb[0].mxu0
      %634 = vmatprep.mubr.bf16.mxu0 0
      %635 = vmatmul.mubr.bf16.gmra.mrb[0].mxu0 %v406
      %v636 = vpop.f32.mrb[0].mxu0
      %v637 = vadd.f32 0.0, %v636
      %v638 = vpop.f32.mrb[0].mxu0
      %v639 = vpop.f32.mrb[0].mxu0
      %v640 = vadd.f32 0.0, %v639
      %v641 = vpop.f32.mrb[0].mxu0
      %642 = vmatprep.mubr.bf16.mxu0 0
      %643 = vmatmul.mubr.bf16.gmra.mrb[0].mxu0 %v407
      %v644 = vpop.f32.mrb[0].mxu0
      %v645 = vadd.f32 0.0, %v644
      %v646 = vpop.f32.mrb[0].mxu0
      %v647 = vpop.f32.mrb[0].mxu0
      %v648 = vadd.f32 0.0, %v647
      %v649 = vpop.f32.mrb[0].mxu0
      %650 = vmatprep.mubr.bf16.mxu0 0
      %651 = vmatmul.mubr.bf16.gmra.mrb[0].mxu0 %v408
      %v652 = vpop.f32.mrb[0].mxu0
      %v653 = vadd.f32 0.0, %v652
      %v654 = vpop.f32.mrb[0].mxu0
      %v655 = vpop.f32.mrb[0].mxu0
      %v656 = vadd.f32 0.0, %v655
      %v657 = vpop.f32.mrb[0].mxu0
      %658 = vmatprep.mubr.bf16.mxu0 0
      %659 = vmatmul.mubr.bf16.gmra.mrb[0].mxu0 %v409
      %v660 = vpop.f32.mrb[0].mxu0
      %v661 = vadd.f32 0.0, %v660
      %v662 = vpop.f32.mrb[0].mxu0
      %v663 = vpop.f32.mrb[0].mxu0
      %v664 = vadd.f32 0.0, %v663
      %v665 = vpop.f32.mrb[0].mxu0
      %666 = vmatprep.mubr.bf16.mxu0 0
      %667 = vmatmul.mubr.bf16.gmra.mrb[0].mxu0 %v410
      %v668 = vpop.f32.mrb[0].mxu0
      %v669 = vadd.f32 0.0, %v668
      %v670 = vpop.f32.mrb[0].mxu0
      %v671 = vpop.f32.mrb[0].mxu0
      %v672 = vadd.f32 0.0, %v671
      %v673 = vpop.f32.mrb[0].mxu0
      %674 = vmatprep.mubr.bf16.mxu0 0
      %675 = vmatmul.mubr.bf16.gmra.mrb[0].mxu0 %v411
      %v676 = vpop.f32.mrb[0].mxu0
      %v677 = vadd.f32 0.0, %v676
      %v678 = vpop.f32.mrb[0].mxu0
      %v679 = vpop.f32.mrb[0].mxu0
      %v680 = vadd.f32 0.0, %v679
      %v681 = vpop.f32.mrb[0].mxu0
      %682 = vmatprep.mubr.bf16.mxu0 0
      %683 = vmatmul.mubr.bf16.gmra.mrb[0].mxu0 %v412
      %v684 = vpop.f32.mrb[0].mxu0
      %v685 = vadd.f32 0.0, %v684
      %v686 = vpop.f32.mrb[0].mxu0
      %v687 = vpop.f32.mrb[0].mxu0
      %v688 = vadd.f32 0.0, %v687
      %v689 = vpop.f32.mrb[0].mxu0
      %690 = vmatprep.mubr.bf16.mxu0 0
      %691 = vmatmul.mubr.bf16.gmra.mrb[0].mxu0 %v413
      %v692 = vpop.f32.mrb[0].mxu0
      %v693 = vadd.f32 0.0, %v692
      %v694 = vpop.f32.mrb[0].mxu0
      %v695 = vpop.f32.mrb[0].mxu0
      %v696 = vadd.f32 0.0, %v695
      %v697 = vpop.f32.mrb[0].mxu0
      %698 = vmatprep.mubr.bf16.mxu0 0
      %699 = vmatmul.mubr.bf16.gmra.mrb[0].mxu0 %v414
      %v700 = vpop.f32.mrb[0].mxu0
      %v701 = vadd.f32 0.0, %v700
      %v702 = vpop.f32.mrb[0].mxu0
      %v703 = vpop.f32.mrb[0].mxu0
      %v704 = vadd.f32 0.0, %v703
      %v705 = vpop.f32.mrb[0].mxu0
      %706 = vmatprep.mubr.bf16.mxu0 0
      %707 = vmatmul.mubr.bf16.gmra.mrb[0].mxu0 %v415
      %v708 = vpop.f32.mrb[0].mxu0
      %v709 = vadd.f32 0.0, %v708
      %v710 = vpop.f32.mrb[0].mxu0
      %v711 = vpop.f32.mrb[0].mxu0
      %v712 = vadd.f32 0.0, %v711
      %v713 = vpop.f32.mrb[0].mxu0
      %714 = vmatprep.mubr.bf16.mxu0 0
      %715 = vmatmul.mubr.bf16.gmra.mrb[0].mxu0 %v416
      %v716 = vpop.f32.mrb[0].mxu0
      %v717 = vadd.f32 0.0, %v716
      %v718 = vpop.f32.mrb[0].mxu0
      %v719 = vpop.f32.mrb[0].mxu0
      %v720 = vadd.f32 0.0, %v719
      %v721 = vpop.f32.mrb[0].mxu0
      %722 = vmatprep.mubr.bf16.mxu0 0
      %723 = vmatmul.mubr.bf16.gmra.mrb[0].mxu0 %v417
      %v724 = vpop.f32.mrb[0].mxu0
      %v725 = vadd.f32 0.0, %v724
      %v726 = vpop.f32.mrb[0].mxu0
      %v727 = vpop.f32.mrb[0].mxu0
      %v728 = vadd.f32 0.0, %v727
      %v729 = vpop.f32.mrb[0].mxu0
      %730 = vmatprep.mubr.bf16.mxu0 0
      %731 = vmatmul.mubr.bf16.gmra.mrb[0].mxu0 %v418
      %v732 = vpop.f32.mrb[0].mxu0
      %v733 = vadd.f32 0.0, %v732
      %v734 = vpop.f32.mrb[0].mxu0
      %v735 = vpop.f32.mrb[0].mxu0
      %v736 = vadd.f32 0.0, %v735
      %v737 = vpop.f32.mrb[0].mxu0
      %738 = vmatprep.mubr.bf16.mxu0 0
      %739 = vmatmul.mubr.bf16.gmra.mrb[0].mxu0 %v419
      %v740 = vpop.f32.mrb[0].mxu0
      %v741 = vadd.f32 0.0, %v740
      %v742 = vpop.f32.mrb[0].mxu0
      %v743 = vpop.f32.mrb[0].mxu0
      %v744 = vadd.f32 0.0, %v743
      %v745 = vpop.f32.mrb[0].mxu0
      %746 = vmatprep.mubr.bf16.mxu0 0
      %747 = vmatmul.mubr.bf16.gmra.mrb[0].mxu0 %v420
      %v748 = vpop.f32.mrb[0].mxu0
      %v749 = vadd.f32 0.0, %v748
      %v750 = vpop.f32.mrb[0].mxu0
      %v751 = vpop.f32.mrb[0].mxu0
      %v752 = vadd.f32 0.0, %v751
      %v753 = vpop.f32.mrb[0].mxu0
      %754 = vmatprep.mubr.bf16.mxu0 0
      %755 = vmatmul.mubr.bf16.gmra.mrb[0].mxu0 %v421
      %v756 = vpop.f32.mrb[0].mxu0
      %v757 = vadd.f32 0.0, %v756
      %v758 = vpop.f32.mrb[0].mxu0
      %v759 = vpop.f32.mrb[0].mxu0
      %v760 = vadd.f32 0.0, %v759
      %v761 = vpop.f32.mrb[0].mxu0
      %762 = vmatprep.mubr.bf16.mxu0 0
      %763 = vmatmul.mubr.bf16.gmra.mrb[0].mxu0 %v422
      %v764 = vpop.f32.mrb[0].mxu0
      %v765 = vadd.f32 0.0, %v764
      %v766 = vpop.f32.mrb[0].mxu0
      %v767 = vpop.f32.mrb[0].mxu0
      %v768 = vadd.f32 0.0, %v767
      %v769 = vpop.f32.mrb[0].mxu0
      %770 = vmatprep.mubr.bf16.mxu0 0
      %771 = vmatmul.mubr.bf16.gmra.mrb[0].mxu0 %v423
      %v772 = vpop.f32.mrb[0].mxu0
      %v773 = vadd.f32 0.0, %v772
      %v774 = vpop.f32.mrb[0].mxu0
      %v775 = vpop.f32.mrb[0].mxu0
      %v776 = vadd.f32 0.0, %v775
      %v777 = vpop.f32.mrb[0].mxu0
      %778 = vmatprep.mubr.bf16.mxu0 0
      %779 = vmatmul.mubr.bf16.gmra.mrb[0].mxu0 %v424
      %v780 = vpop.f32.mrb[0].mxu0
      %v781 = vadd.f32 0.0, %v780
      %v782 = vpop.f32.mrb[0].mxu0
      %v783 = vpop.f32.mrb[0].mxu0
      %v784 = vadd.f32 0.0, %v783
      %v785 = vpop.f32.mrb[0].mxu0
      %786 = vmatprep.mubr.bf16.mxu0 0
      %787 = vmatmul.mubr.bf16.gmra.mrb[0].mxu0 %v425
      %v788 = vpop.f32.mrb[0].mxu0
      %v789 = vadd.f32 0.0, %v788
      %v790 = vpop.f32.mrb[0].mxu0
      %v791 = vpop.f32.mrb[0].mxu0
      %v792 = vadd.f32 0.0, %v791
      %v793 = vpop.f32.mrb[0].mxu0
      %794 = vdwg.mxu0
      %v795 = vpack.c.bf16 %v544, %v541
      %v796 = vpack.c.bf16 %v552, %v549
      %v797 = vpack.c.bf16 %v560, %v557
      %v798 = vpack.c.bf16 %v568, %v565
      %v799 = vpack.c.bf16 %v576, %v573
      %v800 = vpack.c.bf16 %v584, %v581
      %v801 = vpack.c.bf16 %v592, %v589
      %v802 = vpack.c.bf16 %v600, %v597
      %v803 = vpack.c.bf16 %v608, %v605
      %v804 = vpack.c.bf16 %v616, %v613
      %v805 = vpack.c.bf16 %v624, %v621
      %v806 = vpack.c.bf16 %v632, %v629
      %v807 = vpack.c.bf16 %v640, %v637
      %v808 = vpack.c.bf16 %v648, %v645
      %v809 = vpack.c.bf16 %v656, %v653
      %v810 = vpack.c.bf16 %v664, %v661
      %v811 = vpack.c.bf16 %v672, %v669
      %v812 = vpack.c.bf16 %v680, %v677
      %v813 = vpack.c.bf16 %v688, %v685
      %v814 = vpack.c.bf16 %v696, %v693
      %v815 = vpack.c.bf16 %v704, %v701
      %v816 = vpack.c.bf16 %v712, %v709
      %v817 = vpack.c.bf16 %v720, %v717
      %v818 = vpack.c.bf16 %v728, %v725
      %v819 = vpack.c.bf16 %v736, %v733
      %v820 = vpack.c.bf16 %v744, %v741
      %v821 = vpack.c.bf16 %v752, %v749
      %v822 = vpack.c.bf16 %v760, %v757
      %v823 = vpack.c.bf16 %v768, %v765
      %v824 = vpack.c.bf16 %v776, %v773
      %v825 = vpack.c.bf16 %v784, %v781
      %v826 = vpack.c.bf16 %v792, %v789
      %v859 = vunpack.c.l.b16 %v795
      %v860 = vunpack.c.h.b16 %v795
      %v861 = vunpack.c.l.b16 %v796
      %v862 = vunpack.c.h.b16 %v796
      %v863 = vunpack.c.l.b16 %v797
      %v864 = vunpack.c.h.b16 %v797
      %v865 = vunpack.c.l.b16 %v798
      %v866 = vunpack.c.h.b16 %v798
      %v867 = vunpack.c.l.b16 %v799
      %v868 = vunpack.c.h.b16 %v799
      %v869 = vunpack.c.l.b16 %v800
      %v870 = vunpack.c.h.b16 %v800
      %v871 = vunpack.c.l.b16 %v801
      %v872 = vunpack.c.h.b16 %v801
      %v873 = vunpack.c.l.b16 %v802
      %v874 = vunpack.c.h.b16 %v802
      %v875 = vunpack.c.l.b16 %v803
      %v876 = vunpack.c.h.b16 %v803
      %v877 = vunpack.c.l.b16 %v804
      %v878 = vunpack.c.h.b16 %v804
      %v879 = vunpack.c.l.b16 %v805
      %v880 = vunpack.c.h.b16 %v805
      %v881 = vunpack.c.l.b16 %v806
      %v882 = vunpack.c.h.b16 %v806
      %v883 = vunpack.c.l.b16 %v807
      %v884 = vunpack.c.h.b16 %v807
      %v885 = vunpack.c.l.b16 %v808
      %v886 = vunpack.c.h.b16 %v808
      %v887 = vunpack.c.l.b16 %v809
      %v888 = vunpack.c.h.b16 %v809
      %v889 = vunpack.c.l.b16 %v810
      %v890 = vunpack.c.h.b16 %v810
      %v891 = vunpack.c.l.b16 %v811
      %v892 = vunpack.c.h.b16 %v811
      %v893 = vunpack.c.l.b16 %v812
      %v894 = vunpack.c.h.b16 %v812
      %v895 = vunpack.c.l.b16 %v813
      %v896 = vunpack.c.h.b16 %v813
      %v897 = vunpack.c.l.b16 %v814
      %v898 = vunpack.c.h.b16 %v814
      %v899 = vunpack.c.l.b16 %v815
      %v900 = vunpack.c.h.b16 %v815
      %v901 = vunpack.c.l.b16 %v816
      %v902 = vunpack.c.h.b16 %v816
      %v903 = vunpack.c.l.b16 %v817
      %v904 = vunpack.c.h.b16 %v817
      %v905 = vunpack.c.l.b16 %v818
      %v906 = vunpack.c.h.b16 %v818
      %v907 = vunpack.c.l.b16 %v819
      %v908 = vunpack.c.h.b16 %v819
      %v909 = vunpack.c.l.b16 %v820
      %v910 = vunpack.c.h.b16 %v820
      %v911 = vunpack.c.l.b16 %v821
      %v912 = vunpack.c.h.b16 %v821
      %v913 = vunpack.c.l.b16 %v822
      %v914 = vunpack.c.h.b16 %v822
      %v915 = vunpack.c.l.b16 %v823
      %v916 = vunpack.c.h.b16 %v823
      %v917 = vunpack.c.l.b16 %v824
      %v918 = vunpack.c.h.b16 %v824
      %v919 = vunpack.c.l.b16 %v825
      %v920 = vunpack.c.h.b16 %v825
      %v921 = vunpack.c.l.b16 %v826
      %v922 = vunpack.c.h.b16 %v826
      %v923 = vpack.c.b16 %v859, %v859
      %v924 = vpack.c.b16 %v860, %v860
      %v925 = vpack.c.b16 %v861, %v861
      %v926 = vpack.c.b16 %v862, %v862
      %v927 = vpack.c.b16 %v863, %v863
      %v928 = vpack.c.b16 %v864, %v864
      %v929 = vpack.c.b16 %v865, %v865
      %v930 = vpack.c.b16 %v866, %v866
      %v931 = vpack.c.b16 %v867, %v867
      %v932 = vpack.c.b16 %v868, %v868
      %v933 = vpack.c.b16 %v869, %v869
      %v934 = vpack.c.b16 %v870, %v870
      %v935 = vpack.c.b16 %v871, %v871
      %v936 = vpack.c.b16 %v872, %v872
      %v937 = vpack.c.b16 %v873, %v873
      %v938 = vpack.c.b16 %v874, %v874
      %v939 = vpack.c.b16 %v875, %v875
      %v940 = vpack.c.b16 %v876, %v876
      %v941 = vpack.c.b16 %v877, %v877
      %v942 = vpack.c.b16 %v878, %v878
      %v943 = vpack.c.b16 %v879, %v879
      %v944 = vpack.c.b16 %v880, %v880
      %v945 = vpack.c.b16 %v881, %v881
      %v946 = vpack.c.b16 %v882, %v882
      %v947 = vpack.c.b16 %v883, %v883
      %v948 = vpack.c.b16 %v884, %v884
      %v949 = vpack.c.b16 %v885, %v885
      %v950 = vpack.c.b16 %v886, %v886
      %v951 = vpack.c.b16 %v887, %v887
      %v952 = vpack.c.b16 %v888, %v888
      %v953 = vpack.c.b16 %v889, %v889
      %v954 = vpack.c.b16 %v890, %v890
      %v955 = vpack.c.b16 %v891, %v891
      %v956 = vpack.c.b16 %v892, %v892
      %v957 = vpack.c.b16 %v893, %v893
      %v958 = vpack.c.b16 %v894, %v894
      %v959 = vpack.c.b16 %v895, %v895
      %v960 = vpack.c.b16 %v896, %v896
      %v961 = vpack.c.b16 %v897, %v897
      %v962 = vpack.c.b16 %v898, %v898
      %v963 = vpack.c.b16 %v899, %v899
      %v964 = vpack.c.b16 %v900, %v900
      %v965 = vpack.c.b16 %v901, %v901
      %v966 = vpack.c.b16 %v902, %v902
      %v967 = vpack.c.b16 %v903, %v903
      %v968 = vpack.c.b16 %v904, %v904
      %v969 = vpack.c.b16 %v905, %v905
      %v970 = vpack.c.b16 %v906, %v906
      %v971 = vpack.c.b16 %v907, %v907
      %v972 = vpack.c.b16 %v908, %v908
      %v973 = vpack.c.b16 %v909, %v909
      %v974 = vpack.c.b16 %v910, %v910
      %v975 = vpack.c.b16 %v911, %v911
      %v976 = vpack.c.b16 %v912, %v912
      %v977 = vpack.c.b16 %v913, %v913
      %v978 = vpack.c.b16 %v914, %v914
      %v979 = vpack.c.b16 %v915, %v915
      %v980 = vpack.c.b16 %v916, %v916
      %v981 = vpack.c.b16 %v917, %v917
      %v982 = vpack.c.b16 %v918, %v918
      %v983 = vpack.c.b16 %v919, %v919
      %v984 = vpack.c.b16 %v920, %v920
      %v985 = vpack.c.b16 %v921, %v921
      %v986 = vpack.c.b16 %v922, %v922
      %1051 = vst [vmem:[%s179] sm:$0xf] %v923
      %1052 = vst [vmem:[%s179 + $0x4] sm:$0xf] %v924
      %1053 = vst [vmem:[%s179 + $0x8] sm:$0xf] %v925
      %1054 = vst [vmem:[%s179 + $0xc] sm:$0xf] %v926
      %1055 = vst [vmem:[%s179 + $0x10] sm:$0xf] %v927
      %1056 = vst [vmem:[%s179 + $0x14] sm:$0xf] %v928
      %1057 = vst [vmem:[%s179 + $0x18] sm:$0xf] %v929
      %1058 = vst [vmem:[%s179 + $0x1c] sm:$0xf] %v930
      %1059 = vst [vmem:[%s179 + $0x20] sm:$0xf] %v931
      %1060 = vst [vmem:[%s179 + $0x24] sm:$0xf] %v932
      %1061 = vst [vmem:[%s179 + $0x28] sm:$0xf] %v933
      %1062 = vst [vmem:[%s179 + $0x2c] sm:$0xf] %v934
      %1063 = vst [vmem:[%s179 + $0x30] sm:$0xf] %v935
      %1064 = vst [vmem:[%s179 + $0x34] sm:$0xf] %v936
      %1065 = vst [vmem:[%s179 + $0x38] sm:$0xf] %v937
      %1066 = vst [vmem:[%s179 + $0x3c] sm:$0xf] %v938
      %1067 = vst [vmem:[%s179 + $0x40] sm:$0xf] %v939
      %1068 = vst [vmem:[%s179 + $0x44] sm:$0xf] %v940
      %1069 = vst [vmem:[%s179 + $0x48] sm:$0xf] %v941
      %1070 = vst [vmem:[%s179 + $0x4c] sm:$0xf] %v942
      %1071 = vst [vmem:[%s179 + $0x50] sm:$0xf] %v943
      %1072 = vst [vmem:[%s179 + $0x54] sm:$0xf] %v944
      %1073 = vst [vmem:[%s179 + $0x58] sm:$0xf] %v945
      %1074 = vst [vmem:[%s179 + $0x5c] sm:$0xf] %v946
      %1075 = vst [vmem:[%s179 + $0x60] sm:$0xf] %v947
      %1076 = vst [vmem:[%s179 + $0x64] sm:$0xf] %v948
      %1077 = vst [vmem:[%s179 + $0x68] sm:$0xf] %v949
      %1078 = vst [vmem:[%s179 + $0x6c] sm:$0xf] %v950
      %1079 = vst [vmem:[%s179 + $0x70] sm:$0xf] %v951
      %1080 = vst [vmem:[%s179 + $0x74] sm:$0xf] %v952
      %1081 = vst [vmem:[%s179 + $0x78] sm:$0xf] %v953
      %1082 = vst [vmem:[%s179 + $0x7c] sm:$0xf] %v954
      %1083 = vst [vmem:[%s179 + $0x80] sm:$0xf] %v955
      %1084 = vst [vmem:[%s179 + $0x84] sm:$0xf] %v956
      %1085 = vst [vmem:[%s179 + $0x88] sm:$0xf] %v957
      %1086 = vst [vmem:[%s179 + $0x8c] sm:$0xf] %v958
      %1087 = vst [vmem:[%s179 + $0x90] sm:$0xf] %v959
      %1088 = vst [vmem:[%s179 + $0x94] sm:$0xf] %v960
      %1089 = vst [vmem:[%s179 + $0x98] sm:$0xf] %v961
      %1090 = vst [vmem:[%s179 + $0x9c] sm:$0xf] %v962
      %1091 = vst [vmem:[%s179 + $0xa0] sm:$0xf] %v963
      %1092 = vst [vmem:[%s179 + $0xa4] sm:$0xf] %v964
      %1093 = vst [vmem:[%s179 + $0xa8] sm:$0xf] %v965
      %1094 = vst [vmem:[%s179 + $0xac] sm:$0xf] %v966
      %1095 = vst [vmem:[%s179 + $0xb0] sm:$0xf] %v967
      %1096 = vst [vmem:[%s179 + $0xb4] sm:$0xf] %v968
      %1097 = vst [vmem:[%s179 + $0xb8] sm:$0xf] %v969
      %1098 = vst [vmem:[%s179 + $0xbc] sm:$0xf] %v970
      %1099 = vst [vmem:[%s179 + $0xc0] sm:$0xf] %v971
      %1100 = vst [vmem:[%s179 + $0xc4] sm:$0xf] %v972
      %1101 = vst [vmem:[%s179 + $0xc8] sm:$0xf] %v973
      %1102 = vst [vmem:[%s179 + $0xcc] sm:$0xf] %v974
      %1103 = vst [vmem:[%s179 + $0xd0] sm:$0xf] %v975
      %1104 = vst [vmem:[%s179 + $0xd4] sm:$0xf] %v976
      %1105 = vst [vmem:[%s179 + $0xd8] sm:$0xf] %v977
      %1106 = vst [vmem:[%s179 + $0xdc] sm:$0xf] %v978
      %1107 = vst [vmem:[%s179 + $0xe0] sm:$0xf] %v979
      %1108 = vst [vmem:[%s179 + $0xe4] sm:$0xf] %v980
      %1109 = vst [vmem:[%s179 + $0xe8] sm:$0xf] %v981
      %1110 = vst [vmem:[%s179 + $0xec] sm:$0xf] %v982
      %1111 = vst [vmem:[%s179 + $0xf0] sm:$0xf] %v983
      %1112 = vst [vmem:[%s179 + $0xf4] sm:$0xf] %v984
      %1113 = vst [vmem:[%s179 + $0xf8] sm:$0xf] %v985
      %1114 = vst [vmem:[%s179 + $0xfc] sm:$0xf] %v986
      %v1115 = vadd.f32 %v541, %v544
      %v1116 = vadd.f32 %v1115, %v549
      %v1117 = vadd.f32 %v1116, %v552
      %v1118 = vadd.f32 %v1117, %v557
      %v1119 = vadd.f32 %v1118, %v560
      %v1120 = vadd.f32 %v1119, %v565
      %v1121 = vadd.f32 %v1120, %v568
      %v1122 = vadd.f32 %v1121, %v573
      %v1123 = vadd.f32 %v1122, %v576
      %v1124 = vadd.f32 %v1123, %v581
      %v1125 = vadd.f32 %v1124, %v584
      %v1126 = vadd.f32 %v1125, %v589
      %v1127 = vadd.f32 %v1126, %v592
      %v1128 = vadd.f32 %v1127, %v597
      %v1129 = vadd.f32 %v1128, %v600
      %v1130 = vadd.f32 %v1129, %v605
      %v1131 = vadd.f32 %v1130, %v608
      %v1132 = vadd.f32 %v1131, %v613
      %v1133 = vadd.f32 %v1132, %v616
      %v1134 = vadd.f32 %v1133, %v621
      %v1135 = vadd.f32 %v1134, %v624
      %v1136 = vadd.f32 %v1135, %v629
      %v1137 = vadd.f32 %v1136, %v632
      %v1138 = vadd.f32 %v1137, %v637
      %v1139 = vadd.f32 %v1138, %v640
      %v1140 = vadd.f32 %v1139, %v645
      %v1141 = vadd.f32 %v1140, %v648
      %v1142 = vadd.f32 %v1141, %v653
      %v1143 = vadd.f32 %v1142, %v656
      %v1144 = vadd.f32 %v1143, %v661
      %v1145 = vadd.f32 %v1144, %v664
      %v1146 = vadd.f32 %v1145, %v669
      %v1147 = vadd.f32 %v1146, %v672
      %v1148 = vadd.f32 %v1147, %v677
      %v1149 = vadd.f32 %v1148, %v680
      %v1150 = vadd.f32 %v1149, %v685
      %v1151 = vadd.f32 %v1150, %v688
      %v1152 = vadd.f32 %v1151, %v693
      %v1153 = vadd.f32 %v1152, %v696
      %v1154 = vadd.f32 %v1153, %v701
      %v1155 = vadd.f32 %v1154, %v704
      %v1156 = vadd.f32 %v1155, %v709
      %v1157 = vadd.f32 %v1156, %v712
      %v1158 = vadd.f32 %v1157, %v717
      %v1159 = vadd.f32 %v1158, %v720
      %v1160 = vadd.f32 %v1159, %v725
      %v1161 = vadd.f32 %v1160, %v728
      %v1162 = vadd.f32 %v1161, %v733
      %v1163 = vadd.f32 %v1162, %v736
      %v1164 = vadd.f32 %v1163, %v741
      %v1165 = vadd.f32 %v1164, %v744
      %v1166 = vadd.f32 %v1165, %v749
      %v1167 = vadd.f32 %v1166, %v752
      %v1168 = vadd.f32 %v1167, %v757
      %v1169 = vadd.f32 %v1168, %v760
      %v1170 = vadd.f32 %v1169, %v765
      %v1171 = vadd.f32 %v1170, %v768
      %v1172 = vadd.f32 %v1171, %v773
      %v1173 = vadd.f32 %v1172, %v776
      %v1174 = vadd.f32 %v1173, %v781
      %v1175 = vadd.f32 %v1174, %v784
      %v1176 = vadd.f32 %v1175, %v789
      %v1177 = vadd.f32 %v1176, %v792
      %v1178 = vrot.slane %v1177, 4
      %v1179 = vadd.f32 %v1177, %v1178
      %v1180 = vrot.slane %v1179, 2
      %v1181 = vadd.f32 %v1179, %v1180
      %v1182 = vrot.slane %v1181, 1
      %v1183 = vadd.f32 %v1181, %v1182
      %1184 = vst [vmem:[%s184] sm:$0x1] %v1183
      %v1185 = vmul.f32 %v541, %v541
      %v1186 = vmul.f32 %v544, %v544
      %v1187 = vmul.f32 %v549, %v549
      %v1188 = vmul.f32 %v552, %v552
      %v1189 = vmul.f32 %v557, %v557
      %v1190 = vmul.f32 %v560, %v560
      %v1191 = vmul.f32 %v565, %v565
      %v1192 = vmul.f32 %v568, %v568
      %v1193 = vmul.f32 %v573, %v573
      %v1194 = vmul.f32 %v576, %v576
      %v1195 = vmul.f32 %v581, %v581
      %v1196 = vmul.f32 %v584, %v584
      %v1197 = vmul.f32 %v589, %v589
      %v1198 = vmul.f32 %v592, %v592
      %v1199 = vmul.f32 %v597, %v597
      %v1200 = vmul.f32 %v600, %v600
      %v1201 = vmul.f32 %v605, %v605
      %v1202 = vmul.f32 %v608, %v608
      %v1203 = vmul.f32 %v613, %v613
      %v1204 = vmul.f32 %v616, %v616
      %v1205 = vmul.f32 %v621, %v621
      %v1206 = vmul.f32 %v624, %v624
      %v1207 = vmul.f32 %v629, %v629
      %v1208 = vmul.f32 %v632, %v632
      %v1209 = vmul.f32 %v637, %v637
      %v1210 = vmul.f32 %v640, %v640
      %v1211 = vmul.f32 %v645, %v645
      %v1212 = vmul.f32 %v648, %v648
      %v1213 = vmul.f32 %v653, %v653
      %v1214 = vmul.f32 %v656, %v656
      %v1215 = vmul.f32 %v661, %v661
      %v1216 = vmul.f32 %v664, %v664
      %v1217 = vmul.f32 %v669, %v669
      %v1218 = vmul.f32 %v672, %v672
      %v1219 = vmul.f32 %v677, %v677
      %v1220 = vmul.f32 %v680, %v680
      %v1221 = vmul.f32 %v685, %v685
      %v1222 = vmul.f32 %v688, %v688
      %v1223 = vmul.f32 %v693, %v693
      %v1224 = vmul.f32 %v696, %v696
      %v1225 = vmul.f32 %v701, %v701
      %v1226 = vmul.f32 %v704, %v704
      %v1227 = vmul.f32 %v709, %v709
      %v1228 = vmul.f32 %v712, %v712
      %v1229 = vmul.f32 %v717, %v717
      %v1230 = vmul.f32 %v720, %v720
      %v1231 = vmul.f32 %v725, %v725
      %v1232 = vmul.f32 %v728, %v728
      %v1233 = vmul.f32 %v733, %v733
      %v1234 = vmul.f32 %v736, %v736
      %v1235 = vmul.f32 %v741, %v741
      %v1236 = vmul.f32 %v744, %v744
      %v1237 = vmul.f32 %v749, %v749
      %v1238 = vmul.f32 %v752, %v752
      %v1239 = vmul.f32 %v757, %v757
      %v1240 = vmul.f32 %v760, %v760
      %v1241 = vmul.f32 %v765, %v765
      %v1242 = vmul.f32 %v768, %v768
      %v1243 = vmul.f32 %v773, %v773
      %v1244 = vmul.f32 %v776, %v776
      %v1245 = vmul.f32 %v781, %v781
      %v1246 = vmul.f32 %v784, %v784
      %v1247 = vmul.f32 %v789, %v789
      %v1248 = vmul.f32 %v792, %v792
      %v1249 = vadd.f32 %v1185, %v1186
      %v1250 = vadd.f32 %v1249, %v1187
      %v1251 = vadd.f32 %v1250, %v1188
      %v1252 = vadd.f32 %v1251, %v1189
      %v1253 = vadd.f32 %v1252, %v1190
      %v1254 = vadd.f32 %v1253, %v1191
      %v1255 = vadd.f32 %v1254, %v1192
      %v1256 = vadd.f32 %v1255, %v1193
      %v1257 = vadd.f32 %v1256, %v1194
      %v1258 = vadd.f32 %v1257, %v1195
      %v1259 = vadd.f32 %v1258, %v1196
      %v1260 = vadd.f32 %v1259, %v1197
      %v1261 = vadd.f32 %v1260, %v1198
      %v1262 = vadd.f32 %v1261, %v1199
      %v1263 = vadd.f32 %v1262, %v1200
      %v1264 = vadd.f32 %v1263, %v1201
      %v1265 = vadd.f32 %v1264, %v1202
      %v1266 = vadd.f32 %v1265, %v1203
      %v1267 = vadd.f32 %v1266, %v1204
      %v1268 = vadd.f32 %v1267, %v1205
      %v1269 = vadd.f32 %v1268, %v1206
      %v1270 = vadd.f32 %v1269, %v1207
      %v1271 = vadd.f32 %v1270, %v1208
      %v1272 = vadd.f32 %v1271, %v1209
      %v1273 = vadd.f32 %v1272, %v1210
      %v1274 = vadd.f32 %v1273, %v1211
      %v1275 = vadd.f32 %v1274, %v1212
      %v1276 = vadd.f32 %v1275, %v1213
      %v1277 = vadd.f32 %v1276, %v1214
      %v1278 = vadd.f32 %v1277, %v1215
      %v1279 = vadd.f32 %v1278, %v1216
      %v1280 = vadd.f32 %v1279, %v1217
      %v1281 = vadd.f32 %v1280, %v1218
      %v1282 = vadd.f32 %v1281, %v1219
      %v1283 = vadd.f32 %v1282, %v1220
      %v1284 = vadd.f32 %v1283, %v1221
      %v1285 = vadd.f32 %v1284, %v1222
      %v1286 = vadd.f32 %v1285, %v1223
      %v1287 = vadd.f32 %v1286, %v1224
      %v1288 = vadd.f32 %v1287, %v1225
      %v1289 = vadd.f32 %v1288, %v1226
      %v1290 = vadd.f32 %v1289, %v1227
      %v1291 = vadd.f32 %v1290, %v1228
      %v1292 = vadd.f32 %v1291, %v1229
      %v1293 = vadd.f32 %v1292, %v1230
      %v1294 = vadd.f32 %v1293, %v1231
      %v1295 = vadd.f32 %v1294, %v1232
      %v1296 = vadd.f32 %v1295, %v1233
      %v1297 = vadd.f32 %v1296, %v1234
      %v1298 = vadd.f32 %v1297, %v1235
      %v1299 = vadd.f32 %v1298, %v1236
      %v1300 = vadd.f32 %v1299, %v1237
      %v1301 = vadd.f32 %v1300, %v1238
      %v1302 = vadd.f32 %v1301, %v1239
      %v1303 = vadd.f32 %v1302, %v1240
      %v1304 = vadd.f32 %v1303, %v1241
      %v1305 = vadd.f32 %v1304, %v1242
      %v1306 = vadd.f32 %v1305, %v1243
      %v1307 = vadd.f32 %v1306, %v1244
      %v1308 = vadd.f32 %v1307, %v1245
      %v1309 = vadd.f32 %v1308, %v1246
      %v1310 = vadd.f32 %v1309, %v1247
      %v1311 = vadd.f32 %v1310, %v1248
      %v1312 = vrot.slane %v1311, 4
      %v1313 = vadd.f32 %v1311, %v1312
      %v1314 = vrot.slane %v1313, 2
      %v1315 = vadd.f32 %v1313, %v1314
      %v1316 = vrot.slane %v1315, 1
      %v1317 = vadd.f32 %v1315, %v1316
      %1318 = vst [vmem:[%s184 + $0x1] sm:$0x1] %v1317
      %s1319 = smul.u32 64, %s15
      %p1320 = scmp.lt.s32.totalorder %s1319, 127
      %s1321 = scalar_select %p1320, %s1319, 127
      %s1322 = smul.addr %s1321, 4
      %s1323 = scalar_lea.vmem %s2, %s1322
      %p1324 = scmp.lt.s32.totalorder %s15, 1
      %s1325 = scalar_select %p1324, %s15, 1
      %s1326 = smul.addr %s1325, 2
      %s1327 = scalar_lea.vmem %s3, %s1326
      // Predicated region
      $region29: #{rsu4_forward.16} parent=27 // pred_check
        %p1328 = pneg %p80
      $region30: #{rsu4_forward.16} parent=27 // pred_check_branch
        %1330 = sbr.rel (%p1328) target = $region32
      $region31: #{rsu4_forward.16} parent=27 // pred_region
        %s1331 = smul.u32 64, %s15
      $region32: #{rsu4_forward.16} parent=27 // pred_fallthru
        _
      // Predicated region
      $region33: #{rsu4_forward.16} parent=27 // pred_check
        %p1332 = pneg %p106
      $region34: #{rsu4_forward.16} parent=27 // pred_check_branch
        %1334 = sbr.rel (%p1332) target = $region36
      $region35: #{rsu4_forward.16} parent=27 // pred_region
        _
      $region36: #{rsu4_forward.16} parent=27 // pred_fallthru
        _
    $region28: #{rsu4_forward.16} parent=5 // pred_fallthru
      _
    %p1335 = scmp.le.s32.totalorder 2, %s10
    // Predicated region
    $region37: #{rsu4_forward.16} parent=5 // pred_check
      %p1336 = pneg %p1335
    $region38: #{rsu4_forward.16} parent=5 // pred_check_branch
      %1338 = sbr.rel (%p1336) target = $region40
    $region39: #{rsu4_forward.16} parent=5 // pred_region
      %s1339 = ssub.s32 %s10, 2
      // Predicated region
      $region41: #{rsu4_forward.16} parent=39 // pred_check
        %p1340 = pneg %p86
      $region42: #{rsu4_forward.16} parent=39 // pred_check_branch
        %1342 = sbr.rel (%p1340) target = $region44
      $region43: #{rsu4_forward.16} parent=39 // pred_region
        %s1343 = smul.u32 64, %s16
        %p1344 = scmp.lt.s32.totalorder %s1343, 127
        %s1345 = scalar_select %p1344, %s1343, 127
        %s1346 = smul.addr %s1345, 4
        %s1347 = scalar_lea.vmem %s2, %s1346
      $region44: #{rsu4_forward.16} parent=39 // pred_fallthru
        _
      // Predicated region
      $region45: #{rsu4_forward.16} parent=39 // pred_check
        %p1348 = pneg %p112
      $region46: #{rsu4_forward.16} parent=39 // pred_check_branch
        %1350 = sbr.rel (%p1348) target = $region48
      $region47: #{rsu4_forward.16} parent=39 // pred_region
        %p1351 = scmp.lt.s32.totalorder %s16, 1
        %s1352 = scalar_select %p1351, %s16, 1
        %s1353 = smul.addr %s1352, 2
        %s1354 = scalar_lea.vmem %s3, %s1353
      $region48: #{rsu4_forward.16} parent=39 // pred_fallthru
        _
    $region40: #{rsu4_forward.16} parent=5 // pred_fallthru
      _
  $region6: #{rsu4_forward.16} parent=0 // loop_footer
    %s14 = sadd.s32 1, %s10
  $region7: #{rsu4_forward.16} parent=0 // loop_footer_branch
    %9 = sbr.rel target = $region3
  $region8: #{rsu4_forward.16} parent=0 // loop_exit
    _

// kernel: rsu4_forward.17
$region0: #{rsu4_forward.17}
  #allocation0 [shape = 'u32[]', space=smem, size = 0x4, offset = 0x4, fixed_abs, tag = 'smem constant byte address 0x4 - core index']
  #allocation1 [shape = 'u32[144,128]{1,0:T(1,128)}', space=vmem, size = 0x12000, scoped, tag = 'internal scratch']
  %s0 = inlined_call_operand.vmem [shape: bf16[1024,128], index: 0, kind: input, shape index: {}, may-alias: {0,3}]
  %s1 = inlined_call_operand.vmem [shape: f32[1,128], index: 1, kind: input, shape index: {}]
  %s2 = inlined_call_operand.vmem [shape: f32[1,128], index: 2, kind: input, shape index: {}]
  %s3 = inlined_call_operand.vmem [shape: bf16[1024,128], index: 3, kind: output, shape index: {}, may-alias: {0,3}]
  %s4 = sld [smem:[#allocation0]]
  $region22: #{rsu4_forward.17} parent=0
    _
  %s6 = ssub.s32 1, %s4
  %s7 = scalar_select 0, %s6, %s4
  // Predicated region
  $region2: #{rsu4_forward.17} parent=0 // pred_check
    _
  $region3: #{rsu4_forward.17} parent=0 // pred_check_branch
    %9 = sbr.rel (0) target = $region5
  $region4: #{rsu4_forward.17} parent=0 // pred_region
    _
  $region5: #{rsu4_forward.17} parent=0 // pred_fallthru
    _
  // Predicated region
  $region6: #{rsu4_forward.17} parent=0 // pred_check
    _
  $region7: #{rsu4_forward.17} parent=0 // pred_check_branch
    %11 = sbr.rel (0) target = $region9
  $region8: #{rsu4_forward.17} parent=0 // pred_region
    _
  $region9: #{rsu4_forward.17} parent=0 // pred_fallthru
    _
  // Predicated region
  $region10: #{rsu4_forward.17} parent=0 // pred_check
    _
  $region11: #{rsu4_forward.17} parent=0 // pred_check_branch
    %13 = sbr.rel (0) target = $region13
  $region12: #{rsu4_forward.17} parent=0 // pred_region
    _
  $region13: #{rsu4_forward.17} parent=0 // pred_fallthru
    _
  %v14 = vld [vmem:[%s0] sm:$0xf]
  %v15 = vld [vmem:[%s0 + $0x4] sm:$0xf]
  %v16 = vld [vmem:[%s0 + $0x8] sm:$0xf]
  %v17 = vld [vmem:[%s0 + $0xc] sm:$0xf]
  %v18 = vld [vmem:[%s0 + $0x10] sm:$0xf]
  %v19 = vld [vmem:[%s0 + $0x14] sm:$0xf]
  %v20 = vld [vmem:[%s0 + $0x18] sm:$0xf]
  %v21 = vld [vmem:[%s0 + $0x1c] sm:$0xf]
  %v22 = vld [vmem:[%s0 + $0x20] sm:$0xf]
  %v23 = vld [vmem:[%s0 + $0x24] sm:$0xf]
  %v24 = vld [vmem:[%s0 + $0x28] sm:$0xf]
  %v25 = vld [vmem:[%s0 + $0x2c] sm:$0xf]
  %v26 = vld [vmem:[%s0 + $0x30] sm:$0xf]
  %v27 = vld [vmem:[%s0 + $0x34] sm:$0xf]
  %v28 = vld [vmem:[%s0 + $0x38] sm:$0xf]
  %v29 = vld [vmem:[%s0 + $0x3c] sm:$0xf]
  %v30 = vld [vmem:[%s0 + $0x40] sm:$0xf]
  %v31 = vld [vmem:[%s0 + $0x44] sm:$0xf]
  %v32 = vld [vmem:[%s0 + $0x48] sm:$0xf]
  %v33 = vld [vmem:[%s0 + $0x4c] sm:$0xf]
  %v34 = vld [vmem:[%s0 + $0x50] sm:$0xf]
  %v35 = vld [vmem:[%s0 + $0x54] sm:$0xf]
  %v36 = vld [vmem:[%s0 + $0x58] sm:$0xf]
  %v37 = vld [vmem:[%s0 + $0x5c] sm:$0xf]
  %v38 = vld [vmem:[%s0 + $0x60] sm:$0xf]
  %v39 = vld [vmem:[%s0 + $0x64] sm:$0xf]
  %v40 = vld [vmem:[%s0 + $0x68] sm:$0xf]
  %v41 = vld [vmem:[%s0 + $0x6c] sm:$0xf]
  %v42 = vld [vmem:[%s0 + $0x70] sm:$0xf]
  %v43 = vld [vmem:[%s0 + $0x74] sm:$0xf]
  %v44 = vld [vmem:[%s0 + $0x78] sm:$0xf]
  %v45 = vld [vmem:[%s0 + $0x7c] sm:$0xf]
  %v46 = vld [vmem:[%s0 + $0x80] sm:$0xf]
  %v47 = vld [vmem:[%s0 + $0x84] sm:$0xf]
  %v48 = vld [vmem:[%s0 + $0x88] sm:$0xf]
  %v49 = vld [vmem:[%s0 + $0x8c] sm:$0xf]
  %v50 = vld [vmem:[%s0 + $0x90] sm:$0xf]
  %v51 = vld [vmem:[%s0 + $0x94] sm:$0xf]
  %v52 = vld [vmem:[%s0 + $0x98] sm:$0xf]
  %v53 = vld [vmem:[%s0 + $0x9c] sm:$0xf]
  %v54 = vld [vmem:[%s0 + $0xa0] sm:$0xf]
  %v55 = vld [vmem:[%s0 + $0xa4] sm:$0xf]
  %v56 = vld [vmem:[%s0 + $0xa8] sm:$0xf]
  %v57 = vld [vmem:[%s0 + $0xac] sm:$0xf]
  %v58 = vld [vmem:[%s0 + $0xb0] sm:$0xf]
  %v59 = vld [vmem:[%s0 + $0xb4] sm:$0xf]
  %v60 = vld [vmem:[%s0 + $0xb8] sm:$0xf]
  %v61 = vld [vmem:[%s0 + $0xbc] sm:$0xf]
  %v62 = vld [vmem:[%s0 + $0xc0] sm:$0xf]
  %v63 = vld [vmem:[%s0 + $0xc4] sm:$0xf]
  %v64 = vld [vmem:[%s0 + $0xc8] sm:$0xf]
  %v65 = vld [vmem:[%s0 + $0xcc] sm:$0xf]
  %v66 = vld [vmem:[%s0 + $0xd0] sm:$0xf]
  %v67 = vld [vmem:[%s0 + $0xd4] sm:$0xf]
  %v68 = vld [vmem:[%s0 + $0xd8] sm:$0xf]
  %v69 = vld [vmem:[%s0 + $0xdc] sm:$0xf]
  %v70 = vld [vmem:[%s0 + $0xe0] sm:$0xf]
  %v71 = vld [vmem:[%s0 + $0xe4] sm:$0xf]
  %v72 = vld [vmem:[%s0 + $0xe8] sm:$0xf]
  %v73 = vld [vmem:[%s0 + $0xec] sm:$0xf]
  %v74 = vld [vmem:[%s0 + $0xf0] sm:$0xf]
  %v75 = vld [vmem:[%s0 + $0xf4] sm:$0xf]
  %v76 = vld [vmem:[%s0 + $0xf8] sm:$0xf]
  %v77 = vld [vmem:[%s0 + $0xfc] sm:$0xf]
  %v78 = vld [vmem:[%s0 + $0x100] sm:$0xf]
  %v79 = vld [vmem:[%s0 + $0x104] sm:$0xf]
  %v80 = vld [vmem:[%s0 + $0x108] sm:$0xf]
  %v81 = vld [vmem:[%s0 + $0x10c] sm:$0xf]
  %v82 = vld [vmem:[%s0 + $0x110] sm:$0xf]
  %v83 = vld [vmem:[%s0 + $0x114] sm:$0xf]
  %v84 = vld [vmem:[%s0 + $0x118] sm:$0xf]
  %v85 = vld [vmem:[%s0 + $0x11c] sm:$0xf]
  %v86 = vld [vmem:[%s0 + $0x120] sm:$0xf]
  %v87 = vld [vmem:[%s0 + $0x124] sm:$0xf]
  %v88 = vld [vmem:[%s0 + $0x128] sm:$0xf]
  %v89 = vld [vmem:[%s0 + $0x12c] sm:$0xf]
  %v90 = vld [vmem:[%s0 + $0x130] sm:$0xf]
  %v91 = vld [vmem:[%s0 + $0x134] sm:$0xf]
  %v92 = vld [vmem:[%s0 + $0x138] sm:$0xf]
  %v93 = vld [vmem:[%s0 + $0x13c] sm:$0xf]
  %v94 = vld [vmem:[%s0 + $0x140] sm:$0xf]
  %v95 = vld [vmem:[%s0 + $0x144] sm:$0xf]
  %v96 = vld [vmem:[%s0 + $0x148] sm:$0xf]
  %v97 = vld [vmem:[%s0 + $0x14c] sm:$0xf]
  %v98 = vld [vmem:[%s0 + $0x150] sm:$0xf]
  %v99 = vld [vmem:[%s0 + $0x154] sm:$0xf]
  %v100 = vld [vmem:[%s0 + $0x158] sm:$0xf]
  %v101 = vld [vmem:[%s0 + $0x15c] sm:$0xf]
  %v102 = vld [vmem:[%s0 + $0x160] sm:$0xf]
  %v103 = vld [vmem:[%s0 + $0x164] sm:$0xf]
  %v104 = vld [vmem:[%s0 + $0x168] sm:$0xf]
  %v105 = vld [vmem:[%s0 + $0x16c] sm:$0xf]
  %v106 = vld [vmem:[%s0 + $0x170] sm:$0xf]
  %v107 = vld [vmem:[%s0 + $0x174] sm:$0xf]
  %v108 = vld [vmem:[%s0 + $0x178] sm:$0xf]
  %v109 = vld [vmem:[%s0 + $0x17c] sm:$0xf]
  %v110 = vld [vmem:[%s0 + $0x180] sm:$0xf]
  %v111 = vld [vmem:[%s0 + $0x184] sm:$0xf]
  %v112 = vld [vmem:[%s0 + $0x188] sm:$0xf]
  %v113 = vld [vmem:[%s0 + $0x18c] sm:$0xf]
  %v114 = vld [vmem:[%s0 + $0x190] sm:$0xf]
  %v115 = vld [vmem:[%s0 + $0x194] sm:$0xf]
  %v116 = vld [vmem:[%s0 + $0x198] sm:$0xf]
  %v117 = vld [vmem:[%s0 + $0x19c] sm:$0xf]
  %v118 = vld [vmem:[%s0 + $0x1a0] sm:$0xf]
  %v119 = vld [vmem:[%s0 + $0x1a4] sm:$0xf]
  %v120 = vld [vmem:[%s0 + $0x1a8] sm:$0xf]
  %v121 = vld [vmem:[%s0 + $0x1ac] sm:$0xf]
  %v122 = vld [vmem:[%s0 + $0x1b0] sm:$0xf]
  %v123 = vld [vmem:[%s0 + $0x1b4] sm:$0xf]
  %v124 = vld [vmem:[%s0 + $0x1b8] sm:$0xf]
  %v125 = vld [vmem:[%s0 + $0x1bc] sm:$0xf]
  %v126 = vld [vmem:[%s0 + $0x1c0] sm:$0xf]
  %v127 = vld [vmem:[%s0 + $0x1c4] sm:$0xf]
  %v128 = vld [vmem:[%s0 + $0x1c8] sm:$0xf]
  %v129 = vld [vmem:[%s0 + $0x1cc] sm:$0xf]
  %v130 = vld [vmem:[%s0 + $0x1d0] sm:$0xf]
  %v131 = vld [vmem:[%s0 + $0x1d4] sm:$0xf]
  %v132 = vld [vmem:[%s0 + $0x1d8] sm:$0xf]
  %v133 = vld [vmem:[%s0 + $0x1dc] sm:$0xf]
  %v134 = vld [vmem:[%s0 + $0x1e0] sm:$0xf]
  %v135 = vld [vmem:[%s0 + $0x1e4] sm:$0xf]
  %v136 = vld [vmem:[%s0 + $0x1e8] sm:$0xf]
  %v137 = vld [vmem:[%s0 + $0x1ec] sm:$0xf]
  %v138 = vld [vmem:[%s0 + $0x1f0] sm:$0xf]
  %v139 = vld [vmem:[%s0 + $0x1f4] sm:$0xf]
  %v140 = vld [vmem:[%s0 + $0x1f8] sm:$0xf]
  %v141 = vld [vmem:[%s0 + $0x1fc] sm:$0xf]
  %v142 = vunpack.c.l.bf16 %v14
  %v143 = vunpack.c.l.bf16 %v15
  %v144 = vunpack.c.l.bf16 %v16
  %v145 = vunpack.c.l.bf16 %v17
  %v146 = vunpack.c.l.bf16 %v18
  %v147 = vunpack.c.l.bf16 %v19
  %v148 = vunpack.c.l.bf16 %v20
  %v149 = vunpack.c.l.bf16 %v21
  %v150 = vunpack.c.l.bf16 %v22
  %v151 = vunpack.c.l.bf16 %v23
  %v152 = vunpack.c.l.bf16 %v24
  %v153 = vunpack.c.l.bf16 %v25
  %v154 = vunpack.c.l.bf16 %v26
  %v155 = vunpack.c.l.bf16 %v27
  %v156 = vunpack.c.l.bf16 %v28
  %v157 = vunpack.c.l.bf16 %v29
  %v158 = vunpack.c.l.bf16 %v30
  %v159 = vunpack.c.l.bf16 %v31
  %v160 = vunpack.c.l.bf16 %v32
  %v161 = vunpack.c.l.bf16 %v33
  %v162 = vunpack.c.l.bf16 %v34
  %v163 = vunpack.c.l.bf16 %v35
  %v164 = vunpack.c.l.bf16 %v36
  %v165 = vunpack.c.l.bf16 %v37
  %v166 = vunpack.c.l.bf16 %v38
  %v167 = vunpack.c.l.bf16 %v39
  %v168 = vunpack.c.l.bf16 %v40
  %v169 = vunpack.c.l.bf16 %v41
  %v170 = vunpack.c.l.bf16 %v42
  %v171 = vunpack.c.l.bf16 %v43
  %v172 = vunpack.c.l.bf16 %v44
  %v173 = vunpack.c.l.bf16 %v45
  %v174 = vunpack.c.l.bf16 %v46
  %v175 = vunpack.c.l.bf16 %v47
  %v176 = vunpack.c.l.bf16 %v48
  %v177 = vunpack.c.l.bf16 %v49
  %v178 = vunpack.c.l.bf16 %v50
  %v179 = vunpack.c.l.bf16 %v51
  %v180 = vunpack.c.l.bf16 %v52
  %v181 = vunpack.c.l.bf16 %v53
  %v182 = vunpack.c.l.bf16 %v54
  %v183 = vunpack.c.l.bf16 %v55
  %v184 = vunpack.c.l.bf16 %v56
  %v185 = vunpack.c.l.bf16 %v57
  %v186 = vunpack.c.l.bf16 %v58
  %v187 = vunpack.c.l.bf16 %v59
  %v188 = vunpack.c.l.bf16 %v60
  %v189 = vunpack.c.l.bf16 %v61
  %v190 = vunpack.c.l.bf16 %v62
  %v191 = vunpack.c.l.bf16 %v63
  %v192 = vunpack.c.l.bf16 %v64
  %v193 = vunpack.c.l.bf16 %v65
  %v194 = vunpack.c.l.bf16 %v66
  %v195 = vunpack.c.l.bf16 %v67
  %v196 = vunpack.c.l.bf16 %v68
  %v197 = vunpack.c.l.bf16 %v69
  %v198 = vunpack.c.l.bf16 %v70
  %v199 = vunpack.c.l.bf16 %v71
  %v200 = vunpack.c.l.bf16 %v72
  %v201 = vunpack.c.l.bf16 %v73
  %v202 = vunpack.c.l.bf16 %v74
  %v203 = vunpack.c.l.bf16 %v75
  %v204 = vunpack.c.l.bf16 %v76
  %v205 = vunpack.c.l.bf16 %v77
  %v206 = vunpack.c.l.bf16 %v78
  %v207 = vunpack.c.l.bf16 %v79
  %v208 = vunpack.c.l.bf16 %v80
  %v209 = vunpack.c.l.bf16 %v81
  %v210 = vunpack.c.l.bf16 %v82
  %v211 = vunpack.c.l.bf16 %v83
  %v212 = vunpack.c.l.bf16 %v84
  %v213 = vunpack.c.l.bf16 %v85
  %v214 = vunpack.c.l.bf16 %v86
  %v215 = vunpack.c.l.bf16 %v87
  %v216 = vunpack.c.l.bf16 %v88
  %v217 = vunpack.c.l.bf16 %v89
  %v218 = vunpack.c.l.bf16 %v90
  %v219 = vunpack.c.l.bf16 %v91
  %v220 = vunpack.c.l.bf16 %v92
  %v221 = vunpack.c.l.bf16 %v93
  %v222 = vunpack.c.l.bf16 %v94
  %v223 = vunpack.c.l.bf16 %v95
  %v224 = vunpack.c.l.bf16 %v96
  %v225 = vunpack.c.l.bf16 %v97
  %v226 = vunpack.c.l.bf16 %v98
  %v227 = vunpack.c.l.bf16 %v99
  %v228 = vunpack.c.l.bf16 %v100
  %v229 = vunpack.c.l.bf16 %v101
  %v230 = vunpack.c.l.bf16 %v102
  %v231 = vunpack.c.l.bf16 %v103
  %v232 = vunpack.c.l.bf16 %v104
  %v233 = vunpack.c.l.bf16 %v105
  %v234 = vunpack.c.l.bf16 %v106
  %v235 = vunpack.c.l.bf16 %v107
  %v236 = vunpack.c.l.bf16 %v108
  %v237 = vunpack.c.l.bf16 %v109
  %v238 = vunpack.c.l.bf16 %v110
  %v239 = vunpack.c.l.bf16 %v111
  %v240 = vunpack.c.l.bf16 %v112
  %v241 = vunpack.c.l.bf16 %v113
  %v242 = vunpack.c.l.bf16 %v114
  %v243 = vunpack.c.l.bf16 %v115
  %v244 = vunpack.c.l.bf16 %v116
  %v245 = vunpack.c.l.bf16 %v117
  %v246 = vunpack.c.l.bf16 %v118
  %v247 = vunpack.c.l.bf16 %v119
  %v248 = vunpack.c.l.bf16 %v120
  %v249 = vunpack.c.l.bf16 %v121
  %v250 = vunpack.c.l.bf16 %v122
  %v251 = vunpack.c.l.bf16 %v123
  %v252 = vunpack.c.l.bf16 %v124
  %v253 = vunpack.c.l.bf16 %v125
  %v254 = vunpack.c.l.bf16 %v126
  %v255 = vunpack.c.l.bf16 %v127
  %v256 = vunpack.c.l.bf16 %v128
  %v257 = vunpack.c.l.bf16 %v129
  %v258 = vunpack.c.l.bf16 %v130
  %v259 = vunpack.c.l.bf16 %v131
  %v260 = vunpack.c.l.bf16 %v132
  %v261 = vunpack.c.l.bf16 %v133
  %v262 = vunpack.c.l.bf16 %v134
  %v263 = vunpack.c.l.bf16 %v135
  %v264 = vunpack.c.l.bf16 %v136
  %v265 = vunpack.c.l.bf16 %v137
  %v266 = vunpack.c.l.bf16 %v138
  %v267 = vunpack.c.l.bf16 %v139
  %v268 = vunpack.c.l.bf16 %v140
  %v269 = vunpack.c.l.bf16 %v141
  %v270 = vld [vmem:[%s1] sm:$0x1]
  %v272 = vlaneseq
  %v273 = vshrl.u32 %v272, 7
  %v274 = vsub.s32 0, %v273
  %v275 = vrot.slane %v270, %v274
  %v277 = vmul.f32 %v142, %v275
  %v278 = vmul.f32 %v143, %v275
  %v279 = vmul.f32 %v144, %v275
  %v280 = vmul.f32 %v145, %v275
  %v281 = vmul.f32 %v146, %v275
  %v282 = vmul.f32 %v147, %v275
  %v283 = vmul.f32 %v148, %v275
  %v284 = vmul.f32 %v149, %v275
  %v285 = vmul.f32 %v150, %v275
  %v286 = vmul.f32 %v151, %v275
  %v287 = vmul.f32 %v152, %v275
  %v288 = vmul.f32 %v153, %v275
  %v289 = vmul.f32 %v154, %v275
  %v290 = vmul.f32 %v155, %v275
  %v291 = vmul.f32 %v156, %v275
  %v292 = vmul.f32 %v157, %v275
  %v293 = vmul.f32 %v158, %v275
  %v294 = vmul.f32 %v159, %v275
  %v295 = vmul.f32 %v160, %v275
  %v296 = vmul.f32 %v161, %v275
  %v297 = vmul.f32 %v162, %v275
  %v298 = vmul.f32 %v163, %v275
  %v299 = vmul.f32 %v164, %v275
  %v300 = vmul.f32 %v165, %v275
  %v301 = vmul.f32 %v166, %v275
  %v302 = vmul.f32 %v167, %v275
  %v303 = vmul.f32 %v168, %v275
  %v304 = vmul.f32 %v169, %v275
  %v305 = vmul.f32 %v170, %v275
  %v306 = vmul.f32 %v171, %v275
  %v307 = vmul.f32 %v172, %v275
  %v308 = vmul.f32 %v173, %v275
  %v309 = vmul.f32 %v174, %v275
  %v310 = vmul.f32 %v175, %v275
  %v311 = vmul.f32 %v176, %v275
  %v312 = vmul.f32 %v177, %v275
  %v313 = vmul.f32 %v178, %v275
  %v314 = vmul.f32 %v179, %v275
  %v315 = vmul.f32 %v180, %v275
  %v316 = vmul.f32 %v181, %v275
  %v317 = vmul.f32 %v182, %v275
  %v318 = vmul.f32 %v183, %v275
  %v319 = vmul.f32 %v184, %v275
  %v320 = vmul.f32 %v185, %v275
  %v321 = vmul.f32 %v186, %v275
  %v322 = vmul.f32 %v187, %v275
  %v323 = vmul.f32 %v188, %v275
  %v324 = vmul.f32 %v189, %v275
  %v325 = vmul.f32 %v190, %v275
  %v326 = vmul.f32 %v191, %v275
  %v327 = vmul.f32 %v192, %v275
  %v328 = vmul.f32 %v193, %v275
  %v329 = vmul.f32 %v194, %v275
  %v330 = vmul.f32 %v195, %v275
  %v331 = vmul.f32 %v196, %v275
  %v332 = vmul.f32 %v197, %v275
  %v333 = vmul.f32 %v198, %v275
  %v334 = vmul.f32 %v199, %v275
  %v335 = vmul.f32 %v200, %v275
  %v336 = vmul.f32 %v201, %v275
  %v337 = vmul.f32 %v202, %v275
  %v338 = vmul.f32 %v203, %v275
  %v339 = vmul.f32 %v204, %v275
  %v340 = vmul.f32 %v205, %v275
  %v341 = vmul.f32 %v206, %v275
  %v342 = vmul.f32 %v207, %v275
  %v343 = vmul.f32 %v208, %v275
  %v344 = vmul.f32 %v209, %v275
  %v345 = vmul.f32 %v210, %v275
  %v346 = vmul.f32 %v211, %v275
  %v347 = vmul.f32 %v212, %v275
  %v348 = vmul.f32 %v213, %v275
  %v349 = vmul.f32 %v214, %v275
  %v350 = vmul.f32 %v215, %v275
  %v351 = vmul.f32 %v216, %v275
  %v352 = vmul.f32 %v217, %v275
  %v353 = vmul.f32 %v218, %v275
  %v354 = vmul.f32 %v219, %v275
  %v355 = vmul.f32 %v220, %v275
  %v356 = vmul.f32 %v221, %v275
  %v357 = vmul.f32 %v222, %v275
  %v358 = vmul.f32 %v223, %v275
  %v359 = vmul.f32 %v224, %v275
  %v360 = vmul.f32 %v225, %v275
  %v361 = vmul.f32 %v226, %v275
  %v362 = vmul.f32 %v227, %v275
  %v363 = vmul.f32 %v228, %v275
  %v364 = vmul.f32 %v229, %v275
  %v365 = vmul.f32 %v230, %v275
  %v366 = vmul.f32 %v231, %v275
  %v367 = vmul.f32 %v232, %v275
  %v368 = vmul.f32 %v233, %v275
  %v369 = vmul.f32 %v234, %v275
  %v370 = vmul.f32 %v235, %v275
  %v371 = vmul.f32 %v236, %v275
  %v372 = vmul.f32 %v237, %v275
  %v373 = vmul.f32 %v238, %v275
  %v374 = vmul.f32 %v239, %v275
  %v375 = vmul.f32 %v240, %v275
  %v376 = vmul.f32 %v241, %v275
  %v377 = vmul.f32 %v242, %v275
  %v378 = vmul.f32 %v243, %v275
  %v379 = vmul.f32 %v244, %v275
  %v380 = vmul.f32 %v245, %v275
  %v381 = vmul.f32 %v246, %v275
  %v382 = vmul.f32 %v247, %v275
  %v383 = vmul.f32 %v248, %v275
  %v384 = vmul.f32 %v249, %v275
  %v385 = vmul.f32 %v250, %v275
  %v386 = vmul.f32 %v251, %v275
  %v387 = vmul.f32 %v252, %v275
  %v388 = vmul.f32 %v253, %v275
  %v389 = vmul.f32 %v254, %v275
  %v390 = vmul.f32 %v255, %v275
  %v391 = vmul.f32 %v256, %v275
  %v392 = vmul.f32 %v257, %v275
  %v393 = vmul.f32 %v258, %v275
  %v394 = vmul.f32 %v259, %v275
  %v395 = vmul.f32 %v260, %v275
  %v396 = vmul.f32 %v261, %v275
  %v397 = vmul.f32 %v262, %v275
  %v398 = vmul.f32 %v263, %v275
  %v399 = vmul.f32 %v264, %v275
  %v400 = vmul.f32 %v265, %v275
  %v401 = vmul.f32 %v266, %v275
  %v402 = vmul.f32 %v267, %v275
  %v403 = vmul.f32 %v268, %v275
  %v404 = vmul.f32 %v269, %v275
  %v405 = vld [vmem:[%s2] sm:$0x1]
  %v407 = vlaneseq
  %v408 = vshrl.u32 %v407, 7
  %v409 = vsub.s32 0, %v408
  %v410 = vrot.slane %v405, %v409
  %v412 = vadd.f32 %v277, %v410
  %v413 = vadd.f32 %v278, %v410
  %v414 = vadd.f32 %v279, %v410
  %v415 = vadd.f32 %v280, %v410
  %v416 = vadd.f32 %v281, %v410
  %v417 = vadd.f32 %v282, %v410
  %v418 = vadd.f32 %v283, %v410
  %v419 = vadd.f32 %v284, %v410
  %v420 = vadd.f32 %v285, %v410
  %v421 = vadd.f32 %v286, %v410
  %v422 = vadd.f32 %v287, %v410
  %v423 = vadd.f32 %v288, %v410
  %v424 = vadd.f32 %v289, %v410
  %v425 = vadd.f32 %v290, %v410
  %v426 = vadd.f32 %v291, %v410
  %v427 = vadd.f32 %v292, %v410
  %v428 = vadd.f32 %v293, %v410
  %v429 = vadd.f32 %v294, %v410
  %v430 = vadd.f32 %v295, %v410
  %v431 = vadd.f32 %v296, %v410
  %v432 = vadd.f32 %v297, %v410
  %v433 = vadd.f32 %v298, %v410
  %v434 = vadd.f32 %v299, %v410
  %v435 = vadd.f32 %v300, %v410
  %v436 = vadd.f32 %v301, %v410
  %v437 = vadd.f32 %v302, %v410
  %v438 = vadd.f32 %v303, %v410
  %v439 = vadd.f32 %v304, %v410
  %v440 = vadd.f32 %v305, %v410
  %v441 = vadd.f32 %v306, %v410
  %v442 = vadd.f32 %v307, %v410
  %v443 = vadd.f32 %v308, %v410
  %v444 = vadd.f32 %v309, %v410
  %v445 = vadd.f32 %v310, %v410
  %v446 = vadd.f32 %v311, %v410
  %v447 = vadd.f32 %v312, %v410
  %v448 = vadd.f32 %v313, %v410
  %v449 = vadd.f32 %v314, %v410
  %v450 = vadd.f32 %v315, %v410
  %v451 = vadd.f32 %v316, %v410
  %v452 = vadd.f32 %v317, %v410
  %v453 = vadd.f32 %v318, %v410
  %v454 = vadd.f32 %v319, %v410
  %v455 = vadd.f32 %v320, %v410
  %v456 = vadd.f32 %v321, %v410
  %v457 = vadd.f32 %v322, %v410
  %v458 = vadd.f32 %v323, %v410
  %v459 = vadd.f32 %v324, %v410
  %v460 = vadd.f32 %v325, %v410
  %v461 = vadd.f32 %v326, %v410
  %v462 = vadd.f32 %v327, %v410
  %v463 = vadd.f32 %v328, %v410
  %v464 = vadd.f32 %v329, %v410
  %v465 = vadd.f32 %v330, %v410
  %v466 = vadd.f32 %v331, %v410
  %v467 = vadd.f32 %v332, %v410
  %v468 = vadd.f32 %v333, %v410
  %v469 = vadd.f32 %v334, %v410
  %v470 = vadd.f32 %v335, %v410
  %v471 = vadd.f32 %v336, %v410
  %v472 = vadd.f32 %v337, %v410
  %v473 = vadd.f32 %v338, %v410
  %v474 = vadd.f32 %v339, %v410
  %v475 = vadd.f32 %v340, %v410
  %v476 = vadd.f32 %v341, %v410
  %v477 = vadd.f32 %v342, %v410
  %v478 = vadd.f32 %v343, %v410
  %v479 = vadd.f32 %v344, %v410
  %v480 = vadd.f32 %v345, %v410
  %v481 = vadd.f32 %v346, %v410
  %v482 = vadd.f32 %v347, %v410
  %v483 = vadd.f32 %v348, %v410
  %v484 = vadd.f32 %v349, %v410
  %v485 = vadd.f32 %v350, %v410
  %v486 = vadd.f32 %v351, %v410
  %v487 = vadd.f32 %v352, %v410
  %v488 = vadd.f32 %v353, %v410
  %v489 = vadd.f32 %v354, %v410
  %v490 = vadd.f32 %v355, %v410
  %v491 = vadd.f32 %v356, %v410
  %v492 = vadd.f32 %v357, %v410
  %v493 = vadd.f32 %v358, %v410
  %v494 = vadd.f32 %v359, %v410
  %v495 = vadd.f32 %v360, %v410
  %v496 = vadd.f32 %v361, %v410
  %v497 = vadd.f32 %v362, %v410
  %v498 = vadd.f32 %v363, %v410
  %v499 = vadd.f32 %v364, %v410
  %v500 = vadd.f32 %v365, %v410
  %v501 = vadd.f32 %v366, %v410
  %v502 = vadd.f32 %v367, %v410
  %v503 = vadd.f32 %v368, %v410
  %v504 = vadd.f32 %v369, %v410
  %v505 = vadd.f32 %v370, %v410
  %v506 = vadd.f32 %v371, %v410
  %v507 = vadd.f32 %v372, %v410
  %v508 = vadd.f32 %v373, %v410
  %v509 = vadd.f32 %v374, %v410
  %v510 = vadd.f32 %v375, %v410
  %v511 = vadd.f32 %v376, %v410
  %v512 = vadd.f32 %v377, %v410
  %v513 = vadd.f32 %v378, %v410
  %v514 = vadd.f32 %v379, %v410
  %v515 = vadd.f32 %v380, %v410
  %v516 = vadd.f32 %v381, %v410
  %v517 = vadd.f32 %v382, %v410
  %v518 = vadd.f32 %v383, %v410
  %v519 = vadd.f32 %v384, %v410
  %v520 = vadd.f32 %v385, %v410
  %v521 = vadd.f32 %v386, %v410
  %v522 = vadd.f32 %v387, %v410
  %v523 = vadd.f32 %v388, %v410
  %v524 = vadd.f32 %v389, %v410
  %v525 = vadd.f32 %v390, %v410
  %v526 = vadd.f32 %v391, %v410
  %v527 = vadd.f32 %v392, %v410
  %v528 = vadd.f32 %v393, %v410
  %v529 = vadd.f32 %v394, %v410
  %v530 = vadd.f32 %v395, %v410
  %v531 = vadd.f32 %v396, %v410
  %v532 = vadd.f32 %v397, %v410
  %v533 = vadd.f32 %v398, %v410
  %v534 = vadd.f32 %v399, %v410
  %v535 = vadd.f32 %v400, %v410
  %v536 = vadd.f32 %v401, %v410
  %v537 = vadd.f32 %v402, %v410
  %v538 = vadd.f32 %v403, %v410
  %v539 = vadd.f32 %v404, %v410
  %v540 = vmax.f32 %v412, 0.0
  %v541 = vmax.f32 %v413, 0.0
  %v542 = vmax.f32 %v414, 0.0
  %v543 = vmax.f32 %v415, 0.0
  %v544 = vmax.f32 %v416, 0.0
  %v545 = vmax.f32 %v417, 0.0
  %v546 = vmax.f32 %v418, 0.0
  %v547 = vmax.f32 %v419, 0.0
  %v548 = vmax.f32 %v420, 0.0
  %v549 = vmax.f32 %v421, 0.0
  %v550 = vmax.f32 %v422, 0.0
  %v551 = vmax.f32 %v423, 0.0
  %v552 = vmax.f32 %v424, 0.0
  %v553 = vmax.f32 %v425, 0.0
  %v554 = vmax.f32 %v426, 0.0
  %v555 = vmax.f32 %v427, 0.0
  %v556 = vmax.f32 %v428, 0.0
  %v557 = vmax.f32 %v429, 0.0
  %v558 = vmax.f32 %v430, 0.0
  %v559 = vmax.f32 %v431, 0.0
  %v560 = vmax.f32 %v432, 0.0
  %v561 = vmax.f32 %v433, 0.0
  %v562 = vmax.f32 %v434, 0.0
  %v563 = vmax.f32 %v435, 0.0
  %v564 = vmax.f32 %v436, 0.0
  %v565 = vmax.f32 %v437, 0.0
  %v566 = vmax.f32 %v438, 0.0
  %v567 = vmax.f32 %v439, 0.0
  %v568 = vmax.f32 %v440, 0.0
  %v569 = vmax.f32 %v441, 0.0
  %v570 = vmax.f32 %v442, 0.0
  %v571 = vmax.f32 %v443, 0.0
  %v572 = vmax.f32 %v444, 0.0
  %v573 = vmax.f32 %v445, 0.0
  %v574 = vmax.f32 %v446, 0.0
  %v575 = vmax.f32 %v447, 0.0
  %v576 = vmax.f32 %v448, 0.0
  %v577 = vmax.f32 %v449, 0.0
  %v578 = vmax.f32 %v450, 0.0
  %v579 = vmax.f32 %v451, 0.0
  %v580 = vmax.f32 %v452, 0.0
  %v581 = vmax.f32 %v453, 0.0
  %v582 = vmax.f32 %v454, 0.0
  %v583 = vmax.f32 %v455, 0.0
  %v584 = vmax.f32 %v456, 0.0
  %v585 = vmax.f32 %v457, 0.0
  %v586 = vmax.f32 %v458, 0.0
  %v587 = vmax.f32 %v459, 0.0
  %v588 = vmax.f32 %v460, 0.0
  %v589 = vmax.f32 %v461, 0.0
  %v590 = vmax.f32 %v462, 0.0
  %v591 = vmax.f32 %v463, 0.0
  %v592 = vmax.f32 %v464, 0.0
  %v593 = vmax.f32 %v465, 0.0
  %v594 = vmax.f32 %v466, 0.0
  %v595 = vmax.f32 %v467, 0.0
  %v596 = vmax.f32 %v468, 0.0
  %v597 = vmax.f32 %v469, 0.0
  %v598 = vmax.f32 %v470, 0.0
  %v599 = vmax.f32 %v471, 0.0
  %v600 = vmax.f32 %v472, 0.0
  %v601 = vmax.f32 %v473, 0.0
  %v602 = vmax.f32 %v474, 0.0
  %v603 = vmax.f32 %v475, 0.0
  %v604 = vmax.f32 %v476, 0.0
  %v605 = vmax.f32 %v477, 0.0
  %v606 = vmax.f32 %v478, 0.0
  %v607 = vmax.f32 %v479, 0.0
  %v608 = vmax.f32 %v480, 0.0
  %v609 = vmax.f32 %v481, 0.0
  %v610 = vmax.f32 %v482, 0.0
  %v611 = vmax.f32 %v483, 0.0
  %v612 = vmax.f32 %v484, 0.0
  %v613 = vmax.f32 %v485, 0.0
  %v614 = vmax.f32 %v486, 0.0
  %v615 = vmax.f32 %v487, 0.0
  %v616 = vmax.f32 %v488, 0.0
  %v617 = vmax.f32 %v489, 0.0
  %v618 = vmax.f32 %v490, 0.0
  %v619 = vmax.f32 %v491, 0.0
  %v620 = vmax.f32 %v492, 0.0
  %v621 = vmax.f32 %v493, 0.0
  %v622 = vmax.f32 %v494, 0.0
  %v623 = vmax.f32 %v495, 0.0
  %v624 = vmax.f32 %v496, 0.0
  %v625 = vmax.f32 %v497, 0.0
  %v626 = vmax.f32 %v498, 0.0
  %v627 = vmax.f32 %v499, 0.0
  %v628 = vmax.f32 %v500, 0.0
  %v629 = vmax.f32 %v501, 0.0
  %v630 = vmax.f32 %v502, 0.0
  %v631 = vmax.f32 %v503, 0.0
  %v632 = vmax.f32 %v504, 0.0
  %v633 = vmax.f32 %v505, 0.0
  %v634 = vmax.f32 %v506, 0.0
  %v635 = vmax.f32 %v507, 0.0
  %v636 = vmax.f32 %v508, 0.0
  %v637 = vmax.f32 %v509, 0.0
  %v638 = vmax.f32 %v510, 0.0
  %v639 = vmax.f32 %v511, 0.0
  %v640 = vmax.f32 %v512, 0.0
  %v641 = vmax.f32 %v513, 0.0
  %v642 = vmax.f32 %v514, 0.0
  %v643 = vmax.f32 %v515, 0.0
  %v644 = vmax.f32 %v516, 0.0
  %v645 = vmax.f32 %v517, 0.0
  %v646 = vmax.f32 %v518, 0.0
  %v647 = vmax.f32 %v519, 0.0
  %v648 = vmax.f32 %v520, 0.0
  %v649 = vmax.f32 %v521, 0.0
  %v650 = vmax.f32 %v522, 0.0
  %v651 = vmax.f32 %v523, 0.0
  %v652 = vmax.f32 %v524, 0.0
  %v653 = vmax.f32 %v525, 0.0
  %v654 = vmax.f32 %v526, 0.0
  %v655 = vmax.f32 %v527, 0.0
  %v656 = vmax.f32 %v528, 0.0
  %v657 = vmax.f32 %v529, 0.0
  %v658 = vmax.f32 %v530, 0.0
  %v659 = vmax.f32 %v531, 0.0
  %v660 = vmax.f32 %v532, 0.0
  %v661 = vmax.f32 %v533, 0.0
  %v662 = vmax.f32 %v534, 0.0
  %v663 = vmax.f32 %v535, 0.0
  %v664 = vmax.f32 %v536, 0.0
  %v665 = vmax.f32 %v537, 0.0
  %v666 = vmax.f32 %v538, 0.0
  %v667 = vmax.f32 %v539, 0.0
  %v668 = vpack.c.bf16 %v541, %v540
  %v669 = vpack.c.bf16 %v543, %v542
  %v670 = vpack.c.bf16 %v545, %v544
  %v671 = vpack.c.bf16 %v547, %v546
  %v672 = vpack.c.bf16 %v549, %v548
  %v673 = vpack.c.bf16 %v551, %v550
  %v674 = vpack.c.bf16 %v553, %v552
  %v675 = vpack.c.bf16 %v555, %v554
  %v676 = vpack.c.bf16 %v557, %v556
  %v677 = vpack.c.bf16 %v559, %v558
  %v678 = vpack.c.bf16 %v561, %v560
  %v679 = vpack.c.bf16 %v563, %v562
  %v680 = vpack.c.bf16 %v565, %v564
  %v681 = vpack.c.bf16 %v567, %v566
  %v682 = vpack.c.bf16 %v569, %v568
  %v683 = vpack.c.bf16 %v571, %v570
  %v684 = vpack.c.bf16 %v573, %v572
  %v685 = vpack.c.bf16 %v575, %v574
  %v686 = vpack.c.bf16 %v577, %v576
  %v687 = vpack.c.bf16 %v579, %v578
  %v688 = vpack.c.bf16 %v581, %v580
  %v689 = vpack.c.bf16 %v583, %v582
  %v690 = vpack.c.bf16 %v585, %v584
  %v691 = vpack.c.bf16 %v587, %v586
  %v692 = vpack.c.bf16 %v589, %v588
  %v693 = vpack.c.bf16 %v591, %v590
  %v694 = vpack.c.bf16 %v593, %v592
  %v695 = vpack.c.bf16 %v595, %v594
  %v696 = vpack.c.bf16 %v597, %v596
  %v697 = vpack.c.bf16 %v599, %v598
  %v698 = vpack.c.bf16 %v601, %v600
  %v699 = vpack.c.bf16 %v603, %v602
  %v700 = vpack.c.bf16 %v605, %v604
  %v701 = vpack.c.bf16 %v607, %v606
  %v702 = vpack.c.bf16 %v609, %v608
  %v703 = vpack.c.bf16 %v611, %v610
  %v704 = vpack.c.bf16 %v613, %v612
  %v705 = vpack.c.bf16 %v615, %v614
  %v706 = vpack.c.bf16 %v617, %v616
  %v707 = vpack.c.bf16 %v619, %v618
  %v708 = vpack.c.bf16 %v621, %v620
  %v709 = vpack.c.bf16 %v623, %v622
  %v710 = vpack.c.bf16 %v625, %v624
  %v711 = vpack.c.bf16 %v627, %v626
  %v712 = vpack.c.bf16 %v629, %v628
  %v713 = vpack.c.bf16 %v631, %v630
  %v714 = vpack.c.bf16 %v633, %v632
  %v715 = vpack.c.bf16 %v635, %v634
  %v716 = vpack.c.bf16 %v637, %v636
  %v717 = vpack.c.bf16 %v639, %v638
  %v718 = vpack.c.bf16 %v641, %v640
  %v719 = vpack.c.bf16 %v643, %v642
  %v720 = vpack.c.bf16 %v645, %v644
  %v721 = vpack.c.bf16 %v647, %v646
  %v722 = vpack.c.bf16 %v649, %v648
  %v723 = vpack.c.bf16 %v651, %v650
  %v724 = vpack.c.bf16 %v653, %v652
  %v725 = vpack.c.bf16 %v655, %v654
  %v726 = vpack.c.bf16 %v657, %v656
  %v727 = vpack.c.bf16 %v659, %v658
  %v728 = vpack.c.bf16 %v661, %v660
  %v729 = vpack.c.bf16 %v663, %v662
  %v730 = vpack.c.bf16 %v665, %v664
  %v731 = vpack.c.bf16 %v667, %v666
  %v796 = vunpack.c.l.b16 %v668
  %v797 = vunpack.c.h.b16 %v668
  %v798 = vunpack.c.l.b16 %v669
  %v799 = vunpack.c.h.b16 %v669
  %v800 = vunpack.c.l.b16 %v670
  %v801 = vunpack.c.h.b16 %v670
  %v802 = vunpack.c.l.b16 %v671
  %v803 = vunpack.c.h.b16 %v671
  %v804 = vunpack.c.l.b16 %v672
  %v805 = vunpack.c.h.b16 %v672
  %v806 = vunpack.c.l.b16 %v673
  %v807 = vunpack.c.h.b16 %v673
  %v808 = vunpack.c.l.b16 %v674
  %v809 = vunpack.c.h.b16 %v674
  %v810 = vunpack.c.l.b16 %v675
  %v811 = vunpack.c.h.b16 %v675
  %v812 = vunpack.c.l.b16 %v676
  %v813 = vunpack.c.h.b16 %v676
  %v814 = vunpack.c.l.b16 %v677
  %v815 = vunpack.c.h.b16 %v677
  %v816 = vunpack.c.l.b16 %v678
  %v817 = vunpack.c.h.b16 %v678
  %v818 = vunpack.c.l.b16 %v679
  %v819 = vunpack.c.h.b16 %v679
  %v820 = vunpack.c.l.b16 %v680
  %v821 = vunpack.c.h.b16 %v680
  %v822 = vunpack.c.l.b16 %v681
  %v823 = vunpack.c.h.b16 %v681
  %v824 = vunpack.c.l.b16 %v682
  %v825 = vunpack.c.h.b16 %v682
  %v826 = vunpack.c.l.b16 %v683
  %v827 = vunpack.c.h.b16 %v683
  %v828 = vunpack.c.l.b16 %v684
  %v829 = vunpack.c.h.b16 %v684
  %v830 = vunpack.c.l.b16 %v685
  %v831 = vunpack.c.h.b16 %v685
  %v832 = vunpack.c.l.b16 %v686
  %v833 = vunpack.c.h.b16 %v686
  %v834 = vunpack.c.l.b16 %v687
  %v835 = vunpack.c.h.b16 %v687
  %v836 = vunpack.c.l.b16 %v688
  %v837 = vunpack.c.h.b16 %v688
  %v838 = vunpack.c.l.b16 %v689
  %v839 = vunpack.c.h.b16 %v689
  %v840 = vunpack.c.l.b16 %v690
  %v841 = vunpack.c.h.b16 %v690
  %v842 = vunpack.c.l.b16 %v691
  %v843 = vunpack.c.h.b16 %v691
  %v844 = vunpack.c.l.b16 %v692
  %v845 = vunpack.c.h.b16 %v692
  %v846 = vunpack.c.l.b16 %v693
  %v847 = vunpack.c.h.b16 %v693
  %v848 = vunpack.c.l.b16 %v694
  %v849 = vunpack.c.h.b16 %v694
  %v850 = vunpack.c.l.b16 %v695
  %v851 = vunpack.c.h.b16 %v695
  %v852 = vunpack.c.l.b16 %v696
  %v853 = vunpack.c.h.b16 %v696
  %v854 = vunpack.c.l.b16 %v697
  %v855 = vunpack.c.h.b16 %v697
  %v856 = vunpack.c.l.b16 %v698
  %v857 = vunpack.c.h.b16 %v698
  %v858 = vunpack.c.l.b16 %v699
  %v859 = vunpack.c.h.b16 %v699
  %v860 = vunpack.c.l.b16 %v700
  %v861 = vunpack.c.h.b16 %v700
  %v862 = vunpack.c.l.b16 %v701
  %v863 = vunpack.c.h.b16 %v701
  %v864 = vunpack.c.l.b16 %v702
  %v865 = vunpack.c.h.b16 %v702
  %v866 = vunpack.c.l.b16 %v703
  %v867 = vunpack.c.h.b16 %v703
  %v868 = vunpack.c.l.b16 %v704
  %v869 = vunpack.c.h.b16 %v704
  %v870 = vunpack.c.l.b16 %v705
  %v871 = vunpack.c.h.b16 %v705
  %v872 = vunpack.c.l.b16 %v706
  %v873 = vunpack.c.h.b16 %v706
  %v874 = vunpack.c.l.b16 %v707
  %v875 = vunpack.c.h.b16 %v707
  %v876 = vunpack.c.l.b16 %v708
  %v877 = vunpack.c.h.b16 %v708
  %v878 = vunpack.c.l.b16 %v709
  %v879 = vunpack.c.h.b16 %v709
  %v880 = vunpack.c.l.b16 %v710
  %v881 = vunpack.c.h.b16 %v710
  %v882 = vunpack.c.l.b16 %v711
  %v883 = vunpack.c.h.b16 %v711
  %v884 = vunpack.c.l.b16 %v712
  %v885 = vunpack.c.h.b16 %v712
  %v886 = vunpack.c.l.b16 %v713
  %v887 = vunpack.c.h.b16 %v713
  %v888 = vunpack.c.l.b16 %v714
  %v889 = vunpack.c.h.b16 %v714
  %v890 = vunpack.c.l.b16 %v715
  %v891 = vunpack.c.h.b16 %v715
  %v892 = vunpack.c.l.b16 %v716
  %v893 = vunpack.c.h.b16 %v716
  %v894 = vunpack.c.l.b16 %v717
  %v895 = vunpack.c.h.b16 %v717
  %v896 = vunpack.c.l.b16 %v718
  %v897 = vunpack.c.h.b16 %v718
  %v898 = vunpack.c.l.b16 %v719
  %v899 = vunpack.c.h.b16 %v719
  %v900 = vunpack.c.l.b16 %v720
  %v901 = vunpack.c.h.b16 %v720
  %v902 = vunpack.c.l.b16 %v721
  %v903 = vunpack.c.h.b16 %v721
  %v904 = vunpack.c.l.b16 %v722
  %v905 = vunpack.c.h.b16 %v722
  %v906 = vunpack.c.l.b16 %v723
  %v907 = vunpack.c.h.b16 %v723
  %v908 = vunpack.c.l.b16 %v724
  %v909 = vunpack.c.h.b16 %v724
  %v910 = vunpack.c.l.b16 %v725
  %v911 = vunpack.c.h.b16 %v725
  %v912 = vunpack.c.l.b16 %v726
  %v913 = vunpack.c.h.b16 %v726
  %v914 = vunpack.c.l.b16 %v727
  %v915 = vunpack.c.h.b16 %v727
  %v916 = vunpack.c.l.b16 %v728
  %v917 = vunpack.c.h.b16 %v728
  %v918 = vunpack.c.l.b16 %v729
  %v919 = vunpack.c.h.b16 %v729
  %v920 = vunpack.c.l.b16 %v730
  %v921 = vunpack.c.h.b16 %v730
  %v922 = vunpack.c.l.b16 %v731
  %v923 = vunpack.c.h.b16 %v731
  %v924 = vpack.c.b16 %v796, %v796
  %v925 = vpack.c.b16 %v797, %v797
  %v926 = vpack.c.b16 %v798, %v798
  %v927 = vpack.c.b16 %v799, %v799
  %v928 = vpack.c.b16 %v800, %v800
  %v929 = vpack.c.b16 %v801, %v801
  %v930 = vpack.c.b16 %v802, %v802
  %v931 = vpack.c.b16 %v803, %v803
  %v932 = vpack.c.b16 %v804, %v804
  %v933 = vpack.c.b16 %v805, %v805
  %v934 = vpack.c.b16 %v806, %v806
  %v935 = vpack.c.b16 %v807, %v807
  %v936 = vpack.c.b16 %v808, %v808
  %v937 = vpack.c.b16 %v809, %v809
  %v938 = vpack.c.b16 %v810, %v810
  %v939 = vpack.c.b16 %v811, %v811
  %v940 = vpack.c.b16 %v812, %v812
  %v941 = vpack.c.b16 %v813, %v813
  %v942 = vpack.c.b16 %v814, %v814
  %v943 = vpack.c.b16 %v815, %v815
  %v944 = vpack.c.b16 %v816, %v816
  %v945 = vpack.c.b16 %v817, %v817
  %v946 = vpack.c.b16 %v818, %v818
  %v947 = vpack.c.b16 %v819, %v819
  %v948 = vpack.c.b16 %v820, %v820
  %v949 = vpack.c.b16 %v821, %v821
  %v950 = vpack.c.b16 %v822, %v822
  %v951 = vpack.c.b16 %v823, %v823
  %v952 = vpack.c.b16 %v824, %v824
  %v953 = vpack.c.b16 %v825, %v825
  %v954 = vpack.c.b16 %v826, %v826
  %v955 = vpack.c.b16 %v827, %v827
  %v956 = vpack.c.b16 %v828, %v828
  %v957 = vpack.c.b16 %v829, %v829
  %v958 = vpack.c.b16 %v830, %v830
  %v959 = vpack.c.b16 %v831, %v831
  %v960 = vpack.c.b16 %v832, %v832
  %v961 = vpack.c.b16 %v833, %v833
  %v962 = vpack.c.b16 %v834, %v834
  %v963 = vpack.c.b16 %v835, %v835
  %v964 = vpack.c.b16 %v836, %v836
  %v965 = vpack.c.b16 %v837, %v837
  %v966 = vpack.c.b16 %v838, %v838
  %v967 = vpack.c.b16 %v839, %v839
  %v968 = vpack.c.b16 %v840, %v840
  %v969 = vpack.c.b16 %v841, %v841
  %v970 = vpack.c.b16 %v842, %v842
  %v971 = vpack.c.b16 %v843, %v843
  %v972 = vpack.c.b16 %v844, %v844
  %v973 = vpack.c.b16 %v845, %v845
  %v974 = vpack.c.b16 %v846, %v846
  %v975 = vpack.c.b16 %v847, %v847
  %v976 = vpack.c.b16 %v848, %v848
  %v977 = vpack.c.b16 %v849, %v849
  %v978 = vpack.c.b16 %v850, %v850
  %v979 = vpack.c.b16 %v851, %v851
  %v980 = vpack.c.b16 %v852, %v852
  %v981 = vpack.c.b16 %v853, %v853
  %v982 = vpack.c.b16 %v854, %v854
  %v983 = vpack.c.b16 %v855, %v855
  %v984 = vpack.c.b16 %v856, %v856
  %v985 = vpack.c.b16 %v857, %v857
  %v986 = vpack.c.b16 %v858, %v858
  %v987 = vpack.c.b16 %v859, %v859
  %v988 = vpack.c.b16 %v860, %v860
  %v989 = vpack.c.b16 %v861, %v861
  %v990 = vpack.c.b16 %v862, %v862
  %v991 = vpack.c.b16 %v863, %v863
  %v992 = vpack.c.b16 %v864, %v864
  %v993 = vpack.c.b16 %v865, %v865
  %v994 = vpack.c.b16 %v866, %v866
  %v995 = vpack.c.b16 %v867, %v867
  %v996 = vpack.c.b16 %v868, %v868
  %v997 = vpack.c.b16 %v869, %v869
  %v998 = vpack.c.b16 %v870, %v870
  %v999 = vpack.c.b16 %v871, %v871
  %v1000 = vpack.c.b16 %v872, %v872
  %v1001 = vpack.c.b16 %v873, %v873
  %v1002 = vpack.c.b16 %v874, %v874
  %v1003 = vpack.c.b16 %v875, %v875
  %v1004 = vpack.c.b16 %v876, %v876
  %v1005 = vpack.c.b16 %v877, %v877
  %v1006 = vpack.c.b16 %v878, %v878
  %v1007 = vpack.c.b16 %v879, %v879
  %v1008 = vpack.c.b16 %v880, %v880
  %v1009 = vpack.c.b16 %v881, %v881
  %v1010 = vpack.c.b16 %v882, %v882
  %v1011 = vpack.c.b16 %v883, %v883
  %v1012 = vpack.c.b16 %v884, %v884
  %v1013 = vpack.c.b16 %v885, %v885
  %v1014 = vpack.c.b16 %v886, %v886
  %v1015 = vpack.c.b16 %v887, %v887
  %v1016 = vpack.c.b16 %v888, %v888
  %v1017 = vpack.c.b16 %v889, %v889
  %v1018 = vpack.c.b16 %v890, %v890
  %v1019 = vpack.c.b16 %v891, %v891
  %v1020 = vpack.c.b16 %v892, %v892
  %v1021 = vpack.c.b16 %v893, %v893
  %v1022 = vpack.c.b16 %v894, %v894
  %v1023 = vpack.c.b16 %v895, %v895
  %v1024 = vpack.c.b16 %v896, %v896
  %v1025 = vpack.c.b16 %v897, %v897
  %v1026 = vpack.c.b16 %v898, %v898
  %v1027 = vpack.c.b16 %v899, %v899
  %v1028 = vpack.c.b16 %v900, %v900
  %v1029 = vpack.c.b16 %v901, %v901
  %v1030 = vpack.c.b16 %v902, %v902
  %v1031 = vpack.c.b16 %v903, %v903
  %v1032 = vpack.c.b16 %v904, %v904
  %v1033 = vpack.c.b16 %v905, %v905
  %v1034 = vpack.c.b16 %v906, %v906
  %v1035 = vpack.c.b16 %v907, %v907
  %v1036 = vpack.c.b16 %v908, %v908
  %v1037 = vpack.c.b16 %v909, %v909
  %v1038 = vpack.c.b16 %v910, %v910
  %v1039 = vpack.c.b16 %v911, %v911
  %v1040 = vpack.c.b16 %v912, %v912
  %v1041 = vpack.c.b16 %v913, %v913
  %v1042 = vpack.c.b16 %v914, %v914
  %v1043 = vpack.c.b16 %v915, %v915
  %v1044 = vpack.c.b16 %v916, %v916
  %v1045 = vpack.c.b16 %v917, %v917
  %v1046 = vpack.c.b16 %v918, %v918
  %v1047 = vpack.c.b16 %v919, %v919
  %v1048 = vpack.c.b16 %v920, %v920
  %v1049 = vpack.c.b16 %v921, %v921
  %v1050 = vpack.c.b16 %v922, %v922
  %v1051 = vpack.c.b16 %v923, %v923
  %1180 = vst [vmem:[%s3] sm:$0xf] %v924
  %1181 = vst [vmem:[%s3 + $0x4] sm:$0xf] %v925
  %1182 = vst [vmem:[%s3 + $0x8] sm:$0xf] %v926
  %1183 = vst [vmem:[%s3 + $0xc] sm:$0xf] %v927
  %1184 = vst [vmem:[%s3 + $0x10] sm:$0xf] %v928
  %1185 = vst [vmem:[%s3 + $0x14] sm:$0xf] %v929
  %1186 = vst [vmem:[%s3 + $0x18] sm:$0xf] %v930
  %1187 = vst [vmem:[%s3 + $0x1c] sm:$0xf] %v931
  %1188 = vst [vmem:[%s3 + $0x20] sm:$0xf] %v932
  %1189 = vst [vmem:[%s3 + $0x24] sm:$0xf] %v933
  %1190 = vst [vmem:[%s3 + $0x28] sm:$0xf] %v934
  %1191 = vst [vmem:[%s3 + $0x2c] sm:$0xf] %v935
  %1192 = vst [vmem:[%s3 + $0x30] sm:$0xf] %v936
  %1193 = vst [vmem:[%s3 + $0x34] sm:$0xf] %v937
  %1194 = vst [vmem:[%s3 + $0x38] sm:$0xf] %v938
  %1195 = vst [vmem:[%s3 + $0x3c] sm:$0xf] %v939
  %1196 = vst [vmem:[%s3 + $0x40] sm:$0xf] %v940
  %1197 = vst [vmem:[%s3 + $0x44] sm:$0xf] %v941
  %1198 = vst [vmem:[%s3 + $0x48] sm:$0xf] %v942
  %1199 = vst [vmem:[%s3 + $0x4c] sm:$0xf] %v943
  %1200 = vst [vmem:[%s3 + $0x50] sm:$0xf] %v944
  %1201 = vst [vmem:[%s3 + $0x54] sm:$0xf] %v945
  %1202 = vst [vmem:[%s3 + $0x58] sm:$0xf] %v946
  %1203 = vst [vmem:[%s3 + $0x5c] sm:$0xf] %v947
  %1204 = vst [vmem:[%s3 + $0x60] sm:$0xf] %v948
  %1205 = vst [vmem:[%s3 + $0x64] sm:$0xf] %v949
  %1206 = vst [vmem:[%s3 + $0x68] sm:$0xf] %v950
  %1207 = vst [vmem:[%s3 + $0x6c] sm:$0xf] %v951
  %1208 = vst [vmem:[%s3 + $0x70] sm:$0xf] %v952
  %1209 = vst [vmem:[%s3 + $0x74] sm:$0xf] %v953
  %1210 = vst [vmem:[%s3 + $0x78] sm:$0xf] %v954
  %1211 = vst [vmem:[%s3 + $0x7c] sm:$0xf] %v955
  %1212 = vst [vmem:[%s3 + $0x80] sm:$0xf] %v956
  %1213 = vst [vmem:[%s3 + $0x84] sm:$0xf] %v957
  %1214 = vst [vmem:[%s3 + $0x88] sm:$0xf] %v958
  %1215 = vst [vmem:[%s3 + $0x8c] sm:$0xf] %v959
  %1216 = vst [vmem:[%s3 + $0x90] sm:$0xf] %v960
  %1217 = vst [vmem:[%s3 + $0x94] sm:$0xf] %v961
  %1218 = vst [vmem:[%s3 + $0x98] sm:$0xf] %v962
  %1219 = vst [vmem:[%s3 + $0x9c] sm:$0xf] %v963
  %1220 = vst [vmem:[%s3 + $0xa0] sm:$0xf] %v964
  %1221 = vst [vmem:[%s3 + $0xa4] sm:$0xf] %v965
  %1222 = vst [vmem:[%s3 + $0xa8] sm:$0xf] %v966
  %1223 = vst [vmem:[%s3 + $0xac] sm:$0xf] %v967
  %1224 = vst [vmem:[%s3 + $0xb0] sm:$0xf] %v968
  %1225 = vst [vmem:[%s3 + $0xb4] sm:$0xf] %v969
  %1226 = vst [vmem:[%s3 + $0xb8] sm:$0xf] %v970
  %1227 = vst [vmem:[%s3 + $0xbc] sm:$0xf] %v971
  %1228 = vst [vmem:[%s3 + $0xc0] sm:$0xf] %v972
  %1229 = vst [vmem:[%s3 + $0xc4] sm:$0xf] %v973
  %1230 = vst [vmem:[%s3 + $0xc8] sm:$0xf] %v974
  %1231 = vst [vmem:[%s3 + $0xcc] sm:$0xf] %v975
  %1232 = vst [vmem:[%s3 + $0xd0] sm:$0xf] %v976
  %1233 = vst [vmem:[%s3 + $0xd4] sm:$0xf] %v977
  %1234 = vst [vmem:[%s3 + $0xd8] sm:$0xf] %v978
  %1235 = vst [vmem:[%s3 + $0xdc] sm:$0xf] %v979
  %1236 = vst [vmem:[%s3 + $0xe0] sm:$0xf] %v980
  %1237 = vst [vmem:[%s3 + $0xe4] sm:$0xf] %v981
  %1238 = vst [vmem:[%s3 + $0xe8] sm:$0xf] %v982
  %1239 = vst [vmem:[%s3 + $0xec] sm:$0xf] %v983
  %1240 = vst [vmem:[%s3 + $0xf0] sm:$0xf] %v984
  %1241 = vst [vmem:[%s3 + $0xf4] sm:$0xf] %v985
  %1242 = vst [vmem:[%s3 + $0xf8] sm:$0xf] %v986
  %1243 = vst [vmem:[%s3 + $0xfc] sm:$0xf] %v987
  %1244 = vst [vmem:[%s3 + $0x100] sm:$0xf] %v988
  %1245 = vst [vmem:[%s3 + $0x104] sm:$0xf] %v989
  %1246 = vst [vmem:[%s3 + $0x108] sm:$0xf] %v990
  %1247 = vst [vmem:[%s3 + $0x10c] sm:$0xf] %v991
  %1248 = vst [vmem:[%s3 + $0x110] sm:$0xf] %v992
  %1249 = vst [vmem:[%s3 + $0x114] sm:$0xf] %v993
  %1250 = vst [vmem:[%s3 + $0x118] sm:$0xf] %v994
  %1251 = vst [vmem:[%s3 + $0x11c] sm:$0xf] %v995
  %1252 = vst [vmem:[%s3 + $0x120] sm:$0xf] %v996
  %1253 = vst [vmem:[%s3 + $0x124] sm:$0xf] %v997
  %1254 = vst [vmem:[%s3 + $0x128] sm:$0xf] %v998
  %1255 = vst [vmem:[%s3 + $0x12c] sm:$0xf] %v999
  %1256 = vst [vmem:[%s3 + $0x130] sm:$0xf] %v1000
  %1257 = vst [vmem:[%s3 + $0x134] sm:$0xf] %v1001
  %1258 = vst [vmem:[%s3 + $0x138] sm:$0xf] %v1002
  %1259 = vst [vmem:[%s3 + $0x13c] sm:$0xf] %v1003
  %1260 = vst [vmem:[%s3 + $0x140] sm:$0xf] %v1004
  %1261 = vst [vmem:[%s3 + $0x144] sm:$0xf] %v1005
  %1262 = vst [vmem:[%s3 + $0x148] sm:$0xf] %v1006
  %1263 = vst [vmem:[%s3 + $0x14c] sm:$0xf] %v1007
  %1264 = vst [vmem:[%s3 + $0x150] sm:$0xf] %v1008
  %1265 = vst [vmem:[%s3 + $0x154] sm:$0xf] %v1009
  %1266 = vst [vmem:[%s3 + $0x158] sm:$0xf] %v1010
  %1267 = vst [vmem:[%s3 + $0x15c] sm:$0xf] %v1011
  %1268 = vst [vmem:[%s3 + $0x160] sm:$0xf] %v1012
  %1269 = vst [vmem:[%s3 + $0x164] sm:$0xf] %v1013
  %1270 = vst [vmem:[%s3 + $0x168] sm:$0xf] %v1014
  %1271 = vst [vmem:[%s3 + $0x16c] sm:$0xf] %v1015
  %1272 = vst [vmem:[%s3 + $0x170] sm:$0xf] %v1016
  %1273 = vst [vmem:[%s3 + $0x174] sm:$0xf] %v1017
  %1274 = vst [vmem:[%s3 + $0x178] sm:$0xf] %v1018
  %1275 = vst [vmem:[%s3 + $0x17c] sm:$0xf] %v1019
  %1276 = vst [vmem:[%s3 + $0x180] sm:$0xf] %v1020
  %1277 = vst [vmem:[%s3 + $0x184] sm:$0xf] %v1021
  %1278 = vst [vmem:[%s3 + $0x188] sm:$0xf] %v1022
  %1279 = vst [vmem:[%s3 + $0x18c] sm:$0xf] %v1023
  %1280 = vst [vmem:[%s3 + $0x190] sm:$0xf] %v1024
  %1281 = vst [vmem:[%s3 + $0x194] sm:$0xf] %v1025
  %1282 = vst [vmem:[%s3 + $0x198] sm:$0xf] %v1026
  %1283 = vst [vmem:[%s3 + $0x19c] sm:$0xf] %v1027
  %1284 = vst [vmem:[%s3 + $0x1a0] sm:$0xf] %v1028
  %1285 = vst [vmem:[%s3 + $0x1a4] sm:$0xf] %v1029
  %1286 = vst [vmem:[%s3 + $0x1a8] sm:$0xf] %v1030
  %1287 = vst [vmem:[%s3 + $0x1ac] sm:$0xf] %v1031
  %1288 = vst [vmem:[%s3 + $0x1b0] sm:$0xf] %v1032
  %1289 = vst [vmem:[%s3 + $0x1b4] sm:$0xf] %v1033
  %1290 = vst [vmem:[%s3 + $0x1b8] sm:$0xf] %v1034
  %1291 = vst [vmem:[%s3 + $0x1bc] sm:$0xf] %v1035
  %1292 = vst [vmem:[%s3 + $0x1c0] sm:$0xf] %v1036
  %1293 = vst [vmem:[%s3 + $0x1c4] sm:$0xf] %v1037
  %1294 = vst [vmem:[%s3 + $0x1c8] sm:$0xf] %v1038
  %1295 = vst [vmem:[%s3 + $0x1cc] sm:$0xf] %v1039
  %1296 = vst [vmem:[%s3 + $0x1d0] sm:$0xf] %v1040
  %1297 = vst [vmem:[%s3 + $0x1d4] sm:$0xf] %v1041
  %1298 = vst [vmem:[%s3 + $0x1d8] sm:$0xf] %v1042
  %1299 = vst [vmem:[%s3 + $0x1dc] sm:$0xf] %v1043
  %1300 = vst [vmem:[%s3 + $0x1e0] sm:$0xf] %v1044
  %1301 = vst [vmem:[%s3 + $0x1e4] sm:$0xf] %v1045
  %1302 = vst [vmem:[%s3 + $0x1e8] sm:$0xf] %v1046
  %1303 = vst [vmem:[%s3 + $0x1ec] sm:$0xf] %v1047
  %1304 = vst [vmem:[%s3 + $0x1f0] sm:$0xf] %v1048
  %1305 = vst [vmem:[%s3 + $0x1f4] sm:$0xf] %v1049
  %1306 = vst [vmem:[%s3 + $0x1f8] sm:$0xf] %v1050
  %1307 = vst [vmem:[%s3 + $0x1fc] sm:$0xf] %v1051
  // Predicated region
  $region14: #{rsu4_forward.17} parent=0 // pred_check
    _
  $region15: #{rsu4_forward.17} parent=0 // pred_check_branch
    %1309 = sbr.rel (0) target = $region17
  $region16: #{rsu4_forward.17} parent=0 // pred_region
    _
  $region17: #{rsu4_forward.17} parent=0 // pred_fallthru
    _
  // Predicated region
  $region18: #{rsu4_forward.17} parent=0 // pred_check
    _
  $region19: #{rsu4_forward.17} parent=0 // pred_check_branch
    %1311 = sbr.rel (0) target = $region21
  $region20: #{rsu4_forward.17} parent=0 // pred_region
    _
  $region21: #{rsu4_forward.17} parent=0 // pred_fallthru
    _

// kernel: rsu4_forward.26
$region0: #{rsu4_forward.26}
  #allocation0 [shape = 'u32[]', space=smem, size = 0x4, offset = 0x4, fixed_abs, tag = 'smem constant byte address 0x4 - core index']
  #allocation1 [shape = 'u32[144,128]{1,0:T(1,128)}', space=vmem, size = 0x12000, scoped, tag = 'internal scratch']
  %s0 = inlined_call_operand.vmem [shape: bf16[1024,128], index: 0, kind: input, shape index: {}]
  %s1 = inlined_call_operand.vmem [shape: bf16[1024,128], index: 1, kind: input, shape index: {}]
  %s2 = inlined_call_operand.vmem [shape: bf16[128,128], index: 2, kind: input, shape index: {}]
  %s3 = inlined_call_operand.vmem [shape: bf16[128,128], index: 3, kind: input, shape index: {}]
  %s4 = inlined_call_operand.vmem [shape: bf16[1024,128], index: 4, kind: output, shape index: {0}]
  %s5 = inlined_call_operand.vmem [shape: f32[2,2,128], index: 5, kind: output, shape index: {1}]
  %6 = xla_tuple %s4, %s5
  %s7 = sld [smem:[#allocation0]]
  $region57: #{rsu4_forward.26} parent=0
    _
  %s9 = ssub.s32 1, %s7
  %s10 = scalar_select 0, %s9, %s7
  loop: start=0, step=1, limit=4
  $region2: #{rsu4_forward.26} parent=0 // loop_pre_header
    _
  $region3: #{rsu4_forward.26} parent=0 // loop_header
    %s12 = sphi 0, %s16
    %p13 = scmp.ge.s32.totalorder %s12, 4
    %s22 = sphi 0, %s24
    %s25 = sphi 0, %s22
    %s26 = sphi 0, %s25
    %s42 = sphi 0, %s26
    %s48 = sphi 0, %s50
    %s51 = sphi 0, %s48
    %s52 = sphi 0, %s51
    %s68 = sphi 0, %s52
    %s72 = sphi 0, %s72
    %s74 = sphi 0, %s72
    %s75 = sphi 0, %s74
    %s89 = sphi 0, %s75
    %s93 = sphi 0, %s93
    %s95 = sphi 0, %s93
    %s96 = sphi 0, %s95
    %s110 = sphi 0, %s96
    %s116 = sphi 0, %s118
    %s119 = sphi 0, %s116
    %s120 = sphi 0, %s119
    %s136 = sphi 0, %s120
    %s142 = sphi 0, %s144
    %s145 = sphi 0, %s142
    %s146 = sphi 0, %s145
    %s162 = sphi 0, %s146
  $region4: #{rsu4_forward.26} parent=0 // loop_header_branch
    %15 = sbr.rel (%p13) target = $region8
  $region5: #{rsu4_forward.26} parent=0 // loop_body
    %s17 = ssub.s32 %s12, 1
    %s18 = ssub.s32 %s12, 2
    %s19 = sadd.s32 %s12, 1
    %s20 = ssub.s32 %s12, %s19
    %p21 = scmp.eq.s32.totalorder %s20, 0
    %s23 = sadd.s32 %s22, 1
    %s24 = scalar_select %p21, %s22, %s23
    %p27 = pneg %p21
    %p28 = scmp.eq.s32.totalorder %s12, 1
    %p29 = por %p27, %p28
    %p30 = scmp.ne.s32.totalorder %s22, %s25
    %p31 = scmp.eq.s32.totalorder %s12, 0
    %p32 = por %p30, %p31
    %p33 = scmp.ne.s32.totalorder %s22, %s25
    %p34 = scmp.eq.s32.totalorder %s17, 1
    %p35 = por %p33, %p34
    %p36 = scmp.ne.s32.totalorder %s25, %s26
    %p37 = scmp.eq.s32.totalorder %s17, 0
    %p38 = por %p36, %p37
    %p39 = scmp.ne.s32.totalorder %s25, %s26
    %p40 = scmp.eq.s32.totalorder %s18, 1
    %p41 = por %p39, %p40
    %p43 = scmp.ne.s32.totalorder %s26, %s42
    %p44 = scmp.eq.s32.totalorder %s18, 0
    %p45 = por %p43, %p44
    %s46 = ssub.s32 %s12, %s19
    %p47 = scmp.eq.s32.totalorder %s46, 0
    %s49 = sadd.s32 %s48, 1
    %s50 = scalar_select %p47, %s48, %s49
    %p53 = pneg %p47
    %p54 = scmp.eq.s32.totalorder %s12, 1
    %p55 = por %p53, %p54
    %p56 = scmp.ne.s32.totalorder %s48, %s51
    %p57 = scmp.eq.s32.totalorder %s12, 0
    %p58 = por %p56, %p57
    %p59 = scmp.ne.s32.totalorder %s48, %s51
    %p60 = scmp.eq.s32.totalorder %s17, 1
    %p61 = por %p59, %p60
    %p62 = scmp.ne.s32.totalorder %s51, %s52
    %p63 = scmp.eq.s32.totalorder %s17, 0
    %p64 = por %p62, %p63
    %p65 = scmp.ne.s32.totalorder %s51, %s52
    %p66 = scmp.eq.s32.totalorder %s18, 1
    %p67 = por %p65, %p66
    %p69 = scmp.ne.s32.totalorder %s52, %s68
    %p70 = scmp.eq.s32.totalorder %s18, 0
    %p71 = por %p69, %p70
    %s73 = sadd.s32 %s72, 1
    %p76 = scmp.eq.s32.totalorder %s12, 1
    %p77 = scmp.ne.s32.totalorder %s72, %s74
    %p78 = scmp.eq.s32.totalorder %s12, 0
    %p79 = por %p77, %p78
    %p80 = scmp.ne.s32.totalorder %s72, %s74
    %p81 = scmp.eq.s32.totalorder %s17, 1
    %p82 = por %p80, %p81
    %p83 = scmp.ne.s32.totalorder %s74, %s75
    %p84 = scmp.eq.s32.totalorder %s17, 0
    %p85 = por %p83, %p84
    %p86 = scmp.ne.s32.totalorder %s74, %s75
    %p87 = scmp.eq.s32.totalorder %s18, 1
    %p88 = por %p86, %p87
    %p90 = scmp.ne.s32.totalorder %s75, %s89
    %p91 = scmp.eq.s32.totalorder %s18, 0
    %p92 = por %p90, %p91
    %s94 = sadd.s32 %s93, 1
    %p97 = scmp.eq.s32.totalorder %s12, 1
    %p98 = scmp.ne.s32.totalorder %s93, %s95
    %p99 = scmp.eq.s32.totalorder %s12, 0
    %p100 = por %p98, %p99
    %p101 = scmp.ne.s32.totalorder %s93, %s95
    %p102 = scmp.eq.s32.totalorder %s17, 1
    %p103 = por %p101, %p102
    %p104 = scmp.ne.s32.totalorder %s95, %s96
    %p105 = scmp.eq.s32.totalorder %s17, 0
    %p106 = por %p104, %p105
    %p107 = scmp.ne.s32.totalorder %s95, %s96
    %p108 = scmp.eq.s32.totalorder %s18, 1
    %p109 = por %p107, %p108
    %p111 = scmp.ne.s32.totalorder %s96, %s110
    %p112 = scmp.eq.s32.totalorder %s18, 0
    %p113 = por %p111, %p112
    %s114 = ssub.s32 %s12, %s19
    %p115 = scmp.eq.s32.totalorder %s114, 0
    %s117 = sadd.s32 %s116, 1
    %s118 = scalar_select %p115, %s116, %s117
    %p121 = pneg %p115
    %p122 = scmp.eq.s32.totalorder %s12, 1
    %p123 = por %p121, %p122
    %p124 = scmp.ne.s32.totalorder %s116, %s119
    %p125 = scmp.eq.s32.totalorder %s12, 0
    %p126 = por %p124, %p125
    %p127 = scmp.ne.s32.totalorder %s116, %s119
    %p128 = scmp.eq.s32.totalorder %s17, 1
    %p129 = por %p127, %p128
    %p130 = scmp.ne.s32.totalorder %s119, %s120
    %p131 = scmp.eq.s32.totalorder %s17, 0
    %p132 = por %p130, %p131
    %p133 = scmp.ne.s32.totalorder %s119, %s120
    %p134 = scmp.eq.s32.totalorder %s18, 1
    %p135 = por %p133, %p134
    %p137 = scmp.ne.s32.totalorder %s120, %s136
    %p138 = scmp.eq.s32.totalorder %s18, 0
    %p139 = por %p137, %p138
    %s140 = ssub.s32 %s12, %s19
    %p141 = scmp.eq.s32.totalorder %s140, 0
    %s143 = sadd.s32 %s142, 1
    %s144 = scalar_select %p141, %s142, %s143
    %p147 = pneg %p141
    %p148 = scmp.eq.s32.totalorder %s12, 1
    %p149 = por %p147, %p148
    %p150 = scmp.ne.s32.totalorder %s142, %s145
    %p151 = scmp.eq.s32.totalorder %s12, 0
    %p152 = por %p150, %p151
    %p153 = scmp.ne.s32.totalorder %s142, %s145
    %p154 = scmp.eq.s32.totalorder %s17, 1
    %p155 = por %p153, %p154
    %p156 = scmp.ne.s32.totalorder %s145, %s146
    %p157 = scmp.eq.s32.totalorder %s17, 0
    %p158 = por %p156, %p157
    %p159 = scmp.ne.s32.totalorder %s145, %s146
    %p160 = scmp.eq.s32.totalorder %s18, 1
    %p161 = por %p159, %p160
    %p163 = scmp.ne.s32.totalorder %s146, %s162
    %p164 = scmp.eq.s32.totalorder %s18, 0
    %p165 = por %p163, %p164
    %p166 = scmp.le.s32.totalorder 1, %s12
    %p167 = scmp.lt.s32.totalorder %s12, 3
    %p168 = pnand %p166, %p167
    %p169 = pneg %p168
    // Predicated region
    $region9: #{rsu4_forward.26} parent=5 // pred_check
      _
    $region10: #{rsu4_forward.26} parent=5 // pred_check_branch
      %171 = sbr.rel (%p168) target = $region12
    $region11: #{rsu4_forward.26} parent=5 // pred_region
      %s172 = ssub.s32 %s12, 1
      // Predicated region
      $region13: #{rsu4_forward.26} parent=11 // pred_check
        %p173 = pneg %p85
      $region14: #{rsu4_forward.26} parent=11 // pred_check_branch
        %175 = sbr.rel (%p173) target = $region16
      $region15: #{rsu4_forward.26} parent=11 // pred_region
        _
      $region16: #{rsu4_forward.26} parent=11 // pred_fallthru
        _
      // Predicated region
      $region17: #{rsu4_forward.26} parent=11 // pred_check
        %p176 = pneg %p106
      $region18: #{rsu4_forward.26} parent=11 // pred_check_branch
        %178 = sbr.rel (%p176) target = $region20
      $region19: #{rsu4_forward.26} parent=11 // pred_region
        _
      $region20: #{rsu4_forward.26} parent=11 // pred_fallthru
        _
    $region12: #{rsu4_forward.26} parent=5 // pred_fallthru
      _
    %p179 = scmp.lt.s32.totalorder %s12, 2
    // Predicated region
    $region21: #{rsu4_forward.26} parent=5 // pred_check
      %p180 = pneg %p179
    $region22: #{rsu4_forward.26} parent=5 // pred_check_branch
      %182 = sbr.rel (%p180) target = $region24
    $region23: #{rsu4_forward.26} parent=5 // pred_region
      // Predicated region
      $region25: #{rsu4_forward.26} parent=23 // pred_check
        %p183 = pneg %p32
      $region26: #{rsu4_forward.26} parent=23 // pred_check_branch
        %185 = sbr.rel (%p183) target = $region28
      $region27: #{rsu4_forward.26} parent=23 // pred_region
        %s186 = smul.u32 64, %s12
        %p187 = scmp.lt.s32.totalorder %s186, 127
        %s188 = scalar_select %p187, %s186, 127
        %s189 = smul.addr %s188, 4
        %s190 = scalar_lea.vmem %s0, %s189
        %s191 = smul.u32 64, %s12
      $region28: #{rsu4_forward.26} parent=23 // pred_fallthru
        _
      // Predicated region
      $region29: #{rsu4_forward.26} parent=23 // pred_check
        %p192 = pneg %p58
      $region30: #{rsu4_forward.26} parent=23 // pred_check_branch
        %194 = sbr.rel (%p192) target = $region32
      $region31: #{rsu4_forward.26} parent=23 // pred_region
        %s195 = smul.u32 64, %s12
        %p196 = scmp.lt.s32.totalorder %s195, 127
        %s197 = scalar_select %p196, %s195, 127
        %s198 = smul.addr %s197, 4
        %s199 = scalar_lea.vmem %s1, %s198
        %s200 = smul.u32 64, %s12
      $region32: #{rsu4_forward.26} parent=23 // pred_fallthru
        _
    $region24: #{rsu4_forward.26} parent=5 // pred_fallthru
      _
    %p201 = scmp.le.s32.totalorder 1, %s12
    %p202 = scmp.lt.s32.totalorder %s12, 3
    %p203 = pnand %p201, %p202
    %p204 = pneg %p203
    // Predicated region
    $region33: #{rsu4_forward.26} parent=5 // pred_check
      _
    $region34: #{rsu4_forward.26} parent=5 // pred_check_branch
      %206 = sbr.rel (%p203) target = $region36
    $region35: #{rsu4_forward.26} parent=5 // pred_region
      %s207 = ssub.s32 %s12, 1
      %s208 = smul.u32 64, %s17
      %p209 = scmp.lt.s32.totalorder %s208, 127
      %s210 = scalar_select %p209, %s208, 127
      %s211 = smul.addr %s210, 4
      %s212 = scalar_lea.vmem %s0, %s211
      %p213 = pneg %p38
      %p214 = pneg %p35
      %s215 = smul.u32 64, %s17
      %p216 = scmp.lt.s32.totalorder %s215, 127
      %s217 = scalar_select %p216, %s215, 127
      %s218 = smul.addr %s217, 4
      %s219 = scalar_lea.vmem %s1, %s218
      %p220 = pneg %p64
      %p221 = pneg %p61
      %p222 = pneg %p85
      %p223 = pneg %p82
      %p224 = pneg %p106
      %p225 = pneg %p103
      %p226 = pneg %p132
      %p227 = pneg %p129
      %s228 = smul.u32 64, %s17
      %p229 = scmp.lt.s32.totalorder %s228, 127
      %s230 = scalar_select %p229, %s228, 127
      %s231 = smul.addr %s230, 4
      %s232 = scalar_lea.vmem %s4, %s231
      %p233 = pneg %p158
      %p234 = pneg %p155
      %p235 = scmp.lt.s32.totalorder %s17, 1
      %s236 = scalar_select %p235, %s17, 1
      %s237 = smul.addr %s236, 2
      %s238 = scalar_lea.vmem %s5, %s237
      %s239 = smul.u32 64, %s17
      %p240 = scmp.lt.s32.totalorder %s239, 127
      %s241 = scalar_select %p240, %s239, 127
      %s242 = smul.addr %s241, 4
      %s243 = scalar_lea.vmem %s0, %s242
      %s244 = smul.u32 64, %s17
      %s245 = smul.u32 64, %s17
      %p246 = scmp.lt.s32.totalorder %s245, 127
      %s247 = scalar_select %p246, %s245, 127
      %s248 = smul.addr %s247, 4
      %s249 = scalar_lea.vmem %s1, %s248
      %s250 = smul.u32 64, %s17
      %s251 = smul.u32 64, %s17
      %p252 = scmp.lt.s32.totalorder %s251, 127
      %s253 = scalar_select %p252, %s251, 127
      %s254 = smul.addr %s253, 4
      %s255 = scalar_lea.vmem %s4, %s254
      %s256 = smul.u32 64, %s17
      %p257 = scmp.lt.s32.totalorder %s17, 1
      %s258 = scalar_select %p257, %s17, 1
      %s259 = smul.addr %s258, 2
      %s260 = scalar_lea.vmem %s5, %s259
      %v262 = vld [vmem:[%s243] sm:$0xf]
      %v263 = vld [vmem:[%s243 + $0x4] sm:$0xf]
      %v264 = vld [vmem:[%s243 + $0x8] sm:$0xf]
      %v265 = vld [vmem:[%s243 + $0xc] sm:$0xf]
      %v266 = vld [vmem:[%s243 + $0x10] sm:$0xf]
      %v267 = vld [vmem:[%s243 + $0x14] sm:$0xf]
      %v268 = vld [vmem:[%s243 + $0x18] sm:$0xf]
      %v269 = vld [vmem:[%s243 + $0x1c] sm:$0xf]
      %v270 = vld [vmem:[%s243 + $0x20] sm:$0xf]
      %v271 = vld [vmem:[%s243 + $0x24] sm:$0xf]
      %v272 = vld [vmem:[%s243 + $0x28] sm:$0xf]
      %v273 = vld [vmem:[%s243 + $0x2c] sm:$0xf]
      %v274 = vld [vmem:[%s243 + $0x30] sm:$0xf]
      %v275 = vld [vmem:[%s243 + $0x34] sm:$0xf]
      %v276 = vld [vmem:[%s243 + $0x38] sm:$0xf]
      %v277 = vld [vmem:[%s243 + $0x3c] sm:$0xf]
      %v278 = vld [vmem:[%s243 + $0x40] sm:$0xf]
      %v279 = vld [vmem:[%s243 + $0x44] sm:$0xf]
      %v280 = vld [vmem:[%s243 + $0x48] sm:$0xf]
      %v281 = vld [vmem:[%s243 + $0x4c] sm:$0xf]
      %v282 = vld [vmem:[%s243 + $0x50] sm:$0xf]
      %v283 = vld [vmem:[%s243 + $0x54] sm:$0xf]
      %v284 = vld [vmem:[%s243 + $0x58] sm:$0xf]
      %v285 = vld [vmem:[%s243 + $0x5c] sm:$0xf]
      %v286 = vld [vmem:[%s243 + $0x60] sm:$0xf]
      %v287 = vld [vmem:[%s243 + $0x64] sm:$0xf]
      %v288 = vld [vmem:[%s243 + $0x68] sm:$0xf]
      %v289 = vld [vmem:[%s243 + $0x6c] sm:$0xf]
      %v290 = vld [vmem:[%s243 + $0x70] sm:$0xf]
      %v291 = vld [vmem:[%s243 + $0x74] sm:$0xf]
      %v292 = vld [vmem:[%s243 + $0x78] sm:$0xf]
      %v293 = vld [vmem:[%s243 + $0x7c] sm:$0xf]
      %v294 = vld [vmem:[%s243 + $0x80] sm:$0xf]
      %v295 = vld [vmem:[%s243 + $0x84] sm:$0xf]
      %v296 = vld [vmem:[%s243 + $0x88] sm:$0xf]
      %v297 = vld [vmem:[%s243 + $0x8c] sm:$0xf]
      %v298 = vld [vmem:[%s243 + $0x90] sm:$0xf]
      %v299 = vld [vmem:[%s243 + $0x94] sm:$0xf]
      %v300 = vld [vmem:[%s243 + $0x98] sm:$0xf]
      %v301 = vld [vmem:[%s243 + $0x9c] sm:$0xf]
      %v302 = vld [vmem:[%s243 + $0xa0] sm:$0xf]
      %v303 = vld [vmem:[%s243 + $0xa4] sm:$0xf]
      %v304 = vld [vmem:[%s243 + $0xa8] sm:$0xf]
      %v305 = vld [vmem:[%s243 + $0xac] sm:$0xf]
      %v306 = vld [vmem:[%s243 + $0xb0] sm:$0xf]
      %v307 = vld [vmem:[%s243 + $0xb4] sm:$0xf]
      %v308 = vld [vmem:[%s243 + $0xb8] sm:$0xf]
      %v309 = vld [vmem:[%s243 + $0xbc] sm:$0xf]
      %v310 = vld [vmem:[%s243 + $0xc0] sm:$0xf]
      %v311 = vld [vmem:[%s243 + $0xc4] sm:$0xf]
      %v312 = vld [vmem:[%s243 + $0xc8] sm:$0xf]
      %v313 = vld [vmem:[%s243 + $0xcc] sm:$0xf]
      %v314 = vld [vmem:[%s243 + $0xd0] sm:$0xf]
      %v315 = vld [vmem:[%s243 + $0xd4] sm:$0xf]
      %v316 = vld [vmem:[%s243 + $0xd8] sm:$0xf]
      %v317 = vld [vmem:[%s243 + $0xdc] sm:$0xf]
      %v318 = vld [vmem:[%s243 + $0xe0] sm:$0xf]
      %v319 = vld [vmem:[%s243 + $0xe4] sm:$0xf]
      %v320 = vld [vmem:[%s243 + $0xe8] sm:$0xf]
      %v321 = vld [vmem:[%s243 + $0xec] sm:$0xf]
      %v322 = vld [vmem:[%s243 + $0xf0] sm:$0xf]
      %v323 = vld [vmem:[%s243 + $0xf4] sm:$0xf]
      %v324 = vld [vmem:[%s243 + $0xf8] sm:$0xf]
      %v325 = vld [vmem:[%s243 + $0xfc] sm:$0xf]
      %v326 = vld [vmem:[%s2] sm:$0xf]
      %v327 = vld [vmem:[%s2 + $0x4] sm:$0xf]
      %v328 = vld [vmem:[%s2 + $0x8] sm:$0xf]
      %v329 = vld [vmem:[%s2 + $0xc] sm:$0xf]
      %v330 = vld [vmem:[%s2 + $0x10] sm:$0xf]
      %v331 = vld [vmem:[%s2 + $0x14] sm:$0xf]
      %v332 = vld [vmem:[%s2 + $0x18] sm:$0xf]
      %v333 = vld [vmem:[%s2 + $0x1c] sm:$0xf]
      %v334 = vld [vmem:[%s2 + $0x20] sm:$0xf]
      %v335 = vld [vmem:[%s2 + $0x24] sm:$0xf]
      %v336 = vld [vmem:[%s2 + $0x28] sm:$0xf]
      %v337 = vld [vmem:[%s2 + $0x2c] sm:$0xf]
      %v338 = vld [vmem:[%s2 + $0x30] sm:$0xf]
      %v339 = vld [vmem:[%s2 + $0x34] sm:$0xf]
      %v340 = vld [vmem:[%s2 + $0x38] sm:$0xf]
      %v341 = vld [vmem:[%s2 + $0x3c] sm:$0xf]
      %v342 = vld [vmem:[%s249] sm:$0xf]
      %v343 = vld [vmem:[%s249 + $0x4] sm:$0xf]
      %v344 = vld [vmem:[%s249 + $0x8] sm:$0xf]
      %v345 = vld [vmem:[%s249 + $0xc] sm:$0xf]
      %v346 = vld [vmem:[%s249 + $0x10] sm:$0xf]
      %v347 = vld [vmem:[%s249 + $0x14] sm:$0xf]
      %v348 = vld [vmem:[%s249 + $0x18] sm:$0xf]
      %v349 = vld [vmem:[%s249 + $0x1c] sm:$0xf]
      %v350 = vld [vmem:[%s249 + $0x20] sm:$0xf]
      %v351 = vld [vmem:[%s249 + $0x24] sm:$0xf]
      %v352 = vld [vmem:[%s249 + $0x28] sm:$0xf]
      %v353 = vld [vmem:[%s249 + $0x2c] sm:$0xf]
      %v354 = vld [vmem:[%s249 + $0x30] sm:$0xf]
      %v355 = vld [vmem:[%s249 + $0x34] sm:$0xf]
      %v356 = vld [vmem:[%s249 + $0x38] sm:$0xf]
      %v357 = vld [vmem:[%s249 + $0x3c] sm:$0xf]
      %v358 = vld [vmem:[%s249 + $0x40] sm:$0xf]
      %v359 = vld [vmem:[%s249 + $0x44] sm:$0xf]
      %v360 = vld [vmem:[%s249 + $0x48] sm:$0xf]
      %v361 = vld [vmem:[%s249 + $0x4c] sm:$0xf]
      %v362 = vld [vmem:[%s249 + $0x50] sm:$0xf]
      %v363 = vld [vmem:[%s249 + $0x54] sm:$0xf]
      %v364 = vld [vmem:[%s249 + $0x58] sm:$0xf]
      %v365 = vld [vmem:[%s249 + $0x5c] sm:$0xf]
      %v366 = vld [vmem:[%s249 + $0x60] sm:$0xf]
      %v367 = vld [vmem:[%s249 + $0x64] sm:$0xf]
      %v368 = vld [vmem:[%s249 + $0x68] sm:$0xf]
      %v369 = vld [vmem:[%s249 + $0x6c] sm:$0xf]
      %v370 = vld [vmem:[%s249 + $0x70] sm:$0xf]
      %v371 = vld [vmem:[%s249 + $0x74] sm:$0xf]
      %v372 = vld [vmem:[%s249 + $0x78] sm:$0xf]
      %v373 = vld [vmem:[%s249 + $0x7c] sm:$0xf]
      %v374 = vld [vmem:[%s249 + $0x80] sm:$0xf]
      %v375 = vld [vmem:[%s249 + $0x84] sm:$0xf]
      %v376 = vld [vmem:[%s249 + $0x88] sm:$0xf]
      %v377 = vld [vmem:[%s249 + $0x8c] sm:$0xf]
      %v378 = vld [vmem:[%s249 + $0x90] sm:$0xf]
      %v379 = vld [vmem:[%s249 + $0x94] sm:$0xf]
      %v380 = vld [vmem:[%s249 + $0x98] sm:$0xf]
      %v381 = vld [vmem:[%s249 + $0x9c] sm:$0xf]
      %v382 = vld [vmem:[%s249 + $0xa0] sm:$0xf]
      %v383 = vld [vmem:[%s249 + $0xa4] sm:$0xf]
      %v384 = vld [vmem:[%s249 + $0xa8] sm:$0xf]
      %v385 = vld [vmem:[%s249 + $0xac] sm:$0xf]
      %v386 = vld [vmem:[%s249 + $0xb0] sm:$0xf]
      %v387 = vld [vmem:[%s249 + $0xb4] sm:$0xf]
      %v388 = vld [vmem:[%s249 + $0xb8] sm:$0xf]
      %v389 = vld [vmem:[%s249 + $0xbc] sm:$0xf]
      %v390 = vld [vmem:[%s249 + $0xc0] sm:$0xf]
      %v391 = vld [vmem:[%s249 + $0xc4] sm:$0xf]
      %v392 = vld [vmem:[%s249 + $0xc8] sm:$0xf]
      %v393 = vld [vmem:[%s249 + $0xcc] sm:$0xf]
      %v394 = vld [vmem:[%s249 + $0xd0] sm:$0xf]
      %v395 = vld [vmem:[%s249 + $0xd4] sm:$0xf]
      %v396 = vld [vmem:[%s249 + $0xd8] sm:$0xf]
      %v397 = vld [vmem:[%s249 + $0xdc] sm:$0xf]
      %v398 = vld [vmem:[%s249 + $0xe0] sm:$0xf]
      %v399 = vld [vmem:[%s249 + $0xe4] sm:$0xf]
      %v400 = vld [vmem:[%s249 + $0xe8] sm:$0xf]
      %v401 = vld [vmem:[%s249 + $0xec] sm:$0xf]
      %v402 = vld [vmem:[%s249 + $0xf0] sm:$0xf]
      %v403 = vld [vmem:[%s249 + $0xf4] sm:$0xf]
      %v404 = vld [vmem:[%s249 + $0xf8] sm:$0xf]
      %v405 = vld [vmem:[%s249 + $0xfc] sm:$0xf]
      %v406 = vld [vmem:[%s3] sm:$0xf]
      %v407 = vld [vmem:[%s3 + $0x4] sm:$0xf]
      %v408 = vld [vmem:[%s3 + $0x8] sm:$0xf]
      %v409 = vld [vmem:[%s3 + $0xc] sm:$0xf]
      %v410 = vld [vmem:[%s3 + $0x10] sm:$0xf]
      %v411 = vld [vmem:[%s3 + $0x14] sm:$0xf]
      %v412 = vld [vmem:[%s3 + $0x18] sm:$0xf]
      %v413 = vld [vmem:[%s3 + $0x1c] sm:$0xf]
      %v414 = vld [vmem:[%s3 + $0x20] sm:$0xf]
      %v415 = vld [vmem:[%s3 + $0x24] sm:$0xf]
      %v416 = vld [vmem:[%s3 + $0x28] sm:$0xf]
      %v417 = vld [vmem:[%s3 + $0x2c] sm:$0xf]
      %v418 = vld [vmem:[%s3 + $0x30] sm:$0xf]
      %v419 = vld [vmem:[%s3 + $0x34] sm:$0xf]
      %v420 = vld [vmem:[%s3 + $0x38] sm:$0xf]
      %v421 = vld [vmem:[%s3 + $0x3c] sm:$0xf]
      %v486 = vunpack.c.l.b16 %v342
      %v487 = vunpack.c.l.b16 %v343
      %v488 = vunpack.c.l.b16 %v344
      %v489 = vunpack.c.l.b16 %v345
      %v490 = vunpack.c.l.b16 %v346
      %v491 = vunpack.c.l.b16 %v347
      %v492 = vunpack.c.l.b16 %v348
      %v493 = vunpack.c.l.b16 %v349
      %v494 = vunpack.c.l.b16 %v350
      %v495 = vunpack.c.l.b16 %v351
      %v496 = vunpack.c.l.b16 %v352
      %v497 = vunpack.c.l.b16 %v353
      %v498 = vunpack.c.l.b16 %v354
      %v499 = vunpack.c.l.b16 %v355
      %v500 = vunpack.c.l.b16 %v356
      %v501 = vunpack.c.l.b16 %v357
      %v502 = vunpack.c.l.b16 %v358
      %v503 = vunpack.c.l.b16 %v359
      %v504 = vunpack.c.l.b16 %v360
      %v505 = vunpack.c.l.b16 %v361
      %v506 = vunpack.c.l.b16 %v362
      %v507 = vunpack.c.l.b16 %v363
      %v508 = vunpack.c.l.b16 %v364
      %v509 = vunpack.c.l.b16 %v365
      %v510 = vunpack.c.l.b16 %v366
      %v511 = vunpack.c.l.b16 %v367
      %v512 = vunpack.c.l.b16 %v368
      %v513 = vunpack.c.l.b16 %v369
      %v514 = vunpack.c.l.b16 %v370
      %v515 = vunpack.c.l.b16 %v371
      %v516 = vunpack.c.l.b16 %v372
      %v517 = vunpack.c.l.b16 %v373
      %v518 = vunpack.c.l.b16 %v374
      %v519 = vunpack.c.l.b16 %v375
      %v520 = vunpack.c.l.b16 %v376
      %v521 = vunpack.c.l.b16 %v377
      %v522 = vunpack.c.l.b16 %v378
      %v523 = vunpack.c.l.b16 %v379
      %v524 = vunpack.c.l.b16 %v380
      %v525 = vunpack.c.l.b16 %v381
      %v526 = vunpack.c.l.b16 %v382
      %v527 = vunpack.c.l.b16 %v383
      %v528 = vunpack.c.l.b16 %v384
      %v529 = vunpack.c.l.b16 %v385
      %v530 = vunpack.c.l.b16 %v386
      %v531 = vunpack.c.l.b16 %v387
      %v532 = vunpack.c.l.b16 %v388
      %v533 = vunpack.c.l.b16 %v389
      %v534 = vunpack.c.l.b16 %v390
      %v535 = vunpack.c.l.b16 %v391
      %v536 = vunpack.c.l.b16 %v392
      %v537 = vunpack.c.l.b16 %v393
      %v538 = vunpack.c.l.b16 %v394
      %v539 = vunpack.c.l.b16 %v395
      %v540 = vunpack.c.l.b16 %v396
      %v541 = vunpack.c.l.b16 %v397
      %v542 = vunpack.c.l.b16 %v398
      %v543 = vunpack.c.l.b16 %v399
      %v544 = vunpack.c.l.b16 %v400
      %v545 = vunpack.c.l.b16 %v401
      %v546 = vunpack.c.l.b16 %v402
      %v547 = vunpack.c.l.b16 %v403
      %v548 = vunpack.c.l.b16 %v404
      %v549 = vunpack.c.l.b16 %v405
      %v550 = vpack.c.b16 %v487, %v486
      %v551 = vpack.c.b16 %v489, %v488
      %v552 = vpack.c.b16 %v491, %v490
      %v553 = vpack.c.b16 %v493, %v492
      %v554 = vpack.c.b16 %v495, %v494
      %v555 = vpack.c.b16 %v497, %v496
      %v556 = vpack.c.b16 %v499, %v498
      %v557 = vpack.c.b16 %v501, %v500
      %v558 = vpack.c.b16 %v503, %v502
      %v559 = vpack.c.b16 %v505, %v504
      %v560 = vpack.c.b16 %v507, %v506
      %v561 = vpack.c.b16 %v509, %v508
      %v562 = vpack.c.b16 %v511, %v510
      %v563 = vpack.c.b16 %v513, %v512
      %v564 = vpack.c.b16 %v515, %v514
      %v565 = vpack.c.b16 %v517, %v516
      %v566 = vpack.c.b16 %v519, %v518
      %v567 = vpack.c.b16 %v521, %v520
      %v568 = vpack.c.b16 %v523, %v522
      %v569 = vpack.c.b16 %v525, %v524
      %v570 = vpack.c.b16 %v527, %v526
      %v571 = vpack.c.b16 %v529, %v528
      %v572 = vpack.c.b16 %v531, %v530
      %v573 = vpack.c.b16 %v533, %v532
      %v574 = vpack.c.b16 %v535, %v534
      %v575 = vpack.c.b16 %v537, %v536
      %v576 = vpack.c.b16 %v539, %v538
      %v577 = vpack.c.b16 %v541, %v540
      %v578 = vpack.c.b16 %v543, %v542
      %v579 = vpack.c.b16 %v545, %v544
      %v580 = vpack.c.b16 %v547, %v546
      %v581 = vpack.c.b16 %v549, %v548
      %v630 = vunpack.c.l.b16 %v406
      %v631 = vunpack.c.l.b16 %v407
      %v632 = vunpack.c.l.b16 %v408
      %v633 = vunpack.c.l.b16 %v409
      %v634 = vunpack.c.l.b16 %v410
      %v635 = vunpack.c.l.b16 %v411
      %v636 = vunpack.c.l.b16 %v412
      %v637 = vunpack.c.l.b16 %v413
      %v638 = vunpack.c.l.b16 %v414
      %v639 = vunpack.c.l.b16 %v415
      %v640 = vunpack.c.l.b16 %v416
      %v641 = vunpack.c.l.b16 %v417
      %v642 = vunpack.c.l.b16 %v418
      %v643 = vunpack.c.l.b16 %v419
      %v644 = vunpack.c.l.b16 %v420
      %v645 = vunpack.c.l.b16 %v421
      %v646 = vpack.c.b16 %v631, %v630
      %v647 = vpack.c.b16 %v633, %v632
      %v648 = vpack.c.b16 %v635, %v634
      %v649 = vpack.c.b16 %v637, %v636
      %v650 = vpack.c.b16 %v639, %v638
      %v651 = vpack.c.b16 %v641, %v640
      %v652 = vpack.c.b16 %v643, %v642
      %v653 = vpack.c.b16 %v645, %v644
      %662 = vmatprep.subr.bf16.mxu0 0
      %663 = vmatpush1.bf16.msra.mxu0 %v646
      %664 = vmatprep.subr.bf16.mxu0 0
      %665 = vmatpush1.bf16.msra.mxu0 %v647
      %666 = vmatprep.subr.bf16.mxu0 0
      %667 = vmatpush1.bf16.msra.mxu0 %v648
      %668 = vmatprep.subr.bf16.mxu0 0
      %669 = vmatpush1.bf16.msra.mxu0 %v649
      %670 = vmatprep.subr.bf16.mxu0 0
      %671 = vmatpush1.bf16.msra.mxu0 %v650
      %672 = vmatprep.subr.bf16.mxu0 0
      %673 = vmatpush1.bf16.msra.mxu0 %v651
      %674 = vmatprep.subr.bf16.mxu0 0
      %675 = vmatpush1.bf16.msra.mxu0 %v652
      %676 = vmatprep.subr.bf16.mxu0 0
      %677 = vmatpush1.bf16.msra.mxu0 %v653
      %678 = vmatprep.subr.bf16.mxu0 0
      %679 = vmatpush1.bf16.msra.mxu0 0
      %680 = vmatprep.subr.bf16.mxu0 0
      %681 = vmatpush1.bf16.msra.mxu0 0
      %682 = vmatprep.subr.bf16.mxu0 0
      %683 = vmatpush1.bf16.msra.mxu0 0
      %684 = vmatprep.subr.bf16.mxu0 0
      %685 = vmatpush1.bf16.msra.mxu0 0
      %686 = vmatprep.subr.bf16.mxu0 0
      %687 = vmatpush1.bf16.msra.mxu0 0
      %688 = vmatprep.subr.bf16.mxu0 0
      %689 = vmatpush1.bf16.msra.mxu0 0
      %690 = vmatprep.subr.bf16.mxu0 0
      %691 = vmatpush1.bf16.msra.mxu0 0
      %692 = vmatprep.subr.bf16.mxu0 0
      %693 = vmatpush1.bf16.msra.mxu0 0
      %694 = vmatprep.mubr.bf16.mxu0 0
      %695 = vmatmul.mubr.bf16.gmra.mrb[0].mxu0 %v550
      %v696 = vpop.f32.mrb[0].mxu0
      %v697 = vadd.f32 0.0, %v696
      %v698 = vpop.f32.mrb[0].mxu0
      %v699 = vpop.f32.mrb[0].mxu0
      %v700 = vadd.f32 0.0, %v699
      %v701 = vpop.f32.mrb[0].mxu0
      %702 = vmatprep.mubr.bf16.mxu0 0
      %703 = vmatmul.mubr.bf16.gmra.mrb[0].mxu0 %v551
      %v704 = vpop.f32.mrb[0].mxu0
      %v705 = vadd.f32 0.0, %v704
      %v706 = vpop.f32.mrb[0].mxu0
      %v707 = vpop.f32.mrb[0].mxu0
      %v708 = vadd.f32 0.0, %v707
      %v709 = vpop.f32.mrb[0].mxu0
      %710 = vmatprep.mubr.bf16.mxu0 0
      %711 = vmatmul.mubr.bf16.gmra.mrb[0].mxu0 %v552
      %v712 = vpop.f32.mrb[0].mxu0
      %v713 = vadd.f32 0.0, %v712
      %v714 = vpop.f32.mrb[0].mxu0
      %v715 = vpop.f32.mrb[0].mxu0
      %v716 = vadd.f32 0.0, %v715
      %v717 = vpop.f32.mrb[0].mxu0
      %718 = vmatprep.mubr.bf16.mxu0 0
      %719 = vmatmul.mubr.bf16.gmra.mrb[0].mxu0 %v553
      %v720 = vpop.f32.mrb[0].mxu0
      %v721 = vadd.f32 0.0, %v720
      %v722 = vpop.f32.mrb[0].mxu0
      %v723 = vpop.f32.mrb[0].mxu0
      %v724 = vadd.f32 0.0, %v723
      %v725 = vpop.f32.mrb[0].mxu0
      %726 = vmatprep.mubr.bf16.mxu0 0
      %727 = vmatmul.mubr.bf16.gmra.mrb[0].mxu0 %v554
      %v728 = vpop.f32.mrb[0].mxu0
      %v729 = vadd.f32 0.0, %v728
      %v730 = vpop.f32.mrb[0].mxu0
      %v731 = vpop.f32.mrb[0].mxu0
      %v732 = vadd.f32 0.0, %v731
      %v733 = vpop.f32.mrb[0].mxu0
      %734 = vmatprep.mubr.bf16.mxu0 0
      %735 = vmatmul.mubr.bf16.gmra.mrb[0].mxu0 %v555
      %v736 = vpop.f32.mrb[0].mxu0
      %v737 = vadd.f32 0.0, %v736
      %v738 = vpop.f32.mrb[0].mxu0
      %v739 = vpop.f32.mrb[0].mxu0
      %v740 = vadd.f32 0.0, %v739
      %v741 = vpop.f32.mrb[0].mxu0
      %742 = vmatprep.mubr.bf16.mxu0 0
      %743 = vmatmul.mubr.bf16.gmra.mrb[0].mxu0 %v556
      %v744 = vpop.f32.mrb[0].mxu0
      %v745 = vadd.f32 0.0, %v744
      %v746 = vpop.f32.mrb[0].mxu0
      %v747 = vpop.f32.mrb[0].mxu0
      %v748 = vadd.f32 0.0, %v747
      %v749 = vpop.f32.mrb[0].mxu0
      %750 = vmatprep.mubr.bf16.mxu0 0
      %751 = vmatmul.mubr.bf16.gmra.mrb[0].mxu0 %v557
      %v752 = vpop.f32.mrb[0].mxu0
      %v753 = vadd.f32 0.0, %v752
      %v754 = vpop.f32.mrb[0].mxu0
      %v755 = vpop.f32.mrb[0].mxu0
      %v756 = vadd.f32 0.0, %v755
      %v757 = vpop.f32.mrb[0].mxu0
      %758 = vmatprep.mubr.bf16.mxu0 0
      %759 = vmatmul.mubr.bf16.gmra.mrb[0].mxu0 %v558
      %v760 = vpop.f32.mrb[0].mxu0
      %v761 = vadd.f32 0.0, %v760
      %v762 = vpop.f32.mrb[0].mxu0
      %v763 = vpop.f32.mrb[0].mxu0
      %v764 = vadd.f32 0.0, %v763
      %v765 = vpop.f32.mrb[0].mxu0
      %766 = vmatprep.mubr.bf16.mxu0 0
      %767 = vmatmul.mubr.bf16.gmra.mrb[0].mxu0 %v559
      %v768 = vpop.f32.mrb[0].mxu0
      %v769 = vadd.f32 0.0, %v768
      %v770 = vpop.f32.mrb[0].mxu0
      %v771 = vpop.f32.mrb[0].mxu0
      %v772 = vadd.f32 0.0, %v771
      %v773 = vpop.f32.mrb[0].mxu0
      %774 = vmatprep.mubr.bf16.mxu0 0
      %775 = vmatmul.mubr.bf16.gmra.mrb[0].mxu0 %v560
      %v776 = vpop.f32.mrb[0].mxu0
      %v777 = vadd.f32 0.0, %v776
      %v778 = vpop.f32.mrb[0].mxu0
      %v779 = vpop.f32.mrb[0].mxu0
      %v780 = vadd.f32 0.0, %v779
      %v781 = vpop.f32.mrb[0].mxu0
      %782 = vmatprep.mubr.bf16.mxu0 0
      %783 = vmatmul.mubr.bf16.gmra.mrb[0].mxu0 %v561
      %v784 = vpop.f32.mrb[0].mxu0
      %v785 = vadd.f32 0.0, %v784
      %v786 = vpop.f32.mrb[0].mxu0
      %v787 = vpop.f32.mrb[0].mxu0
      %v788 = vadd.f32 0.0, %v787
      %v789 = vpop.f32.mrb[0].mxu0
      %790 = vmatprep.mubr.bf16.mxu0 0
      %791 = vmatmul.mubr.bf16.gmra.mrb[0].mxu0 %v562
      %v792 = vpop.f32.mrb[0].mxu0
      %v793 = vadd.f32 0.0, %v792
      %v794 = vpop.f32.mrb[0].mxu0
      %v795 = vpop.f32.mrb[0].mxu0
      %v796 = vadd.f32 0.0, %v795
      %v797 = vpop.f32.mrb[0].mxu0
      %798 = vmatprep.mubr.bf16.mxu0 0
      %799 = vmatmul.mubr.bf16.gmra.mrb[0].mxu0 %v563
      %v800 = vpop.f32.mrb[0].mxu0
      %v801 = vadd.f32 0.0, %v800
      %v802 = vpop.f32.mrb[0].mxu0
      %v803 = vpop.f32.mrb[0].mxu0
      %v804 = vadd.f32 0.0, %v803
      %v805 = vpop.f32.mrb[0].mxu0
      %806 = vmatprep.mubr.bf16.mxu0 0
      %807 = vmatmul.mubr.bf16.gmra.mrb[0].mxu0 %v564
      %v808 = vpop.f32.mrb[0].mxu0
      %v809 = vadd.f32 0.0, %v808
      %v810 = vpop.f32.mrb[0].mxu0
      %v811 = vpop.f32.mrb[0].mxu0
      %v812 = vadd.f32 0.0, %v811
      %v813 = vpop.f32.mrb[0].mxu0
      %814 = vmatprep.mubr.bf16.mxu0 0
      %815 = vmatmul.mubr.bf16.gmra.mrb[0].mxu0 %v565
      %v816 = vpop.f32.mrb[0].mxu0
      %v817 = vadd.f32 0.0, %v816
      %v818 = vpop.f32.mrb[0].mxu0
      %v819 = vpop.f32.mrb[0].mxu0
      %v820 = vadd.f32 0.0, %v819
      %v821 = vpop.f32.mrb[0].mxu0
      %822 = vmatprep.mubr.bf16.mxu0 0
      %823 = vmatmul.mubr.bf16.gmra.mrb[0].mxu0 %v566
      %v824 = vpop.f32.mrb[0].mxu0
      %v825 = vadd.f32 0.0, %v824
      %v826 = vpop.f32.mrb[0].mxu0
      %v827 = vpop.f32.mrb[0].mxu0
      %v828 = vadd.f32 0.0, %v827
      %v829 = vpop.f32.mrb[0].mxu0
      %830 = vmatprep.mubr.bf16.mxu0 0
      %831 = vmatmul.mubr.bf16.gmra.mrb[0].mxu0 %v567
      %v832 = vpop.f32.mrb[0].mxu0
      %v833 = vadd.f32 0.0, %v832
      %v834 = vpop.f32.mrb[0].mxu0
      %v835 = vpop.f32.mrb[0].mxu0
      %v836 = vadd.f32 0.0, %v835
      %v837 = vpop.f32.mrb[0].mxu0
      %838 = vmatprep.mubr.bf16.mxu0 0
      %839 = vmatmul.mubr.bf16.gmra.mrb[0].mxu0 %v568
      %v840 = vpop.f32.mrb[0].mxu0
      %v841 = vadd.f32 0.0, %v840
      %v842 = vpop.f32.mrb[0].mxu0
      %v843 = vpop.f32.mrb[0].mxu0
      %v844 = vadd.f32 0.0, %v843
      %v845 = vpop.f32.mrb[0].mxu0
      %846 = vmatprep.mubr.bf16.mxu0 0
      %847 = vmatmul.mubr.bf16.gmra.mrb[0].mxu0 %v569
      %v848 = vpop.f32.mrb[0].mxu0
      %v849 = vadd.f32 0.0, %v848
      %v850 = vpop.f32.mrb[0].mxu0
      %v851 = vpop.f32.mrb[0].mxu0
      %v852 = vadd.f32 0.0, %v851
      %v853 = vpop.f32.mrb[0].mxu0
      %854 = vmatprep.mubr.bf16.mxu0 0
      %855 = vmatmul.mubr.bf16.gmra.mrb[0].mxu0 %v570
      %v856 = vpop.f32.mrb[0].mxu0
      %v857 = vadd.f32 0.0, %v856
      %v858 = vpop.f32.mrb[0].mxu0
      %v859 = vpop.f32.mrb[0].mxu0
      %v860 = vadd.f32 0.0, %v859
      %v861 = vpop.f32.mrb[0].mxu0
      %862 = vmatprep.mubr.bf16.mxu0 0
      %863 = vmatmul.mubr.bf16.gmra.mrb[0].mxu0 %v571
      %v864 = vpop.f32.mrb[0].mxu0
      %v865 = vadd.f32 0.0, %v864
      %v866 = vpop.f32.mrb[0].mxu0
      %v867 = vpop.f32.mrb[0].mxu0
      %v868 = vadd.f32 0.0, %v867
      %v869 = vpop.f32.mrb[0].mxu0
      %870 = vmatprep.mubr.bf16.mxu0 0
      %871 = vmatmul.mubr.bf16.gmra.mrb[0].mxu0 %v572
      %v872 = vpop.f32.mrb[0].mxu0
      %v873 = vadd.f32 0.0, %v872
      %v874 = vpop.f32.mrb[0].mxu0
      %v875 = vpop.f32.mrb[0].mxu0
      %v876 = vadd.f32 0.0, %v875
      %v877 = vpop.f32.mrb[0].mxu0
      %878 = vmatprep.mubr.bf16.mxu0 0
      %879 = vmatmul.mubr.bf16.gmra.mrb[0].mxu0 %v573
      %v880 = vpop.f32.mrb[0].mxu0
      %v881 = vadd.f32 0.0, %v880
      %v882 = vpop.f32.mrb[0].mxu0
      %v883 = vpop.f32.mrb[0].mxu0
      %v884 = vadd.f32 0.0, %v883
      %v885 = vpop.f32.mrb[0].mxu0
      %886 = vmatprep.mubr.bf16.mxu0 0
      %887 = vmatmul.mubr.bf16.gmra.mrb[0].mxu0 %v574
      %v888 = vpop.f32.mrb[0].mxu0
      %v889 = vadd.f32 0.0, %v888
      %v890 = vpop.f32.mrb[0].mxu0
      %v891 = vpop.f32.mrb[0].mxu0
      %v892 = vadd.f32 0.0, %v891
      %v893 = vpop.f32.mrb[0].mxu0
      %894 = vmatprep.mubr.bf16.mxu0 0
      %895 = vmatmul.mubr.bf16.gmra.mrb[0].mxu0 %v575
      %v896 = vpop.f32.mrb[0].mxu0
      %v897 = vadd.f32 0.0, %v896
      %v898 = vpop.f32.mrb[0].mxu0
      %v899 = vpop.f32.mrb[0].mxu0
      %v900 = vadd.f32 0.0, %v899
      %v901 = vpop.f32.mrb[0].mxu0
      %902 = vmatprep.mubr.bf16.mxu0 0
      %903 = vmatmul.mubr.bf16.gmra.mrb[0].mxu0 %v576
      %v904 = vpop.f32.mrb[0].mxu0
      %v905 = vadd.f32 0.0, %v904
      %v906 = vpop.f32.mrb[0].mxu0
      %v907 = vpop.f32.mrb[0].mxu0
      %v908 = vadd.f32 0.0, %v907
      %v909 = vpop.f32.mrb[0].mxu0
      %910 = vmatprep.mubr.bf16.mxu0 0
      %911 = vmatmul.mubr.bf16.gmra.mrb[0].mxu0 %v577
      %v912 = vpop.f32.mrb[0].mxu0
      %v913 = vadd.f32 0.0, %v912
      %v914 = vpop.f32.mrb[0].mxu0
      %v915 = vpop.f32.mrb[0].mxu0
      %v916 = vadd.f32 0.0, %v915
      %v917 = vpop.f32.mrb[0].mxu0
      %918 = vmatprep.mubr.bf16.mxu0 0
      %919 = vmatmul.mubr.bf16.gmra.mrb[0].mxu0 %v578
      %v920 = vpop.f32.mrb[0].mxu0
      %v921 = vadd.f32 0.0, %v920
      %v922 = vpop.f32.mrb[0].mxu0
      %v923 = vpop.f32.mrb[0].mxu0
      %v924 = vadd.f32 0.0, %v923
      %v925 = vpop.f32.mrb[0].mxu0
      %926 = vmatprep.mubr.bf16.mxu0 0
      %927 = vmatmul.mubr.bf16.gmra.mrb[0].mxu0 %v579
      %v928 = vpop.f32.mrb[0].mxu0
      %v929 = vadd.f32 0.0, %v928
      %v930 = vpop.f32.mrb[0].mxu0
      %v931 = vpop.f32.mrb[0].mxu0
      %v932 = vadd.f32 0.0, %v931
      %v933 = vpop.f32.mrb[0].mxu0
      %934 = vmatprep.mubr.bf16.mxu0 0
      %935 = vmatmul.mubr.bf16.gmra.mrb[0].mxu0 %v580
      %v936 = vpop.f32.mrb[0].mxu0
      %v937 = vadd.f32 0.0, %v936
      %v938 = vpop.f32.mrb[0].mxu0
      %v939 = vpop.f32.mrb[0].mxu0
      %v940 = vadd.f32 0.0, %v939
      %v941 = vpop.f32.mrb[0].mxu0
      %942 = vmatprep.mubr.bf16.mxu0 0
      %943 = vmatmul.mubr.bf16.gmra.mrb[0].mxu0 %v581
      %v944 = vpop.f32.mrb[0].mxu0
      %v945 = vadd.f32 0.0, %v944
      %v946 = vpop.f32.mrb[0].mxu0
      %v947 = vpop.f32.mrb[0].mxu0
      %v948 = vadd.f32 0.0, %v947
      %v949 = vpop.f32.mrb[0].mxu0
      %950 = vdwg.mxu0
      %v1015 = vunpack.c.l.b16 %v262
      %v1016 = vunpack.c.l.b16 %v263
      %v1017 = vunpack.c.l.b16 %v264
      %v1018 = vunpack.c.l.b16 %v265
      %v1019 = vunpack.c.l.b16 %v266
      %v1020 = vunpack.c.l.b16 %v267
      %v1021 = vunpack.c.l.b16 %v268
      %v1022 = vunpack.c.l.b16 %v269
      %v1023 = vunpack.c.l.b16 %v270
      %v1024 = vunpack.c.l.b16 %v271
      %v1025 = vunpack.c.l.b16 %v272
      %v1026 = vunpack.c.l.b16 %v273
      %v1027 = vunpack.c.l.b16 %v274
      %v1028 = vunpack.c.l.b16 %v275
      %v1029 = vunpack.c.l.b16 %v276
      %v1030 = vunpack.c.l.b16 %v277
      %v1031 = vunpack.c.l.b16 %v278
      %v1032 = vunpack.c.l.b16 %v279
      %v1033 = vunpack.c.l.b16 %v280
      %v1034 = vunpack.c.l.b16 %v281
      %v1035 = vunpack.c.l.b16 %v282
      %v1036 = vunpack.c.l.b16 %v283
      %v1037 = vunpack.c.l.b16 %v284
      %v1038 = vunpack.c.l.b16 %v285
      %v1039 = vunpack.c.l.b16 %v286
      %v1040 = vunpack.c.l.b16 %v287
      %v1041 = vunpack.c.l.b16 %v288
      %v1042 = vunpack.c.l.b16 %v289
      %v1043 = vunpack.c.l.b16 %v290
      %v1044 = vunpack.c.l.b16 %v291
      %v1045 = vunpack.c.l.b16 %v292
      %v1046 = vunpack.c.l.b16 %v293
      %v1047 = vunpack.c.l.b16 %v294
      %v1048 = vunpack.c.l.b16 %v295
      %v1049 = vunpack.c.l.b16 %v296
      %v1050 = vunpack.c.l.b16 %v297
      %v1051 = vunpack.c.l.b16 %v298
      %v1052 = vunpack.c.l.b16 %v299
      %v1053 = vunpack.c.l.b16 %v300
      %v1054 = vunpack.c.l.b16 %v301
      %v1055 = vunpack.c.l.b16 %v302
      %v1056 = vunpack.c.l.b16 %v303
      %v1057 = vunpack.c.l.b16 %v304
      %v1058 = vunpack.c.l.b16 %v305
      %v1059 = vunpack.c.l.b16 %v306
      %v1060 = vunpack.c.l.b16 %v307
      %v1061 = vunpack.c.l.b16 %v308
      %v1062 = vunpack.c.l.b16 %v309
      %v1063 = vunpack.c.l.b16 %v310
      %v1064 = vunpack.c.l.b16 %v311
      %v1065 = vunpack.c.l.b16 %v312
      %v1066 = vunpack.c.l.b16 %v313
      %v1067 = vunpack.c.l.b16 %v314
      %v1068 = vunpack.c.l.b16 %v315
      %v1069 = vunpack.c.l.b16 %v316
      %v1070 = vunpack.c.l.b16 %v317
      %v1071 = vunpack.c.l.b16 %v318
      %v1072 = vunpack.c.l.b16 %v319
      %v1073 = vunpack.c.l.b16 %v320
      %v1074 = vunpack.c.l.b16 %v321
      %v1075 = vunpack.c.l.b16 %v322
      %v1076 = vunpack.c.l.b16 %v323
      %v1077 = vunpack.c.l.b16 %v324
      %v1078 = vunpack.c.l.b16 %v325
      %v1079 = vpack.c.b16 %v1016, %v1015
      %v1080 = vpack.c.b16 %v1018, %v1017
      %v1081 = vpack.c.b16 %v1020, %v1019
      %v1082 = vpack.c.b16 %v1022, %v1021
      %v1083 = vpack.c.b16 %v1024, %v1023
      %v1084 = vpack.c.b16 %v1026, %v1025
      %v1085 = vpack.c.b16 %v1028, %v1027
      %v1086 = vpack.c.b16 %v1030, %v1029
      %v1087 = vpack.c.b16 %v1032, %v1031
      %v1088 = vpack.c.b16 %v1034, %v1033
      %v1089 = vpack.c.b16 %v1036, %v1035
      %v1090 = vpack.c.b16 %v1038, %v1037
      %v1091 = vpack.c.b16 %v1040, %v1039
      %v1092 = vpack.c.b16 %v1042, %v1041
      %v1093 = vpack.c.b16 %v1044, %v1043
      %v1094 = vpack.c.b16 %v1046, %v1045
      %v1095 = vpack.c.b16 %v1048, %v1047
      %v1096 = vpack.c.b16 %v1050, %v1049
      %v1097 = vpack.c.b16 %v1052, %v1051
      %v1098 = vpack.c.b16 %v1054, %v1053
      %v1099 = vpack.c.b16 %v1056, %v1055
      %v1100 = vpack.c.b16 %v1058, %v1057
      %v1101 = vpack.c.b16 %v1060, %v1059
      %v1102 = vpack.c.b16 %v1062, %v1061
      %v1103 = vpack.c.b16 %v1064, %v1063
      %v1104 = vpack.c.b16 %v1066, %v1065
      %v1105 = vpack.c.b16 %v1068, %v1067
      %v1106 = vpack.c.b16 %v1070, %v1069
      %v1107 = vpack.c.b16 %v1072, %v1071
      %v1108 = vpack.c.b16 %v1074, %v1073
      %v1109 = vpack.c.b16 %v1076, %v1075
      %v1110 = vpack.c.b16 %v1078, %v1077
      %v1159 = vunpack.c.l.b16 %v326
      %v1160 = vunpack.c.l.b16 %v327
      %v1161 = vunpack.c.l.b16 %v328
      %v1162 = vunpack.c.l.b16 %v329
      %v1163 = vunpack.c.l.b16 %v330
      %v1164 = vunpack.c.l.b16 %v331
      %v1165 = vunpack.c.l.b16 %v332
      %v1166 = vunpack.c.l.b16 %v333
      %v1167 = vunpack.c.l.b16 %v334
      %v1168 = vunpack.c.l.b16 %v335
      %v1169 = vunpack.c.l.b16 %v336
      %v1170 = vunpack.c.l.b16 %v337
      %v1171 = vunpack.c.l.b16 %v338
      %v1172 = vunpack.c.l.b16 %v339
      %v1173 = vunpack.c.l.b16 %v340
      %v1174 = vunpack.c.l.b16 %v341
      %v1175 = vpack.c.b16 %v1160, %v1159
      %v1176 = vpack.c.b16 %v1162, %v1161
      %v1177 = vpack.c.b16 %v1164, %v1163
      %v1178 = vpack.c.b16 %v1166, %v1165
      %v1179 = vpack.c.b16 %v1168, %v1167
      %v1180 = vpack.c.b16 %v1170, %v1169
      %v1181 = vpack.c.b16 %v1172, %v1171
      %v1182 = vpack.c.b16 %v1174, %v1173
      %1191 = vmatprep.subr.bf16.mxu0 0
      %1192 = vmatpush1.bf16.msra.mxu0 %v1175
      %1193 = vmatprep.subr.bf16.mxu0 0
      %1194 = vmatpush1.bf16.msra.mxu0 %v1176
      %1195 = vmatprep.subr.bf16.mxu0 0
      %1196 = vmatpush1.bf16.msra.mxu0 %v1177
      %1197 = vmatprep.subr.bf16.mxu0 0
      %1198 = vmatpush1.bf16.msra.mxu0 %v1178
      %1199 = vmatprep.subr.bf16.mxu0 0
      %1200 = vmatpush1.bf16.msra.mxu0 %v1179
      %1201 = vmatprep.subr.bf16.mxu0 0
      %1202 = vmatpush1.bf16.msra.mxu0 %v1180
      %1203 = vmatprep.subr.bf16.mxu0 0
      %1204 = vmatpush1.bf16.msra.mxu0 %v1181
      %1205 = vmatprep.subr.bf16.mxu0 0
      %1206 = vmatpush1.bf16.msra.mxu0 %v1182
      %1207 = vmatprep.subr.bf16.mxu0 0
      %1208 = vmatpush1.bf16.msra.mxu0 0
      %1209 = vmatprep.subr.bf16.mxu0 0
      %1210 = vmatpush1.bf16.msra.mxu0 0
      %1211 = vmatprep.subr.bf16.mxu0 0
      %1212 = vmatpush1.bf16.msra.mxu0 0
      %1213 = vmatprep.subr.bf16.mxu0 0
      %1214 = vmatpush1.bf16.msra.mxu0 0
      %1215 = vmatprep.subr.bf16.mxu0 0
      %1216 = vmatpush1.bf16.msra.mxu0 0
      %1217 = vmatprep.subr.bf16.mxu0 0
      %1218 = vmatpush1.bf16.msra.mxu0 0
      %1219 = vmatprep.subr.bf16.mxu0 0
      %1220 = vmatpush1.bf16.msra.mxu0 0
      %1221 = vmatprep.subr.bf16.mxu0 0
      %1222 = vmatpush1.bf16.msra.mxu0 0
      %1223 = vmatprep.mubr.bf16.mxu0 0
      %1224 = vmatmul.mubr.bf16.gmra.mrb[0].mxu0 %v1079
      %v1225 = vpop.f32.mrb[0].mxu0
      %v1226 = vadd.f32 %v697, %v1225
      %v1227 = vpop.f32.mrb[0].mxu0
      %v1228 = vpop.f32.mrb[0].mxu0
      %v1229 = vadd.f32 %v700, %v1228
      %v1230 = vpop.f32.mrb[0].mxu0
      %1231 = vmatprep.mubr.bf16.mxu0 0
      %1232 = vmatmul.mubr.bf16.gmra.mrb[0].mxu0 %v1080
      %v1233 = vpop.f32.mrb[0].mxu0
      %v1234 = vadd.f32 %v705, %v1233
      %v1235 = vpop.f32.mrb[0].mxu0
      %v1236 = vpop.f32.mrb[0].mxu0
      %v1237 = vadd.f32 %v708, %v1236
      %v1238 = vpop.f32.mrb[0].mxu0
      %1239 = vmatprep.mubr.bf16.mxu0 0
      %1240 = vmatmul.mubr.bf16.gmra.mrb[0].mxu0 %v1081
      %v1241 = vpop.f32.mrb[0].mxu0
      %v1242 = vadd.f32 %v713, %v1241
      %v1243 = vpop.f32.mrb[0].mxu0
      %v1244 = vpop.f32.mrb[0].mxu0
      %v1245 = vadd.f32 %v716, %v1244
      %v1246 = vpop.f32.mrb[0].mxu0
      %1247 = vmatprep.mubr.bf16.mxu0 0
      %1248 = vmatmul.mubr.bf16.gmra.mrb[0].mxu0 %v1082
      %v1249 = vpop.f32.mrb[0].mxu0
      %v1250 = vadd.f32 %v721, %v1249
      %v1251 = vpop.f32.mrb[0].mxu0
      %v1252 = vpop.f32.mrb[0].mxu0
      %v1253 = vadd.f32 %v724, %v1252
      %v1254 = vpop.f32.mrb[0].mxu0
      %1255 = vmatprep.mubr.bf16.mxu0 0
      %1256 = vmatmul.mubr.bf16.gmra.mrb[0].mxu0 %v1083
      %v1257 = vpop.f32.mrb[0].mxu0
      %v1258 = vadd.f32 %v729, %v1257
      %v1259 = vpop.f32.mrb[0].mxu0
      %v1260 = vpop.f32.mrb[0].mxu0
      %v1261 = vadd.f32 %v732, %v1260
      %v1262 = vpop.f32.mrb[0].mxu0
      %1263 = vmatprep.mubr.bf16.mxu0 0
      %1264 = vmatmul.mubr.bf16.gmra.mrb[0].mxu0 %v1084
      %v1265 = vpop.f32.mrb[0].mxu0
      %v1266 = vadd.f32 %v737, %v1265
      %v1267 = vpop.f32.mrb[0].mxu0
      %v1268 = vpop.f32.mrb[0].mxu0
      %v1269 = vadd.f32 %v740, %v1268
      %v1270 = vpop.f32.mrb[0].mxu0
      %1271 = vmatprep.mubr.bf16.mxu0 0
      %1272 = vmatmul.mubr.bf16.gmra.mrb[0].mxu0 %v1085
      %v1273 = vpop.f32.mrb[0].mxu0
      %v1274 = vadd.f32 %v745, %v1273
      %v1275 = vpop.f32.mrb[0].mxu0
      %v1276 = vpop.f32.mrb[0].mxu0
      %v1277 = vadd.f32 %v748, %v1276
      %v1278 = vpop.f32.mrb[0].mxu0
      %1279 = vmatprep.mubr.bf16.mxu0 0
      %1280 = vmatmul.mubr.bf16.gmra.mrb[0].mxu0 %v1086
      %v1281 = vpop.f32.mrb[0].mxu0
      %v1282 = vadd.f32 %v753, %v1281
      %v1283 = vpop.f32.mrb[0].mxu0
      %v1284 = vpop.f32.mrb[0].mxu0
      %v1285 = vadd.f32 %v756, %v1284
      %v1286 = vpop.f32.mrb[0].mxu0
      %1287 = vmatprep.mubr.bf16.mxu0 0
      %1288 = vmatmul.mubr.bf16.gmra.mrb[0].mxu0 %v1087
      %v1289 = vpop.f32.mrb[0].mxu0
      %v1290 = vadd.f32 %v761, %v1289
      %v1291 = vpop.f32.mrb[0].mxu0
      %v1292 = vpop.f32.mrb[0].mxu0
      %v1293 = vadd.f32 %v764, %v1292
      %v1294 = vpop.f32.mrb[0].mxu0
      %1295 = vmatprep.mubr.bf16.mxu0 0
      %1296 = vmatmul.mubr.bf16.gmra.mrb[0].mxu0 %v1088
      %v1297 = vpop.f32.mrb[0].mxu0
      %v1298 = vadd.f32 %v769, %v1297
      %v1299 = vpop.f32.mrb[0].mxu0
      %v1300 = vpop.f32.mrb[0].mxu0
      %v1301 = vadd.f32 %v772, %v1300
      %v1302 = vpop.f32.mrb[0].mxu0
      %1303 = vmatprep.mubr.bf16.mxu0 0
      %1304 = vmatmul.mubr.bf16.gmra.mrb[0].mxu0 %v1089
      %v1305 = vpop.f32.mrb[0].mxu0
      %v1306 = vadd.f32 %v777, %v1305
      %v1307 = vpop.f32.mrb[0].mxu0
      %v1308 = vpop.f32.mrb[0].mxu0
      %v1309 = vadd.f32 %v780, %v1308
      %v1310 = vpop.f32.mrb[0].mxu0
      %1311 = vmatprep.mubr.bf16.mxu0 0
      %1312 = vmatmul.mubr.bf16.gmra.mrb[0].mxu0 %v1090
      %v1313 = vpop.f32.mrb[0].mxu0
      %v1314 = vadd.f32 %v785, %v1313
      %v1315 = vpop.f32.mrb[0].mxu0
      %v1316 = vpop.f32.mrb[0].mxu0
      %v1317 = vadd.f32 %v788, %v1316
      %v1318 = vpop.f32.mrb[0].mxu0
      %1319 = vmatprep.mubr.bf16.mxu0 0
      %1320 = vmatmul.mubr.bf16.gmra.mrb[0].mxu0 %v1091
      %v1321 = vpop.f32.mrb[0].mxu0
      %v1322 = vadd.f32 %v793, %v1321
      %v1323 = vpop.f32.mrb[0].mxu0
      %v1324 = vpop.f32.mrb[0].mxu0
      %v1325 = vadd.f32 %v796, %v1324
      %v1326 = vpop.f32.mrb[0].mxu0
      %1327 = vmatprep.mubr.bf16.mxu0 0
      %1328 = vmatmul.mubr.bf16.gmra.mrb[0].mxu0 %v1092
      %v1329 = vpop.f32.mrb[0].mxu0
      %v1330 = vadd.f32 %v801, %v1329
      %v1331 = vpop.f32.mrb[0].mxu0
      %v1332 = vpop.f32.mrb[0].mxu0
      %v1333 = vadd.f32 %v804, %v1332
      %v1334 = vpop.f32.mrb[0].mxu0
      %1335 = vmatprep.mubr.bf16.mxu0 0
      %1336 = vmatmul.mubr.bf16.gmra.mrb[0].mxu0 %v1093
      %v1337 = vpop.f32.mrb[0].mxu0
      %v1338 = vadd.f32 %v809, %v1337
      %v1339 = vpop.f32.mrb[0].mxu0
      %v1340 = vpop.f32.mrb[0].mxu0
      %v1341 = vadd.f32 %v812, %v1340
      %v1342 = vpop.f32.mrb[0].mxu0
      %1343 = vmatprep.mubr.bf16.mxu0 0
      %1344 = vmatmul.mubr.bf16.gmra.mrb[0].mxu0 %v1094
      %v1345 = vpop.f32.mrb[0].mxu0
      %v1346 = vadd.f32 %v817, %v1345
      %v1347 = vpop.f32.mrb[0].mxu0
      %v1348 = vpop.f32.mrb[0].mxu0
      %v1349 = vadd.f32 %v820, %v1348
      %v1350 = vpop.f32.mrb[0].mxu0
      %1351 = vmatprep.mubr.bf16.mxu0 0
      %1352 = vmatmul.mubr.bf16.gmra.mrb[0].mxu0 %v1095
      %v1353 = vpop.f32.mrb[0].mxu0
      %v1354 = vadd.f32 %v825, %v1353
      %v1355 = vpop.f32.mrb[0].mxu0
      %v1356 = vpop.f32.mrb[0].mxu0
      %v1357 = vadd.f32 %v828, %v1356
      %v1358 = vpop.f32.mrb[0].mxu0
      %1359 = vmatprep.mubr.bf16.mxu0 0
      %1360 = vmatmul.mubr.bf16.gmra.mrb[0].mxu0 %v1096
      %v1361 = vpop.f32.mrb[0].mxu0
      %v1362 = vadd.f32 %v833, %v1361
      %v1363 = vpop.f32.mrb[0].mxu0
      %v1364 = vpop.f32.mrb[0].mxu0
      %v1365 = vadd.f32 %v836, %v1364
      %v1366 = vpop.f32.mrb[0].mxu0
      %1367 = vmatprep.mubr.bf16.mxu0 0
      %1368 = vmatmul.mubr.bf16.gmra.mrb[0].mxu0 %v1097
      %v1369 = vpop.f32.mrb[0].mxu0
      %v1370 = vadd.f32 %v841, %v1369
      %v1371 = vpop.f32.mrb[0].mxu0
      %v1372 = vpop.f32.mrb[0].mxu0
      %v1373 = vadd.f32 %v844, %v1372
      %v1374 = vpop.f32.mrb[0].mxu0
      %1375 = vmatprep.mubr.bf16.mxu0 0
      %1376 = vmatmul.mubr.bf16.gmra.mrb[0].mxu0 %v1098
      %v1377 = vpop.f32.mrb[0].mxu0
      %v1378 = vadd.f32 %v849, %v1377
      %v1379 = vpop.f32.mrb[0].mxu0
      %v1380 = vpop.f32.mrb[0].mxu0
      %v1381 = vadd.f32 %v852, %v1380
      %v1382 = vpop.f32.mrb[0].mxu0
      %1383 = vmatprep.mubr.bf16.mxu0 0
      %1384 = vmatmul.mubr.bf16.gmra.mrb[0].mxu0 %v1099
      %v1385 = vpop.f32.mrb[0].mxu0
      %v1386 = vadd.f32 %v857, %v1385
      %v1387 = vpop.f32.mrb[0].mxu0
      %v1388 = vpop.f32.mrb[0].mxu0
      %v1389 = vadd.f32 %v860, %v1388
      %v1390 = vpop.f32.mrb[0].mxu0
      %1391 = vmatprep.mubr.bf16.mxu0 0
      %1392 = vmatmul.mubr.bf16.gmra.mrb[0].mxu0 %v1100
      %v1393 = vpop.f32.mrb[0].mxu0
      %v1394 = vadd.f32 %v865, %v1393
      %v1395 = vpop.f32.mrb[0].mxu0
      %v1396 = vpop.f32.mrb[0].mxu0
      %v1397 = vadd.f32 %v868, %v1396
      %v1398 = vpop.f32.mrb[0].mxu0
      %1399 = vmatprep.mubr.bf16.mxu0 0
      %1400 = vmatmul.mubr.bf16.gmra.mrb[0].mxu0 %v1101
      %v1401 = vpop.f32.mrb[0].mxu0
      %v1402 = vadd.f32 %v873, %v1401
      %v1403 = vpop.f32.mrb[0].mxu0
      %v1404 = vpop.f32.mrb[0].mxu0
      %v1405 = vadd.f32 %v876, %v1404
      %v1406 = vpop.f32.mrb[0].mxu0
      %1407 = vmatprep.mubr.bf16.mxu0 0
      %1408 = vmatmul.mubr.bf16.gmra.mrb[0].mxu0 %v1102
      %v1409 = vpop.f32.mrb[0].mxu0
      %v1410 = vadd.f32 %v881, %v1409
      %v1411 = vpop.f32.mrb[0].mxu0
      %v1412 = vpop.f32.mrb[0].mxu0
      %v1413 = vadd.f32 %v884, %v1412
      %v1414 = vpop.f32.mrb[0].mxu0
      %1415 = vmatprep.mubr.bf16.mxu0 0
      %1416 = vmatmul.mubr.bf16.gmra.mrb[0].mxu0 %v1103
      %v1417 = vpop.f32.mrb[0].mxu0
      %v1418 = vadd.f32 %v889, %v1417
      %v1419 = vpop.f32.mrb[0].mxu0
      %v1420 = vpop.f32.mrb[0].mxu0
      %v1421 = vadd.f32 %v892, %v1420
      %v1422 = vpop.f32.mrb[0].mxu0
      %1423 = vmatprep.mubr.bf16.mxu0 0
      %1424 = vmatmul.mubr.bf16.gmra.mrb[0].mxu0 %v1104
      %v1425 = vpop.f32.mrb[0].mxu0
      %v1426 = vadd.f32 %v897, %v1425
      %v1427 = vpop.f32.mrb[0].mxu0
      %v1428 = vpop.f32.mrb[0].mxu0
      %v1429 = vadd.f32 %v900, %v1428
      %v1430 = vpop.f32.mrb[0].mxu0
      %1431 = vmatprep.mubr.bf16.mxu0 0
      %1432 = vmatmul.mubr.bf16.gmra.mrb[0].mxu0 %v1105
      %v1433 = vpop.f32.mrb[0].mxu0
      %v1434 = vadd.f32 %v905, %v1433
      %v1435 = vpop.f32.mrb[0].mxu0
      %v1436 = vpop.f32.mrb[0].mxu0
      %v1437 = vadd.f32 %v908, %v1436
      %v1438 = vpop.f32.mrb[0].mxu0
      %1439 = vmatprep.mubr.bf16.mxu0 0
      %1440 = vmatmul.mubr.bf16.gmra.mrb[0].mxu0 %v1106
      %v1441 = vpop.f32.mrb[0].mxu0
      %v1442 = vadd.f32 %v913, %v1441
      %v1443 = vpop.f32.mrb[0].mxu0
      %v1444 = vpop.f32.mrb[0].mxu0
      %v1445 = vadd.f32 %v916, %v1444
      %v1446 = vpop.f32.mrb[0].mxu0
      %1447 = vmatprep.mubr.bf16.mxu0 0
      %1448 = vmatmul.mubr.bf16.gmra.mrb[0].mxu0 %v1107
      %v1449 = vpop.f32.mrb[0].mxu0
      %v1450 = vadd.f32 %v921, %v1449
      %v1451 = vpop.f32.mrb[0].mxu0
      %v1452 = vpop.f32.mrb[0].mxu0
      %v1453 = vadd.f32 %v924, %v1452
      %v1454 = vpop.f32.mrb[0].mxu0
      %1455 = vmatprep.mubr.bf16.mxu0 0
      %1456 = vmatmul.mubr.bf16.gmra.mrb[0].mxu0 %v1108
      %v1457 = vpop.f32.mrb[0].mxu0
      %v1458 = vadd.f32 %v929, %v1457
      %v1459 = vpop.f32.mrb[0].mxu0
      %v1460 = vpop.f32.mrb[0].mxu0
      %v1461 = vadd.f32 %v932, %v1460
      %v1462 = vpop.f32.mrb[0].mxu0
      %1463 = vmatprep.mubr.bf16.mxu0 0
      %1464 = vmatmul.mubr.bf16.gmra.mrb[0].mxu0 %v1109
      %v1465 = vpop.f32.mrb[0].mxu0
      %v1466 = vadd.f32 %v937, %v1465
      %v1467 = vpop.f32.mrb[0].mxu0
      %v1468 = vpop.f32.mrb[0].mxu0
      %v1469 = vadd.f32 %v940, %v1468
      %v1470 = vpop.f32.mrb[0].mxu0
      %1471 = vmatprep.mubr.bf16.mxu0 0
      %1472 = vmatmul.mubr.bf16.gmra.mrb[0].mxu0 %v1110
      %v1473 = vpop.f32.mrb[0].mxu0
      %v1474 = vadd.f32 %v945, %v1473
      %v1475 = vpop.f32.mrb[0].mxu0
      %v1476 = vpop.f32.mrb[0].mxu0
      %v1477 = vadd.f32 %v948, %v1476
      %v1478 = vpop.f32.mrb[0].mxu0
      %1479 = vdwg.mxu0
      %v1480 = vpack.c.bf16 %v1229, %v1226
      %v1481 = vpack.c.bf16 %v1237, %v1234
      %v1482 = vpack.c.bf16 %v1245, %v1242
      %v1483 = vpack.c.bf16 %v1253, %v1250
      %v1484 = vpack.c.bf16 %v1261, %v1258
      %v1485 = vpack.c.bf16 %v1269, %v1266
      %v1486 = vpack.c.bf16 %v1277, %v1274
      %v1487 = vpack.c.bf16 %v1285, %v1282
      %v1488 = vpack.c.bf16 %v1293, %v1290
      %v1489 = vpack.c.bf16 %v1301, %v1298
      %v1490 = vpack.c.bf16 %v1309, %v1306
      %v1491 = vpack.c.bf16 %v1317, %v1314
      %v1492 = vpack.c.bf16 %v1325, %v1322
      %v1493 = vpack.c.bf16 %v1333, %v1330
      %v1494 = vpack.c.bf16 %v1341, %v1338
      %v1495 = vpack.c.bf16 %v1349, %v1346
      %v1496 = vpack.c.bf16 %v1357, %v1354
      %v1497 = vpack.c.bf16 %v1365, %v1362
      %v1498 = vpack.c.bf16 %v1373, %v1370
      %v1499 = vpack.c.bf16 %v1381, %v1378
      %v1500 = vpack.c.bf16 %v1389, %v1386
      %v1501 = vpack.c.bf16 %v1397, %v1394
      %v1502 = vpack.c.bf16 %v1405, %v1402
      %v1503 = vpack.c.bf16 %v1413, %v1410
      %v1504 = vpack.c.bf16 %v1421, %v1418
      %v1505 = vpack.c.bf16 %v1429, %v1426
      %v1506 = vpack.c.bf16 %v1437, %v1434
      %v1507 = vpack.c.bf16 %v1445, %v1442
      %v1508 = vpack.c.bf16 %v1453, %v1450
      %v1509 = vpack.c.bf16 %v1461, %v1458
      %v1510 = vpack.c.bf16 %v1469, %v1466
      %v1511 = vpack.c.bf16 %v1477, %v1474
      %v1544 = vunpack.c.l.b16 %v1480
      %v1545 = vunpack.c.h.b16 %v1480
      %v1546 = vunpack.c.l.b16 %v1481
      %v1547 = vunpack.c.h.b16 %v1481
      %v1548 = vunpack.c.l.b16 %v1482
      %v1549 = vunpack.c.h.b16 %v1482
      %v1550 = vunpack.c.l.b16 %v1483
      %v1551 = vunpack.c.h.b16 %v1483
      %v1552 = vunpack.c.l.b16 %v1484
      %v1553 = vunpack.c.h.b16 %v1484
      %v1554 = vunpack.c.l.b16 %v1485
      %v1555 = vunpack.c.h.b16 %v1485
      %v1556 = vunpack.c.l.b16 %v1486
      %v1557 = vunpack.c.h.b16 %v1486
      %v1558 = vunpack.c.l.b16 %v1487
      %v1559 = vunpack.c.h.b16 %v1487
      %v1560 = vunpack.c.l.b16 %v1488
      %v1561 = vunpack.c.h.b16 %v1488
      %v1562 = vunpack.c.l.b16 %v1489
      %v1563 = vunpack.c.h.b16 %v1489
      %v1564 = vunpack.c.l.b16 %v1490
      %v1565 = vunpack.c.h.b16 %v1490
      %v1566 = vunpack.c.l.b16 %v1491
      %v1567 = vunpack.c.h.b16 %v1491
      %v1568 = vunpack.c.l.b16 %v1492
      %v1569 = vunpack.c.h.b16 %v1492
      %v1570 = vunpack.c.l.b16 %v1493
      %v1571 = vunpack.c.h.b16 %v1493
      %v1572 = vunpack.c.l.b16 %v1494
      %v1573 = vunpack.c.h.b16 %v1494
      %v1574 = vunpack.c.l.b16 %v1495
      %v1575 = vunpack.c.h.b16 %v1495
      %v1576 = vunpack.c.l.b16 %v1496
      %v1577 = vunpack.c.h.b16 %v1496
      %v1578 = vunpack.c.l.b16 %v1497
      %v1579 = vunpack.c.h.b16 %v1497
      %v1580 = vunpack.c.l.b16 %v1498
      %v1581 = vunpack.c.h.b16 %v1498
      %v1582 = vunpack.c.l.b16 %v1499
      %v1583 = vunpack.c.h.b16 %v1499
      %v1584 = vunpack.c.l.b16 %v1500
      %v1585 = vunpack.c.h.b16 %v1500
      %v1586 = vunpack.c.l.b16 %v1501
      %v1587 = vunpack.c.h.b16 %v1501
      %v1588 = vunpack.c.l.b16 %v1502
      %v1589 = vunpack.c.h.b16 %v1502
      %v1590 = vunpack.c.l.b16 %v1503
      %v1591 = vunpack.c.h.b16 %v1503
      %v1592 = vunpack.c.l.b16 %v1504
      %v1593 = vunpack.c.h.b16 %v1504
      %v1594 = vunpack.c.l.b16 %v1505
      %v1595 = vunpack.c.h.b16 %v1505
      %v1596 = vunpack.c.l.b16 %v1506
      %v1597 = vunpack.c.h.b16 %v1506
      %v1598 = vunpack.c.l.b16 %v1507
      %v1599 = vunpack.c.h.b16 %v1507
      %v1600 = vunpack.c.l.b16 %v1508
      %v1601 = vunpack.c.h.b16 %v1508
      %v1602 = vunpack.c.l.b16 %v1509
      %v1603 = vunpack.c.h.b16 %v1509
      %v1604 = vunpack.c.l.b16 %v1510
      %v1605 = vunpack.c.h.b16 %v1510
      %v1606 = vunpack.c.l.b16 %v1511
      %v1607 = vunpack.c.h.b16 %v1511
      %v1608 = vpack.c.b16 %v1544, %v1544
      %v1609 = vpack.c.b16 %v1545, %v1545
      %v1610 = vpack.c.b16 %v1546, %v1546
      %v1611 = vpack.c.b16 %v1547, %v1547
      %v1612 = vpack.c.b16 %v1548, %v1548
      %v1613 = vpack.c.b16 %v1549, %v1549
      %v1614 = vpack.c.b16 %v1550, %v1550
      %v1615 = vpack.c.b16 %v1551, %v1551
      %v1616 = vpack.c.b16 %v1552, %v1552
      %v1617 = vpack.c.b16 %v1553, %v1553
      %v1618 = vpack.c.b16 %v1554, %v1554
      %v1619 = vpack.c.b16 %v1555, %v1555
      %v1620 = vpack.c.b16 %v1556, %v1556
      %v1621 = vpack.c.b16 %v1557, %v1557
      %v1622 = vpack.c.b16 %v1558, %v1558
      %v1623 = vpack.c.b16 %v1559, %v1559
      %v1624 = vpack.c.b16 %v1560, %v1560
      %v1625 = vpack.c.b16 %v1561, %v1561
      %v1626 = vpack.c.b16 %v1562, %v1562
      %v1627 = vpack.c.b16 %v1563, %v1563
      %v1628 = vpack.c.b16 %v1564, %v1564
      %v1629 = vpack.c.b16 %v1565, %v1565
      %v1630 = vpack.c.b16 %v1566, %v1566
      %v1631 = vpack.c.b16 %v1567, %v1567
      %v1632 = vpack.c.b16 %v1568, %v1568
      %v1633 = vpack.c.b16 %v1569, %v1569
      %v1634 = vpack.c.b16 %v1570, %v1570
      %v1635 = vpack.c.b16 %v1571, %v1571
      %v1636 = vpack.c.b16 %v1572, %v1572
      %v1637 = vpack.c.b16 %v1573, %v1573
      %v1638 = vpack.c.b16 %v1574, %v1574
      %v1639 = vpack.c.b16 %v1575, %v1575
      %v1640 = vpack.c.b16 %v1576, %v1576
      %v1641 = vpack.c.b16 %v1577, %v1577
      %v1642 = vpack.c.b16 %v1578, %v1578
      %v1643 = vpack.c.b16 %v1579, %v1579
      %v1644 = vpack.c.b16 %v1580, %v1580
      %v1645 = vpack.c.b16 %v1581, %v1581
      %v1646 = vpack.c.b16 %v1582, %v1582
      %v1647 = vpack.c.b16 %v1583, %v1583
      %v1648 = vpack.c.b16 %v1584, %v1584
      %v1649 = vpack.c.b16 %v1585, %v1585
      %v1650 = vpack.c.b16 %v1586, %v1586
      %v1651 = vpack.c.b16 %v1587, %v1587
      %v1652 = vpack.c.b16 %v1588, %v1588
      %v1653 = vpack.c.b16 %v1589, %v1589
      %v1654 = vpack.c.b16 %v1590, %v1590
      %v1655 = vpack.c.b16 %v1591, %v1591
      %v1656 = vpack.c.b16 %v1592, %v1592
      %v1657 = vpack.c.b16 %v1593, %v1593
      %v1658 = vpack.c.b16 %v1594, %v1594
      %v1659 = vpack.c.b16 %v1595, %v1595
      %v1660 = vpack.c.b16 %v1596, %v1596
      %v1661 = vpack.c.b16 %v1597, %v1597
      %v1662 = vpack.c.b16 %v1598, %v1598
      %v1663 = vpack.c.b16 %v1599, %v1599
      %v1664 = vpack.c.b16 %v1600, %v1600
      %v1665 = vpack.c.b16 %v1601, %v1601
      %v1666 = vpack.c.b16 %v1602, %v1602
      %v1667 = vpack.c.b16 %v1603, %v1603
      %v1668 = vpack.c.b16 %v1604, %v1604
      %v1669 = vpack.c.b16 %v1605, %v1605
      %v1670 = vpack.c.b16 %v1606, %v1606
      %v1671 = vpack.c.b16 %v1607, %v1607
      %1736 = vst [vmem:[%s255] sm:$0xf] %v1608
      %1737 = vst [vmem:[%s255 + $0x4] sm:$0xf] %v1609
      %1738 = vst [vmem:[%s255 + $0x8] sm:$0xf] %v1610
      %1739 = vst [vmem:[%s255 + $0xc] sm:$0xf] %v1611
      %1740 = vst [vmem:[%s255 + $0x10] sm:$0xf] %v1612
      %1741 = vst [vmem:[%s255 + $0x14] sm:$0xf] %v1613
      %1742 = vst [vmem:[%s255 + $0x18] sm:$0xf] %v1614
      %1743 = vst [vmem:[%s255 + $0x1c] sm:$0xf] %v1615
      %1744 = vst [vmem:[%s255 + $0x20] sm:$0xf] %v1616
      %1745 = vst [vmem:[%s255 + $0x24] sm:$0xf] %v1617
      %1746 = vst [vmem:[%s255 + $0x28] sm:$0xf] %v1618
      %1747 = vst [vmem:[%s255 + $0x2c] sm:$0xf] %v1619
      %1748 = vst [vmem:[%s255 + $0x30] sm:$0xf] %v1620
      %1749 = vst [vmem:[%s255 + $0x34] sm:$0xf] %v1621
      %1750 = vst [vmem:[%s255 + $0x38] sm:$0xf] %v1622
      %1751 = vst [vmem:[%s255 + $0x3c] sm:$0xf] %v1623
      %1752 = vst [vmem:[%s255 + $0x40] sm:$0xf] %v1624
      %1753 = vst [vmem:[%s255 + $0x44] sm:$0xf] %v1625
      %1754 = vst [vmem:[%s255 + $0x48] sm:$0xf] %v1626
      %1755 = vst [vmem:[%s255 + $0x4c] sm:$0xf] %v1627
      %1756 = vst [vmem:[%s255 + $0x50] sm:$0xf] %v1628
      %1757 = vst [vmem:[%s255 + $0x54] sm:$0xf] %v1629
      %1758 = vst [vmem:[%s255 + $0x58] sm:$0xf] %v1630
      %1759 = vst [vmem:[%s255 + $0x5c] sm:$0xf] %v1631
      %1760 = vst [vmem:[%s255 + $0x60] sm:$0xf] %v1632
      %1761 = vst [vmem:[%s255 + $0x64] sm:$0xf] %v1633
      %1762 = vst [vmem:[%s255 + $0x68] sm:$0xf] %v1634
      %1763 = vst [vmem:[%s255 + $0x6c] sm:$0xf] %v1635
      %1764 = vst [vmem:[%s255 + $0x70] sm:$0xf] %v1636
      %1765 = vst [vmem:[%s255 + $0x74] sm:$0xf] %v1637
      %1766 = vst [vmem:[%s255 + $0x78] sm:$0xf] %v1638
      %1767 = vst [vmem:[%s255 + $0x7c] sm:$0xf] %v1639
      %1768 = vst [vmem:[%s255 + $0x80] sm:$0xf] %v1640
      %1769 = vst [vmem:[%s255 + $0x84] sm:$0xf] %v1641
      %1770 = vst [vmem:[%s255 + $0x88] sm:$0xf] %v1642
      %1771 = vst [vmem:[%s255 + $0x8c] sm:$0xf] %v1643
      %1772 = vst [vmem:[%s255 + $0x90] sm:$0xf] %v1644
      %1773 = vst [vmem:[%s255 + $0x94] sm:$0xf] %v1645
      %1774 = vst [vmem:[%s255 + $0x98] sm:$0xf] %v1646
      %1775 = vst [vmem:[%s255 + $0x9c] sm:$0xf] %v1647
      %1776 = vst [vmem:[%s255 + $0xa0] sm:$0xf] %v1648
      %1777 = vst [vmem:[%s255 + $0xa4] sm:$0xf] %v1649
      %1778 = vst [vmem:[%s255 + $0xa8] sm:$0xf] %v1650
      %1779 = vst [vmem:[%s255 + $0xac] sm:$0xf] %v1651
      %1780 = vst [vmem:[%s255 + $0xb0] sm:$0xf] %v1652
      %1781 = vst [vmem:[%s255 + $0xb4] sm:$0xf] %v1653
      %1782 = vst [vmem:[%s255 + $0xb8] sm:$0xf] %v1654
      %1783 = vst [vmem:[%s255 + $0xbc] sm:$0xf] %v1655
      %1784 = vst [vmem:[%s255 + $0xc0] sm:$0xf] %v1656
      %1785 = vst [vmem:[%s255 + $0xc4] sm:$0xf] %v1657
      %1786 = vst [vmem:[%s255 + $0xc8] sm:$0xf] %v1658
      %1787 = vst [vmem:[%s255 + $0xcc] sm:$0xf] %v1659
      %1788 = vst [vmem:[%s255 + $0xd0] sm:$0xf] %v1660
      %1789 = vst [vmem:[%s255 + $0xd4] sm:$0xf] %v1661
      %1790 = vst [vmem:[%s255 + $0xd8] sm:$0xf] %v1662
      %1791 = vst [vmem:[%s255 + $0xdc] sm:$0xf] %v1663
      %1792 = vst [vmem:[%s255 + $0xe0] sm:$0xf] %v1664
      %1793 = vst [vmem:[%s255 + $0xe4] sm:$0xf] %v1665
      %1794 = vst [vmem:[%s255 + $0xe8] sm:$0xf] %v1666
      %1795 = vst [vmem:[%s255 + $0xec] sm:$0xf] %v1667
      %1796 = vst [vmem:[%s255 + $0xf0] sm:$0xf] %v1668
      %1797 = vst [vmem:[%s255 + $0xf4] sm:$0xf] %v1669
      %1798 = vst [vmem:[%s255 + $0xf8] sm:$0xf] %v1670
      %1799 = vst [vmem:[%s255 + $0xfc] sm:$0xf] %v1671
      %v1800 = vadd.f32 %v1226, %v1229
      %v1801 = vadd.f32 %v1800, %v1234
      %v1802 = vadd.f32 %v1801, %v1237
      %v1803 = vadd.f32 %v1802, %v1242
      %v1804 = vadd.f32 %v1803, %v1245
      %v1805 = vadd.f32 %v1804, %v1250
      %v1806 = vadd.f32 %v1805, %v1253
      %v1807 = vadd.f32 %v1806, %v1258
      %v1808 = vadd.f32 %v1807, %v1261
      %v1809 = vadd.f32 %v1808, %v1266
      %v1810 = vadd.f32 %v1809, %v1269
      %v1811 = vadd.f32 %v1810, %v1274
      %v1812 = vadd.f32 %v1811, %v1277
      %v1813 = vadd.f32 %v1812, %v1282
      %v1814 = vadd.f32 %v1813, %v1285
      %v1815 = vadd.f32 %v1814, %v1290
      %v1816 = vadd.f32 %v1815, %v1293
      %v1817 = vadd.f32 %v1816, %v1298
      %v1818 = vadd.f32 %v1817, %v1301
      %v1819 = vadd.f32 %v1818, %v1306
      %v1820 = vadd.f32 %v1819, %v1309
      %v1821 = vadd.f32 %v1820, %v1314
      %v1822 = vadd.f32 %v1821, %v1317
      %v1823 = vadd.f32 %v1822, %v1322
      %v1824 = vadd.f32 %v1823, %v1325
      %v1825 = vadd.f32 %v1824, %v1330
      %v1826 = vadd.f32 %v1825, %v1333
      %v1827 = vadd.f32 %v1826, %v1338
      %v1828 = vadd.f32 %v1827, %v1341
      %v1829 = vadd.f32 %v1828, %v1346
      %v1830 = vadd.f32 %v1829, %v1349
      %v1831 = vadd.f32 %v1830, %v1354
      %v1832 = vadd.f32 %v1831, %v1357
      %v1833 = vadd.f32 %v1832, %v1362
      %v1834 = vadd.f32 %v1833, %v1365
      %v1835 = vadd.f32 %v1834, %v1370
      %v1836 = vadd.f32 %v1835, %v1373
      %v1837 = vadd.f32 %v1836, %v1378
      %v1838 = vadd.f32 %v1837, %v1381
      %v1839 = vadd.f32 %v1838, %v1386
      %v1840 = vadd.f32 %v1839, %v1389
      %v1841 = vadd.f32 %v1840, %v1394
      %v1842 = vadd.f32 %v1841, %v1397
      %v1843 = vadd.f32 %v1842, %v1402
      %v1844 = vadd.f32 %v1843, %v1405
      %v1845 = vadd.f32 %v1844, %v1410
      %v1846 = vadd.f32 %v1845, %v1413
      %v1847 = vadd.f32 %v1846, %v1418
      %v1848 = vadd.f32 %v1847, %v1421
      %v1849 = vadd.f32 %v1848, %v1426
      %v1850 = vadd.f32 %v1849, %v1429
      %v1851 = vadd.f32 %v1850, %v1434
      %v1852 = vadd.f32 %v1851, %v1437
      %v1853 = vadd.f32 %v1852, %v1442
      %v1854 = vadd.f32 %v1853, %v1445
      %v1855 = vadd.f32 %v1854, %v1450
      %v1856 = vadd.f32 %v1855, %v1453
      %v1857 = vadd.f32 %v1856, %v1458
      %v1858 = vadd.f32 %v1857, %v1461
      %v1859 = vadd.f32 %v1858, %v1466
      %v1860 = vadd.f32 %v1859, %v1469
      %v1861 = vadd.f32 %v1860, %v1474
      %v1862 = vadd.f32 %v1861, %v1477
      %v1863 = vrot.slane %v1862, 4
      %v1864 = vadd.f32 %v1862, %v1863
      %v1865 = vrot.slane %v1864, 2
      %v1866 = vadd.f32 %v1864, %v1865
      %v1867 = vrot.slane %v1866, 1
      %v1868 = vadd.f32 %v1866, %v1867
      %1869 = vst [vmem:[%s260] sm:$0x1] %v1868
      %v1870 = vmul.f32 %v1226, %v1226
      %v1871 = vmul.f32 %v1229, %v1229
      %v1872 = vmul.f32 %v1234, %v1234
      %v1873 = vmul.f32 %v1237, %v1237
      %v1874 = vmul.f32 %v1242, %v1242
      %v1875 = vmul.f32 %v1245, %v1245
      %v1876 = vmul.f32 %v1250, %v1250
      %v1877 = vmul.f32 %v1253, %v1253
      %v1878 = vmul.f32 %v1258, %v1258
      %v1879 = vmul.f32 %v1261, %v1261
      %v1880 = vmul.f32 %v1266, %v1266
      %v1881 = vmul.f32 %v1269, %v1269
      %v1882 = vmul.f32 %v1274, %v1274
      %v1883 = vmul.f32 %v1277, %v1277
      %v1884 = vmul.f32 %v1282, %v1282
      %v1885 = vmul.f32 %v1285, %v1285
      %v1886 = vmul.f32 %v1290, %v1290
      %v1887 = vmul.f32 %v1293, %v1293
      %v1888 = vmul.f32 %v1298, %v1298
      %v1889 = vmul.f32 %v1301, %v1301
      %v1890 = vmul.f32 %v1306, %v1306
      %v1891 = vmul.f32 %v1309, %v1309
      %v1892 = vmul.f32 %v1314, %v1314
      %v1893 = vmul.f32 %v1317, %v1317
      %v1894 = vmul.f32 %v1322, %v1322
      %v1895 = vmul.f32 %v1325, %v1325
      %v1896 = vmul.f32 %v1330, %v1330
      %v1897 = vmul.f32 %v1333, %v1333
      %v1898 = vmul.f32 %v1338, %v1338
      %v1899 = vmul.f32 %v1341, %v1341
      %v1900 = vmul.f32 %v1346, %v1346
      %v1901 = vmul.f32 %v1349, %v1349
      %v1902 = vmul.f32 %v1354, %v1354
      %v1903 = vmul.f32 %v1357, %v1357
      %v1904 = vmul.f32 %v1362, %v1362
      %v1905 = vmul.f32 %v1365, %v1365
      %v1906 = vmul.f32 %v1370, %v1370
      %v1907 = vmul.f32 %v1373, %v1373
      %v1908 = vmul.f32 %v1378, %v1378
      %v1909 = vmul.f32 %v1381, %v1381
      %v1910 = vmul.f32 %v1386, %v1386
      %v1911 = vmul.f32 %v1389, %v1389
      %v1912 = vmul.f32 %v1394, %v1394
      %v1913 = vmul.f32 %v1397, %v1397
      %v1914 = vmul.f32 %v1402, %v1402
      %v1915 = vmul.f32 %v1405, %v1405
      %v1916 = vmul.f32 %v1410, %v1410
      %v1917 = vmul.f32 %v1413, %v1413
      %v1918 = vmul.f32 %v1418, %v1418
      %v1919 = vmul.f32 %v1421, %v1421
      %v1920 = vmul.f32 %v1426, %v1426
      %v1921 = vmul.f32 %v1429, %v1429
      %v1922 = vmul.f32 %v1434, %v1434
      %v1923 = vmul.f32 %v1437, %v1437
      %v1924 = vmul.f32 %v1442, %v1442
      %v1925 = vmul.f32 %v1445, %v1445
      %v1926 = vmul.f32 %v1450, %v1450
      %v1927 = vmul.f32 %v1453, %v1453
      %v1928 = vmul.f32 %v1458, %v1458
      %v1929 = vmul.f32 %v1461, %v1461
      %v1930 = vmul.f32 %v1466, %v1466
      %v1931 = vmul.f32 %v1469, %v1469
      %v1932 = vmul.f32 %v1474, %v1474
      %v1933 = vmul.f32 %v1477, %v1477
      %v1934 = vadd.f32 %v1870, %v1871
      %v1935 = vadd.f32 %v1934, %v1872
      %v1936 = vadd.f32 %v1935, %v1873
      %v1937 = vadd.f32 %v1936, %v1874
      %v1938 = vadd.f32 %v1937, %v1875
      %v1939 = vadd.f32 %v1938, %v1876
      %v1940 = vadd.f32 %v1939, %v1877
      %v1941 = vadd.f32 %v1940, %v1878
      %v1942 = vadd.f32 %v1941, %v1879
      %v1943 = vadd.f32 %v1942, %v1880
      %v1944 = vadd.f32 %v1943, %v1881
      %v1945 = vadd.f32 %v1944, %v1882
      %v1946 = vadd.f32 %v1945, %v1883
      %v1947 = vadd.f32 %v1946, %v1884
      %v1948 = vadd.f32 %v1947, %v1885
      %v1949 = vadd.f32 %v1948, %v1886
      %v1950 = vadd.f32 %v1949, %v1887
      %v1951 = vadd.f32 %v1950, %v1888
      %v1952 = vadd.f32 %v1951, %v1889
      %v1953 = vadd.f32 %v1952, %v1890
      %v1954 = vadd.f32 %v1953, %v1891
      %v1955 = vadd.f32 %v1954, %v1892
      %v1956 = vadd.f32 %v1955, %v1893
      %v1957 = vadd.f32 %v1956, %v1894
      %v1958 = vadd.f32 %v1957, %v1895
      %v1959 = vadd.f32 %v1958, %v1896
      %v1960 = vadd.f32 %v1959, %v1897
      %v1961 = vadd.f32 %v1960, %v1898
      %v1962 = vadd.f32 %v1961, %v1899
      %v1963 = vadd.f32 %v1962, %v1900
      %v1964 = vadd.f32 %v1963, %v1901
      %v1965 = vadd.f32 %v1964, %v1902
      %v1966 = vadd.f32 %v1965, %v1903
      %v1967 = vadd.f32 %v1966, %v1904
      %v1968 = vadd.f32 %v1967, %v1905
      %v1969 = vadd.f32 %v1968, %v1906
      %v1970 = vadd.f32 %v1969, %v1907
      %v1971 = vadd.f32 %v1970, %v1908
      %v1972 = vadd.f32 %v1971, %v1909
      %v1973 = vadd.f32 %v1972, %v1910
      %v1974 = vadd.f32 %v1973, %v1911
      %v1975 = vadd.f32 %v1974, %v1912
      %v1976 = vadd.f32 %v1975, %v1913
      %v1977 = vadd.f32 %v1976, %v1914
      %v1978 = vadd.f32 %v1977, %v1915
      %v1979 = vadd.f32 %v1978, %v1916
      %v1980 = vadd.f32 %v1979, %v1917
      %v1981 = vadd.f32 %v1980, %v1918
      %v1982 = vadd.f32 %v1981, %v1919
      %v1983 = vadd.f32 %v1982, %v1920
      %v1984 = vadd.f32 %v1983, %v1921
      %v1985 = vadd.f32 %v1984, %v1922
      %v1986 = vadd.f32 %v1985, %v1923
      %v1987 = vadd.f32 %v1986, %v1924
      %v1988 = vadd.f32 %v1987, %v1925
      %v1989 = vadd.f32 %v1988, %v1926
      %v1990 = vadd.f32 %v1989, %v1927
      %v1991 = vadd.f32 %v1990, %v1928
      %v1992 = vadd.f32 %v1991, %v1929
      %v1993 = vadd.f32 %v1992, %v1930
      %v1994 = vadd.f32 %v1993, %v1931
      %v1995 = vadd.f32 %v1994, %v1932
      %v1996 = vadd.f32 %v1995, %v1933
      %v1997 = vrot.slane %v1996, 4
      %v1998 = vadd.f32 %v1996, %v1997
      %v1999 = vrot.slane %v1998, 2
      %v2000 = vadd.f32 %v1998, %v1999
      %v2001 = vrot.slane %v2000, 1
      %v2002 = vadd.f32 %v2000, %v2001
      %2003 = vst [vmem:[%s260 + $0x1] sm:$0x1] %v2002
      %s2004 = smul.u32 64, %s17
      %p2005 = scmp.lt.s32.totalorder %s2004, 127
      %s2006 = scalar_select %p2005, %s2004, 127
      %s2007 = smul.addr %s2006, 4
      %s2008 = scalar_lea.vmem %s4, %s2007
      %p2009 = scmp.lt.s32.totalorder %s17, 1
      %s2010 = scalar_select %p2009, %s17, 1
      %s2011 = smul.addr %s2010, 2
      %s2012 = scalar_lea.vmem %s5, %s2011
      // Predicated region
      $region37: #{rsu4_forward.26} parent=35 // pred_check
        %p2013 = pneg %p129
      $region38: #{rsu4_forward.26} parent=35 // pred_check_branch
        %2015 = sbr.rel (%p2013) target = $region40
      $region39: #{rsu4_forward.26} parent=35 // pred_region
        %s2016 = smul.u32 64, %s17
      $region40: #{rsu4_forward.26} parent=35 // pred_fallthru
        _
      // Predicated region
      $region41: #{rsu4_forward.26} parent=35 // pred_check
        %p2017 = pneg %p155
      $region42: #{rsu4_forward.26} parent=35 // pred_check_branch
        %2019 = sbr.rel (%p2017) target = $region44
      $region43: #{rsu4_forward.26} parent=35 // pred_region
        _
      $region44: #{rsu4_forward.26} parent=35 // pred_fallthru
        _
    $region36: #{rsu4_forward.26} parent=5 // pred_fallthru
      _
    %p2020 = scmp.le.s32.totalorder 2, %s12
    // Predicated region
    $region45: #{rsu4_forward.26} parent=5 // pred_check
      %p2021 = pneg %p2020
    $region46: #{rsu4_forward.26} parent=5 // pred_check_branch
      %2023 = sbr.rel (%p2021) target = $region48
    $region47: #{rsu4_forward.26} parent=5 // pred_region
      %s2024 = ssub.s32 %s12, 2
      // Predicated region
      $region49: #{rsu4_forward.26} parent=47 // pred_check
        %p2025 = pneg %p135
      $region50: #{rsu4_forward.26} parent=47 // pred_check_branch
        %2027 = sbr.rel (%p2025) target = $region52
      $region51: #{rsu4_forward.26} parent=47 // pred_region
        %s2028 = smul.u32 64, %s18
        %p2029 = scmp.lt.s32.totalorder %s2028, 127
        %s2030 = scalar_select %p2029, %s2028, 127
        %s2031 = smul.addr %s2030, 4
        %s2032 = scalar_lea.vmem %s4, %s2031
      $region52: #{rsu4_forward.26} parent=47 // pred_fallthru
        _
      // Predicated region
      $region53: #{rsu4_forward.26} parent=47 // pred_check
        %p2033 = pneg %p161
      $region54: #{rsu4_forward.26} parent=47 // pred_check_branch
        %2035 = sbr.rel (%p2033) target = $region56
      $region55: #{rsu4_forward.26} parent=47 // pred_region
        %p2036 = scmp.lt.s32.totalorder %s18, 1
        %s2037 = scalar_select %p2036, %s18, 1
        %s2038 = smul.addr %s2037, 2
        %s2039 = scalar_lea.vmem %s5, %s2038
      $region56: #{rsu4_forward.26} parent=47 // pred_fallthru
        _
    $region48: #{rsu4_forward.26} parent=5 // pred_fallthru
      _
  $region6: #{rsu4_forward.26} parent=0 // loop_footer
    %s16 = sadd.s32 1, %s12
  $region7: #{rsu4_forward.26} parent=0 // loop_footer_branch
    %11 = sbr.rel target = $region3
  $region8: #{rsu4_forward.26} parent=0 // loop_exit
    _

// kernel: rsu4_forward.31
$region0: #{rsu4_forward.31}
  #allocation0 [shape = 'u32[]', space=smem, size = 0x4, offset = 0x4, fixed_abs, tag = 'smem constant byte address 0x4 - core index']
  #allocation1 [shape = 'u32[144,128]{1,0:T(1,128)}', space=vmem, size = 0x12000, scoped, tag = 'internal scratch']
  %s0 = inlined_call_operand.vmem [shape: bf16[1024,128], index: 0, kind: input, shape index: {}, may-alias: {0,4}]
  %s1 = inlined_call_operand.vmem [shape: f32[1,128], index: 1, kind: input, shape index: {}]
  %s2 = inlined_call_operand.vmem [shape: f32[1,128], index: 2, kind: input, shape index: {}]
  %s3 = inlined_call_operand.vmem [shape: bf16[1024,128], index: 3, kind: input, shape index: {}]
  %s4 = inlined_call_operand.vmem [shape: bf16[1024,128], index: 4, kind: output, shape index: {}, may-alias: {0,4}]
  %s5 = sld [smem:[#allocation0]]
  $region26: #{rsu4_forward.31} parent=0
    _
  %s7 = ssub.s32 1, %s5
  %s8 = scalar_select 0, %s7, %s5
  // Predicated region
  $region2: #{rsu4_forward.31} parent=0 // pred_check
    _
  $region3: #{rsu4_forward.31} parent=0 // pred_check_branch
    %10 = sbr.rel (0) target = $region5
  $region4: #{rsu4_forward.31} parent=0 // pred_region
    _
  $region5: #{rsu4_forward.31} parent=0 // pred_fallthru
    _
  // Predicated region
  $region6: #{rsu4_forward.31} parent=0 // pred_check
    _
  $region7: #{rsu4_forward.31} parent=0 // pred_check_branch
    %12 = sbr.rel (0) target = $region9
  $region8: #{rsu4_forward.31} parent=0 // pred_region
    _
  $region9: #{rsu4_forward.31} parent=0 // pred_fallthru
    _
  // Predicated region
  $region10: #{rsu4_forward.31} parent=0 // pred_check
    _
  $region11: #{rsu4_forward.31} parent=0 // pred_check_branch
    %14 = sbr.rel (0) target = $region13
  $region12: #{rsu4_forward.31} parent=0 // pred_region
    _
  $region13: #{rsu4_forward.31} parent=0 // pred_fallthru
    _
  // Predicated region
  $region14: #{rsu4_forward.31} parent=0 // pred_check
    _
  $region15: #{rsu4_forward.31} parent=0 // pred_check_branch
    %16 = sbr.rel (0) target = $region17
  $region16: #{rsu4_forward.31} parent=0 // pred_region
    _
  $region17: #{rsu4_forward.31} parent=0 // pred_fallthru
    _
  %v17 = vld [vmem:[%s0] sm:$0xf]
  %v18 = vld [vmem:[%s0 + $0x4] sm:$0xf]
  %v19 = vld [vmem:[%s0 + $0x8] sm:$0xf]
  %v20 = vld [vmem:[%s0 + $0xc] sm:$0xf]
  %v21 = vld [vmem:[%s0 + $0x10] sm:$0xf]
  %v22 = vld [vmem:[%s0 + $0x14] sm:$0xf]
  %v23 = vld [vmem:[%s0 + $0x18] sm:$0xf]
  %v24 = vld [vmem:[%s0 + $0x1c] sm:$0xf]
  %v25 = vld [vmem:[%s0 + $0x20] sm:$0xf]
  %v26 = vld [vmem:[%s0 + $0x24] sm:$0xf]
  %v27 = vld [vmem:[%s0 + $0x28] sm:$0xf]
  %v28 = vld [vmem:[%s0 + $0x2c] sm:$0xf]
  %v29 = vld [vmem:[%s0 + $0x30] sm:$0xf]
  %v30 = vld [vmem:[%s0 + $0x34] sm:$0xf]
  %v31 = vld [vmem:[%s0 + $0x38] sm:$0xf]
  %v32 = vld [vmem:[%s0 + $0x3c] sm:$0xf]
  %v33 = vld [vmem:[%s0 + $0x40] sm:$0xf]
  %v34 = vld [vmem:[%s0 + $0x44] sm:$0xf]
  %v35 = vld [vmem:[%s0 + $0x48] sm:$0xf]
  %v36 = vld [vmem:[%s0 + $0x4c] sm:$0xf]
  %v37 = vld [vmem:[%s0 + $0x50] sm:$0xf]
  %v38 = vld [vmem:[%s0 + $0x54] sm:$0xf]
  %v39 = vld [vmem:[%s0 + $0x58] sm:$0xf]
  %v40 = vld [vmem:[%s0 + $0x5c] sm:$0xf]
  %v41 = vld [vmem:[%s0 + $0x60] sm:$0xf]
  %v42 = vld [vmem:[%s0 + $0x64] sm:$0xf]
  %v43 = vld [vmem:[%s0 + $0x68] sm:$0xf]
  %v44 = vld [vmem:[%s0 + $0x6c] sm:$0xf]
  %v45 = vld [vmem:[%s0 + $0x70] sm:$0xf]
  %v46 = vld [vmem:[%s0 + $0x74] sm:$0xf]
  %v47 = vld [vmem:[%s0 + $0x78] sm:$0xf]
  %v48 = vld [vmem:[%s0 + $0x7c] sm:$0xf]
  %v49 = vld [vmem:[%s0 + $0x80] sm:$0xf]
  %v50 = vld [vmem:[%s0 + $0x84] sm:$0xf]
  %v51 = vld [vmem:[%s0 + $0x88] sm:$0xf]
  %v52 = vld [vmem:[%s0 + $0x8c] sm:$0xf]
  %v53 = vld [vmem:[%s0 + $0x90] sm:$0xf]
  %v54 = vld [vmem:[%s0 + $0x94] sm:$0xf]
  %v55 = vld [vmem:[%s0 + $0x98] sm:$0xf]
  %v56 = vld [vmem:[%s0 + $0x9c] sm:$0xf]
  %v57 = vld [vmem:[%s0 + $0xa0] sm:$0xf]
  %v58 = vld [vmem:[%s0 + $0xa4] sm:$0xf]
  %v59 = vld [vmem:[%s0 + $0xa8] sm:$0xf]
  %v60 = vld [vmem:[%s0 + $0xac] sm:$0xf]
  %v61 = vld [vmem:[%s0 + $0xb0] sm:$0xf]
  %v62 = vld [vmem:[%s0 + $0xb4] sm:$0xf]
  %v63 = vld [vmem:[%s0 + $0xb8] sm:$0xf]
  %v64 = vld [vmem:[%s0 + $0xbc] sm:$0xf]
  %v65 = vld [vmem:[%s0 + $0xc0] sm:$0xf]
  %v66 = vld [vmem:[%s0 + $0xc4] sm:$0xf]
  %v67 = vld [vmem:[%s0 + $0xc8] sm:$0xf]
  %v68 = vld [vmem:[%s0 + $0xcc] sm:$0xf]
  %v69 = vld [vmem:[%s0 + $0xd0] sm:$0xf]
  %v70 = vld [vmem:[%s0 + $0xd4] sm:$0xf]
  %v71 = vld [vmem:[%s0 + $0xd8] sm:$0xf]
  %v72 = vld [vmem:[%s0 + $0xdc] sm:$0xf]
  %v73 = vld [vmem:[%s0 + $0xe0] sm:$0xf]
  %v74 = vld [vmem:[%s0 + $0xe4] sm:$0xf]
  %v75 = vld [vmem:[%s0 + $0xe8] sm:$0xf]
  %v76 = vld [vmem:[%s0 + $0xec] sm:$0xf]
  %v77 = vld [vmem:[%s0 + $0xf0] sm:$0xf]
  %v78 = vld [vmem:[%s0 + $0xf4] sm:$0xf]
  %v79 = vld [vmem:[%s0 + $0xf8] sm:$0xf]
  %v80 = vld [vmem:[%s0 + $0xfc] sm:$0xf]
  %v81 = vld [vmem:[%s0 + $0x100] sm:$0xf]
  %v82 = vld [vmem:[%s0 + $0x104] sm:$0xf]
  %v83 = vld [vmem:[%s0 + $0x108] sm:$0xf]
  %v84 = vld [vmem:[%s0 + $0x10c] sm:$0xf]
  %v85 = vld [vmem:[%s0 + $0x110] sm:$0xf]
  %v86 = vld [vmem:[%s0 + $0x114] sm:$0xf]
  %v87 = vld [vmem:[%s0 + $0x118] sm:$0xf]
  %v88 = vld [vmem:[%s0 + $0x11c] sm:$0xf]
  %v89 = vld [vmem:[%s0 + $0x120] sm:$0xf]
  %v90 = vld [vmem:[%s0 + $0x124] sm:$0xf]
  %v91 = vld [vmem:[%s0 + $0x128] sm:$0xf]
  %v92 = vld [vmem:[%s0 + $0x12c] sm:$0xf]
  %v93 = vld [vmem:[%s0 + $0x130] sm:$0xf]
  %v94 = vld [vmem:[%s0 + $0x134] sm:$0xf]
  %v95 = vld [vmem:[%s0 + $0x138] sm:$0xf]
  %v96 = vld [vmem:[%s0 + $0x13c] sm:$0xf]
  %v97 = vld [vmem:[%s0 + $0x140] sm:$0xf]
  %v98 = vld [vmem:[%s0 + $0x144] sm:$0xf]
  %v99 = vld [vmem:[%s0 + $0x148] sm:$0xf]
  %v100 = vld [vmem:[%s0 + $0x14c] sm:$0xf]
  %v101 = vld [vmem:[%s0 + $0x150] sm:$0xf]
  %v102 = vld [vmem:[%s0 + $0x154] sm:$0xf]
  %v103 = vld [vmem:[%s0 + $0x158] sm:$0xf]
  %v104 = vld [vmem:[%s0 + $0x15c] sm:$0xf]
  %v105 = vld [vmem:[%s0 + $0x160] sm:$0xf]
  %v106 = vld [vmem:[%s0 + $0x164] sm:$0xf]
  %v107 = vld [vmem:[%s0 + $0x168] sm:$0xf]
  %v108 = vld [vmem:[%s0 + $0x16c] sm:$0xf]
  %v109 = vld [vmem:[%s0 + $0x170] sm:$0xf]
  %v110 = vld [vmem:[%s0 + $0x174] sm:$0xf]
  %v111 = vld [vmem:[%s0 + $0x178] sm:$0xf]
  %v112 = vld [vmem:[%s0 + $0x17c] sm:$0xf]
  %v113 = vld [vmem:[%s0 + $0x180] sm:$0xf]
  %v114 = vld [vmem:[%s0 + $0x184] sm:$0xf]
  %v115 = vld [vmem:[%s0 + $0x188] sm:$0xf]
  %v116 = vld [vmem:[%s0 + $0x18c] sm:$0xf]
  %v117 = vld [vmem:[%s0 + $0x190] sm:$0xf]
  %v118 = vld [vmem:[%s0 + $0x194] sm:$0xf]
  %v119 = vld [vmem:[%s0 + $0x198] sm:$0xf]
  %v120 = vld [vmem:[%s0 + $0x19c] sm:$0xf]
  %v121 = vld [vmem:[%s0 + $0x1a0] sm:$0xf]
  %v122 = vld [vmem:[%s0 + $0x1a4] sm:$0xf]
  %v123 = vld [vmem:[%s0 + $0x1a8] sm:$0xf]
  %v124 = vld [vmem:[%s0 + $0x1ac] sm:$0xf]
  %v125 = vld [vmem:[%s0 + $0x1b0] sm:$0xf]
  %v126 = vld [vmem:[%s0 + $0x1b4] sm:$0xf]
  %v127 = vld [vmem:[%s0 + $0x1b8] sm:$0xf]
  %v128 = vld [vmem:[%s0 + $0x1bc] sm:$0xf]
  %v129 = vld [vmem:[%s0 + $0x1c0] sm:$0xf]
  %v130 = vld [vmem:[%s0 + $0x1c4] sm:$0xf]
  %v131 = vld [vmem:[%s0 + $0x1c8] sm:$0xf]
  %v132 = vld [vmem:[%s0 + $0x1cc] sm:$0xf]
  %v133 = vld [vmem:[%s0 + $0x1d0] sm:$0xf]
  %v134 = vld [vmem:[%s0 + $0x1d4] sm:$0xf]
  %v135 = vld [vmem:[%s0 + $0x1d8] sm:$0xf]
  %v136 = vld [vmem:[%s0 + $0x1dc] sm:$0xf]
  %v137 = vld [vmem:[%s0 + $0x1e0] sm:$0xf]
  %v138 = vld [vmem:[%s0 + $0x1e4] sm:$0xf]
  %v139 = vld [vmem:[%s0 + $0x1e8] sm:$0xf]
  %v140 = vld [vmem:[%s0 + $0x1ec] sm:$0xf]
  %v141 = vld [vmem:[%s0 + $0x1f0] sm:$0xf]
  %v142 = vld [vmem:[%s0 + $0x1f4] sm:$0xf]
  %v143 = vld [vmem:[%s0 + $0x1f8] sm:$0xf]
  %v144 = vld [vmem:[%s0 + $0x1fc] sm:$0xf]
  %v145 = vunpack.c.l.bf16 %v17
  %v146 = vunpack.c.l.bf16 %v18
  %v147 = vunpack.c.l.bf16 %v19
  %v148 = vunpack.c.l.bf16 %v20
  %v149 = vunpack.c.l.bf16 %v21
  %v150 = vunpack.c.l.bf16 %v22
  %v151 = vunpack.c.l.bf16 %v23
  %v152 = vunpack.c.l.bf16 %v24
  %v153 = vunpack.c.l.bf16 %v25
  %v154 = vunpack.c.l.bf16 %v26
  %v155 = vunpack.c.l.bf16 %v27
  %v156 = vunpack.c.l.bf16 %v28
  %v157 = vunpack.c.l.bf16 %v29
  %v158 = vunpack.c.l.bf16 %v30
  %v159 = vunpack.c.l.bf16 %v31
  %v160 = vunpack.c.l.bf16 %v32
  %v161 = vunpack.c.l.bf16 %v33
  %v162 = vunpack.c.l.bf16 %v34
  %v163 = vunpack.c.l.bf16 %v35
  %v164 = vunpack.c.l.bf16 %v36
  %v165 = vunpack.c.l.bf16 %v37
  %v166 = vunpack.c.l.bf16 %v38
  %v167 = vunpack.c.l.bf16 %v39
  %v168 = vunpack.c.l.bf16 %v40
  %v169 = vunpack.c.l.bf16 %v41
  %v170 = vunpack.c.l.bf16 %v42
  %v171 = vunpack.c.l.bf16 %v43
  %v172 = vunpack.c.l.bf16 %v44
  %v173 = vunpack.c.l.bf16 %v45
  %v174 = vunpack.c.l.bf16 %v46
  %v175 = vunpack.c.l.bf16 %v47
  %v176 = vunpack.c.l.bf16 %v48
  %v177 = vunpack.c.l.bf16 %v49
  %v178 = vunpack.c.l.bf16 %v50
  %v179 = vunpack.c.l.bf16 %v51
  %v180 = vunpack.c.l.bf16 %v52
  %v181 = vunpack.c.l.bf16 %v53
  %v182 = vunpack.c.l.bf16 %v54
  %v183 = vunpack.c.l.bf16 %v55
  %v184 = vunpack.c.l.bf16 %v56
  %v185 = vunpack.c.l.bf16 %v57
  %v186 = vunpack.c.l.bf16 %v58
  %v187 = vunpack.c.l.bf16 %v59
  %v188 = vunpack.c.l.bf16 %v60
  %v189 = vunpack.c.l.bf16 %v61
  %v190 = vunpack.c.l.bf16 %v62
  %v191 = vunpack.c.l.bf16 %v63
  %v192 = vunpack.c.l.bf16 %v64
  %v193 = vunpack.c.l.bf16 %v65
  %v194 = vunpack.c.l.bf16 %v66
  %v195 = vunpack.c.l.bf16 %v67
  %v196 = vunpack.c.l.bf16 %v68
  %v197 = vunpack.c.l.bf16 %v69
  %v198 = vunpack.c.l.bf16 %v70
  %v199 = vunpack.c.l.bf16 %v71
  %v200 = vunpack.c.l.bf16 %v72
  %v201 = vunpack.c.l.bf16 %v73
  %v202 = vunpack.c.l.bf16 %v74
  %v203 = vunpack.c.l.bf16 %v75
  %v204 = vunpack.c.l.bf16 %v76
  %v205 = vunpack.c.l.bf16 %v77
  %v206 = vunpack.c.l.bf16 %v78
  %v207 = vunpack.c.l.bf16 %v79
  %v208 = vunpack.c.l.bf16 %v80
  %v209 = vunpack.c.l.bf16 %v81
  %v210 = vunpack.c.l.bf16 %v82
  %v211 = vunpack.c.l.bf16 %v83
  %v212 = vunpack.c.l.bf16 %v84
  %v213 = vunpack.c.l.bf16 %v85
  %v214 = vunpack.c.l.bf16 %v86
  %v215 = vunpack.c.l.bf16 %v87
  %v216 = vunpack.c.l.bf16 %v88
  %v217 = vunpack.c.l.bf16 %v89
  %v218 = vunpack.c.l.bf16 %v90
  %v219 = vunpack.c.l.bf16 %v91
  %v220 = vunpack.c.l.bf16 %v92
  %v221 = vunpack.c.l.bf16 %v93
  %v222 = vunpack.c.l.bf16 %v94
  %v223 = vunpack.c.l.bf16 %v95
  %v224 = vunpack.c.l.bf16 %v96
  %v225 = vunpack.c.l.bf16 %v97
  %v226 = vunpack.c.l.bf16 %v98
  %v227 = vunpack.c.l.bf16 %v99
  %v228 = vunpack.c.l.bf16 %v100
  %v229 = vunpack.c.l.bf16 %v101
  %v230 = vunpack.c.l.bf16 %v102
  %v231 = vunpack.c.l.bf16 %v103
  %v232 = vunpack.c.l.bf16 %v104
  %v233 = vunpack.c.l.bf16 %v105
  %v234 = vunpack.c.l.bf16 %v106
  %v235 = vunpack.c.l.bf16 %v107
  %v236 = vunpack.c.l.bf16 %v108
  %v237 = vunpack.c.l.bf16 %v109
  %v238 = vunpack.c.l.bf16 %v110
  %v239 = vunpack.c.l.bf16 %v111
  %v240 = vunpack.c.l.bf16 %v112
  %v241 = vunpack.c.l.bf16 %v113
  %v242 = vunpack.c.l.bf16 %v114
  %v243 = vunpack.c.l.bf16 %v115
  %v244 = vunpack.c.l.bf16 %v116
  %v245 = vunpack.c.l.bf16 %v117
  %v246 = vunpack.c.l.bf16 %v118
  %v247 = vunpack.c.l.bf16 %v119
  %v248 = vunpack.c.l.bf16 %v120
  %v249 = vunpack.c.l.bf16 %v121
  %v250 = vunpack.c.l.bf16 %v122
  %v251 = vunpack.c.l.bf16 %v123
  %v252 = vunpack.c.l.bf16 %v124
  %v253 = vunpack.c.l.bf16 %v125
  %v254 = vunpack.c.l.bf16 %v126
  %v255 = vunpack.c.l.bf16 %v127
  %v256 = vunpack.c.l.bf16 %v128
  %v257 = vunpack.c.l.bf16 %v129
  %v258 = vunpack.c.l.bf16 %v130
  %v259 = vunpack.c.l.bf16 %v131
  %v260 = vunpack.c.l.bf16 %v132
  %v261 = vunpack.c.l.bf16 %v133
  %v262 = vunpack.c.l.bf16 %v134
  %v263 = vunpack.c.l.bf16 %v135
  %v264 = vunpack.c.l.bf16 %v136
  %v265 = vunpack.c.l.bf16 %v137
  %v266 = vunpack.c.l.bf16 %v138
  %v267 = vunpack.c.l.bf16 %v139
  %v268 = vunpack.c.l.bf16 %v140
  %v269 = vunpack.c.l.bf16 %v141
  %v270 = vunpack.c.l.bf16 %v142
  %v271 = vunpack.c.l.bf16 %v143
  %v272 = vunpack.c.l.bf16 %v144
  %v273 = vld [vmem:[%s1] sm:$0x1]
  %v275 = vlaneseq
  %v276 = vshrl.u32 %v275, 7
  %v277 = vsub.s32 0, %v276
  %v278 = vrot.slane %v273, %v277
  %v280 = vmul.f32 %v145, %v278
  %v281 = vmul.f32 %v146, %v278
  %v282 = vmul.f32 %v147, %v278
  %v283 = vmul.f32 %v148, %v278
  %v284 = vmul.f32 %v149, %v278
  %v285 = vmul.f32 %v150, %v278
  %v286 = vmul.f32 %v151, %v278
  %v287 = vmul.f32 %v152, %v278
  %v288 = vmul.f32 %v153, %v278
  %v289 = vmul.f32 %v154, %v278
  %v290 = vmul.f32 %v155, %v278
  %v291 = vmul.f32 %v156, %v278
  %v292 = vmul.f32 %v157, %v278
  %v293 = vmul.f32 %v158, %v278
  %v294 = vmul.f32 %v159, %v278
  %v295 = vmul.f32 %v160, %v278
  %v296 = vmul.f32 %v161, %v278
  %v297 = vmul.f32 %v162, %v278
  %v298 = vmul.f32 %v163, %v278
  %v299 = vmul.f32 %v164, %v278
  %v300 = vmul.f32 %v165, %v278
  %v301 = vmul.f32 %v166, %v278
  %v302 = vmul.f32 %v167, %v278
  %v303 = vmul.f32 %v168, %v278
  %v304 = vmul.f32 %v169, %v278
  %v305 = vmul.f32 %v170, %v278
  %v306 = vmul.f32 %v171, %v278
  %v307 = vmul.f32 %v172, %v278
  %v308 = vmul.f32 %v173, %v278
  %v309 = vmul.f32 %v174, %v278
  %v310 = vmul.f32 %v175, %v278
  %v311 = vmul.f32 %v176, %v278
  %v312 = vmul.f32 %v177, %v278
  %v313 = vmul.f32 %v178, %v278
  %v314 = vmul.f32 %v179, %v278
  %v315 = vmul.f32 %v180, %v278
  %v316 = vmul.f32 %v181, %v278
  %v317 = vmul.f32 %v182, %v278
  %v318 = vmul.f32 %v183, %v278
  %v319 = vmul.f32 %v184, %v278
  %v320 = vmul.f32 %v185, %v278
  %v321 = vmul.f32 %v186, %v278
  %v322 = vmul.f32 %v187, %v278
  %v323 = vmul.f32 %v188, %v278
  %v324 = vmul.f32 %v189, %v278
  %v325 = vmul.f32 %v190, %v278
  %v326 = vmul.f32 %v191, %v278
  %v327 = vmul.f32 %v192, %v278
  %v328 = vmul.f32 %v193, %v278
  %v329 = vmul.f32 %v194, %v278
  %v330 = vmul.f32 %v195, %v278
  %v331 = vmul.f32 %v196, %v278
  %v332 = vmul.f32 %v197, %v278
  %v333 = vmul.f32 %v198, %v278
  %v334 = vmul.f32 %v199, %v278
  %v335 = vmul.f32 %v200, %v278
  %v336 = vmul.f32 %v201, %v278
  %v337 = vmul.f32 %v202, %v278
  %v338 = vmul.f32 %v203, %v278
  %v339 = vmul.f32 %v204, %v278
  %v340 = vmul.f32 %v205, %v278
  %v341 = vmul.f32 %v206, %v278
  %v342 = vmul.f32 %v207, %v278
  %v343 = vmul.f32 %v208, %v278
  %v344 = vmul.f32 %v209, %v278
  %v345 = vmul.f32 %v210, %v278
  %v346 = vmul.f32 %v211, %v278
  %v347 = vmul.f32 %v212, %v278
  %v348 = vmul.f32 %v213, %v278
  %v349 = vmul.f32 %v214, %v278
  %v350 = vmul.f32 %v215, %v278
  %v351 = vmul.f32 %v216, %v278
  %v352 = vmul.f32 %v217, %v278
  %v353 = vmul.f32 %v218, %v278
  %v354 = vmul.f32 %v219, %v278
  %v355 = vmul.f32 %v220, %v278
  %v356 = vmul.f32 %v221, %v278
  %v357 = vmul.f32 %v222, %v278
  %v358 = vmul.f32 %v223, %v278
  %v359 = vmul.f32 %v224, %v278
  %v360 = vmul.f32 %v225, %v278
  %v361 = vmul.f32 %v226, %v278
  %v362 = vmul.f32 %v227, %v278
  %v363 = vmul.f32 %v228, %v278
  %v364 = vmul.f32 %v229, %v278
  %v365 = vmul.f32 %v230, %v278
  %v366 = vmul.f32 %v231, %v278
  %v367 = vmul.f32 %v232, %v278
  %v368 = vmul.f32 %v233, %v278
  %v369 = vmul.f32 %v234, %v278
  %v370 = vmul.f32 %v235, %v278
  %v371 = vmul.f32 %v236, %v278
  %v372 = vmul.f32 %v237, %v278
  %v373 = vmul.f32 %v238, %v278
  %v374 = vmul.f32 %v239, %v278
  %v375 = vmul.f32 %v240, %v278
  %v376 = vmul.f32 %v241, %v278
  %v377 = vmul.f32 %v242, %v278
  %v378 = vmul.f32 %v243, %v278
  %v379 = vmul.f32 %v244, %v278
  %v380 = vmul.f32 %v245, %v278
  %v381 = vmul.f32 %v246, %v278
  %v382 = vmul.f32 %v247, %v278
  %v383 = vmul.f32 %v248, %v278
  %v384 = vmul.f32 %v249, %v278
  %v385 = vmul.f32 %v250, %v278
  %v386 = vmul.f32 %v251, %v278
  %v387 = vmul.f32 %v252, %v278
  %v388 = vmul.f32 %v253, %v278
  %v389 = vmul.f32 %v254, %v278
  %v390 = vmul.f32 %v255, %v278
  %v391 = vmul.f32 %v256, %v278
  %v392 = vmul.f32 %v257, %v278
  %v393 = vmul.f32 %v258, %v278
  %v394 = vmul.f32 %v259, %v278
  %v395 = vmul.f32 %v260, %v278
  %v396 = vmul.f32 %v261, %v278
  %v397 = vmul.f32 %v262, %v278
  %v398 = vmul.f32 %v263, %v278
  %v399 = vmul.f32 %v264, %v278
  %v400 = vmul.f32 %v265, %v278
  %v401 = vmul.f32 %v266, %v278
  %v402 = vmul.f32 %v267, %v278
  %v403 = vmul.f32 %v268, %v278
  %v404 = vmul.f32 %v269, %v278
  %v405 = vmul.f32 %v270, %v278
  %v406 = vmul.f32 %v271, %v278
  %v407 = vmul.f32 %v272, %v278
  %v408 = vld [vmem:[%s2] sm:$0x1]
  %v410 = vlaneseq
  %v411 = vshrl.u32 %v410, 7
  %v412 = vsub.s32 0, %v411
  %v413 = vrot.slane %v408, %v412
  %v415 = vadd.f32 %v280, %v413
  %v416 = vadd.f32 %v281, %v413
  %v417 = vadd.f32 %v282, %v413
  %v418 = vadd.f32 %v283, %v413
  %v419 = vadd.f32 %v284, %v413
  %v420 = vadd.f32 %v285, %v413
  %v421 = vadd.f32 %v286, %v413
  %v422 = vadd.f32 %v287, %v413
  %v423 = vadd.f32 %v288, %v413
  %v424 = vadd.f32 %v289, %v413
  %v425 = vadd.f32 %v290, %v413
  %v426 = vadd.f32 %v291, %v413
  %v427 = vadd.f32 %v292, %v413
  %v428 = vadd.f32 %v293, %v413
  %v429 = vadd.f32 %v294, %v413
  %v430 = vadd.f32 %v295, %v413
  %v431 = vadd.f32 %v296, %v413
  %v432 = vadd.f32 %v297, %v413
  %v433 = vadd.f32 %v298, %v413
  %v434 = vadd.f32 %v299, %v413
  %v435 = vadd.f32 %v300, %v413
  %v436 = vadd.f32 %v301, %v413
  %v437 = vadd.f32 %v302, %v413
  %v438 = vadd.f32 %v303, %v413
  %v439 = vadd.f32 %v304, %v413
  %v440 = vadd.f32 %v305, %v413
  %v441 = vadd.f32 %v306, %v413
  %v442 = vadd.f32 %v307, %v413
  %v443 = vadd.f32 %v308, %v413
  %v444 = vadd.f32 %v309, %v413
  %v445 = vadd.f32 %v310, %v413
  %v446 = vadd.f32 %v311, %v413
  %v447 = vadd.f32 %v312, %v413
  %v448 = vadd.f32 %v313, %v413
  %v449 = vadd.f32 %v314, %v413
  %v450 = vadd.f32 %v315, %v413
  %v451 = vadd.f32 %v316, %v413
  %v452 = vadd.f32 %v317, %v413
  %v453 = vadd.f32 %v318, %v413
  %v454 = vadd.f32 %v319, %v413
  %v455 = vadd.f32 %v320, %v413
  %v456 = vadd.f32 %v321, %v413
  %v457 = vadd.f32 %v322, %v413
  %v458 = vadd.f32 %v323, %v413
  %v459 = vadd.f32 %v324, %v413
  %v460 = vadd.f32 %v325, %v413
  %v461 = vadd.f32 %v326, %v413
  %v462 = vadd.f32 %v327, %v413
  %v463 = vadd.f32 %v328, %v413
  %v464 = vadd.f32 %v329, %v413
  %v465 = vadd.f32 %v330, %v413
  %v466 = vadd.f32 %v331, %v413
  %v467 = vadd.f32 %v332, %v413
  %v468 = vadd.f32 %v333, %v413
  %v469 = vadd.f32 %v334, %v413
  %v470 = vadd.f32 %v335, %v413
  %v471 = vadd.f32 %v336, %v413
  %v472 = vadd.f32 %v337, %v413
  %v473 = vadd.f32 %v338, %v413
  %v474 = vadd.f32 %v339, %v413
  %v475 = vadd.f32 %v340, %v413
  %v476 = vadd.f32 %v341, %v413
  %v477 = vadd.f32 %v342, %v413
  %v478 = vadd.f32 %v343, %v413
  %v479 = vadd.f32 %v344, %v413
  %v480 = vadd.f32 %v345, %v413
  %v481 = vadd.f32 %v346, %v413
  %v482 = vadd.f32 %v347, %v413
  %v483 = vadd.f32 %v348, %v413
  %v484 = vadd.f32 %v349, %v413
  %v485 = vadd.f32 %v350, %v413
  %v486 = vadd.f32 %v351, %v413
  %v487 = vadd.f32 %v352, %v413
  %v488 = vadd.f32 %v353, %v413
  %v489 = vadd.f32 %v354, %v413
  %v490 = vadd.f32 %v355, %v413
  %v491 = vadd.f32 %v356, %v413
  %v492 = vadd.f32 %v357, %v413
  %v493 = vadd.f32 %v358, %v413
  %v494 = vadd.f32 %v359, %v413
  %v495 = vadd.f32 %v360, %v413
  %v496 = vadd.f32 %v361, %v413
  %v497 = vadd.f32 %v362, %v413
  %v498 = vadd.f32 %v363, %v413
  %v499 = vadd.f32 %v364, %v413
  %v500 = vadd.f32 %v365, %v413
  %v501 = vadd.f32 %v366, %v413
  %v502 = vadd.f32 %v367, %v413
  %v503 = vadd.f32 %v368, %v413
  %v504 = vadd.f32 %v369, %v413
  %v505 = vadd.f32 %v370, %v413
  %v506 = vadd.f32 %v371, %v413
  %v507 = vadd.f32 %v372, %v413
  %v508 = vadd.f32 %v373, %v413
  %v509 = vadd.f32 %v374, %v413
  %v510 = vadd.f32 %v375, %v413
  %v511 = vadd.f32 %v376, %v413
  %v512 = vadd.f32 %v377, %v413
  %v513 = vadd.f32 %v378, %v413
  %v514 = vadd.f32 %v379, %v413
  %v515 = vadd.f32 %v380, %v413
  %v516 = vadd.f32 %v381, %v413
  %v517 = vadd.f32 %v382, %v413
  %v518 = vadd.f32 %v383, %v413
  %v519 = vadd.f32 %v384, %v413
  %v520 = vadd.f32 %v385, %v413
  %v521 = vadd.f32 %v386, %v413
  %v522 = vadd.f32 %v387, %v413
  %v523 = vadd.f32 %v388, %v413
  %v524 = vadd.f32 %v389, %v413
  %v525 = vadd.f32 %v390, %v413
  %v526 = vadd.f32 %v391, %v413
  %v527 = vadd.f32 %v392, %v413
  %v528 = vadd.f32 %v393, %v413
  %v529 = vadd.f32 %v394, %v413
  %v530 = vadd.f32 %v395, %v413
  %v531 = vadd.f32 %v396, %v413
  %v532 = vadd.f32 %v397, %v413
  %v533 = vadd.f32 %v398, %v413
  %v534 = vadd.f32 %v399, %v413
  %v535 = vadd.f32 %v400, %v413
  %v536 = vadd.f32 %v401, %v413
  %v537 = vadd.f32 %v402, %v413
  %v538 = vadd.f32 %v403, %v413
  %v539 = vadd.f32 %v404, %v413
  %v540 = vadd.f32 %v405, %v413
  %v541 = vadd.f32 %v406, %v413
  %v542 = vadd.f32 %v407, %v413
  %v543 = vmax.f32 %v415, 0.0
  %v544 = vmax.f32 %v416, 0.0
  %v545 = vmax.f32 %v417, 0.0
  %v546 = vmax.f32 %v418, 0.0
  %v547 = vmax.f32 %v419, 0.0
  %v548 = vmax.f32 %v420, 0.0
  %v549 = vmax.f32 %v421, 0.0
  %v550 = vmax.f32 %v422, 0.0
  %v551 = vmax.f32 %v423, 0.0
  %v552 = vmax.f32 %v424, 0.0
  %v553 = vmax.f32 %v425, 0.0
  %v554 = vmax.f32 %v426, 0.0
  %v555 = vmax.f32 %v427, 0.0
  %v556 = vmax.f32 %v428, 0.0
  %v557 = vmax.f32 %v429, 0.0
  %v558 = vmax.f32 %v430, 0.0
  %v559 = vmax.f32 %v431, 0.0
  %v560 = vmax.f32 %v432, 0.0
  %v561 = vmax.f32 %v433, 0.0
  %v562 = vmax.f32 %v434, 0.0
  %v563 = vmax.f32 %v435, 0.0
  %v564 = vmax.f32 %v436, 0.0
  %v565 = vmax.f32 %v437, 0.0
  %v566 = vmax.f32 %v438, 0.0
  %v567 = vmax.f32 %v439, 0.0
  %v568 = vmax.f32 %v440, 0.0
  %v569 = vmax.f32 %v441, 0.0
  %v570 = vmax.f32 %v442, 0.0
  %v571 = vmax.f32 %v443, 0.0
  %v572 = vmax.f32 %v444, 0.0
  %v573 = vmax.f32 %v445, 0.0
  %v574 = vmax.f32 %v446, 0.0
  %v575 = vmax.f32 %v447, 0.0
  %v576 = vmax.f32 %v448, 0.0
  %v577 = vmax.f32 %v449, 0.0
  %v578 = vmax.f32 %v450, 0.0
  %v579 = vmax.f32 %v451, 0.0
  %v580 = vmax.f32 %v452, 0.0
  %v581 = vmax.f32 %v453, 0.0
  %v582 = vmax.f32 %v454, 0.0
  %v583 = vmax.f32 %v455, 0.0
  %v584 = vmax.f32 %v456, 0.0
  %v585 = vmax.f32 %v457, 0.0
  %v586 = vmax.f32 %v458, 0.0
  %v587 = vmax.f32 %v459, 0.0
  %v588 = vmax.f32 %v460, 0.0
  %v589 = vmax.f32 %v461, 0.0
  %v590 = vmax.f32 %v462, 0.0
  %v591 = vmax.f32 %v463, 0.0
  %v592 = vmax.f32 %v464, 0.0
  %v593 = vmax.f32 %v465, 0.0
  %v594 = vmax.f32 %v466, 0.0
  %v595 = vmax.f32 %v467, 0.0
  %v596 = vmax.f32 %v468, 0.0
  %v597 = vmax.f32 %v469, 0.0
  %v598 = vmax.f32 %v470, 0.0
  %v599 = vmax.f32 %v471, 0.0
  %v600 = vmax.f32 %v472, 0.0
  %v601 = vmax.f32 %v473, 0.0
  %v602 = vmax.f32 %v474, 0.0
  %v603 = vmax.f32 %v475, 0.0
  %v604 = vmax.f32 %v476, 0.0
  %v605 = vmax.f32 %v477, 0.0
  %v606 = vmax.f32 %v478, 0.0
  %v607 = vmax.f32 %v479, 0.0
  %v608 = vmax.f32 %v480, 0.0
  %v609 = vmax.f32 %v481, 0.0
  %v610 = vmax.f32 %v482, 0.0
  %v611 = vmax.f32 %v483, 0.0
  %v612 = vmax.f32 %v484, 0.0
  %v613 = vmax.f32 %v485, 0.0
  %v614 = vmax.f32 %v486, 0.0
  %v615 = vmax.f32 %v487, 0.0
  %v616 = vmax.f32 %v488, 0.0
  %v617 = vmax.f32 %v489, 0.0
  %v618 = vmax.f32 %v490, 0.0
  %v619 = vmax.f32 %v491, 0.0
  %v620 = vmax.f32 %v492, 0.0
  %v621 = vmax.f32 %v493, 0.0
  %v622 = vmax.f32 %v494, 0.0
  %v623 = vmax.f32 %v495, 0.0
  %v624 = vmax.f32 %v496, 0.0
  %v625 = vmax.f32 %v497, 0.0
  %v626 = vmax.f32 %v498, 0.0
  %v627 = vmax.f32 %v499, 0.0
  %v628 = vmax.f32 %v500, 0.0
  %v629 = vmax.f32 %v501, 0.0
  %v630 = vmax.f32 %v502, 0.0
  %v631 = vmax.f32 %v503, 0.0
  %v632 = vmax.f32 %v504, 0.0
  %v633 = vmax.f32 %v505, 0.0
  %v634 = vmax.f32 %v506, 0.0
  %v635 = vmax.f32 %v507, 0.0
  %v636 = vmax.f32 %v508, 0.0
  %v637 = vmax.f32 %v509, 0.0
  %v638 = vmax.f32 %v510, 0.0
  %v639 = vmax.f32 %v511, 0.0
  %v640 = vmax.f32 %v512, 0.0
  %v641 = vmax.f32 %v513, 0.0
  %v642 = vmax.f32 %v514, 0.0
  %v643 = vmax.f32 %v515, 0.0
  %v644 = vmax.f32 %v516, 0.0
  %v645 = vmax.f32 %v517, 0.0
  %v646 = vmax.f32 %v518, 0.0
  %v647 = vmax.f32 %v519, 0.0
  %v648 = vmax.f32 %v520, 0.0
  %v649 = vmax.f32 %v521, 0.0
  %v650 = vmax.f32 %v522, 0.0
  %v651 = vmax.f32 %v523, 0.0
  %v652 = vmax.f32 %v524, 0.0
  %v653 = vmax.f32 %v525, 0.0
  %v654 = vmax.f32 %v526, 0.0
  %v655 = vmax.f32 %v527, 0.0
  %v656 = vmax.f32 %v528, 0.0
  %v657 = vmax.f32 %v529, 0.0
  %v658 = vmax.f32 %v530, 0.0
  %v659 = vmax.f32 %v531, 0.0
  %v660 = vmax.f32 %v532, 0.0
  %v661 = vmax.f32 %v533, 0.0
  %v662 = vmax.f32 %v534, 0.0
  %v663 = vmax.f32 %v535, 0.0
  %v664 = vmax.f32 %v536, 0.0
  %v665 = vmax.f32 %v537, 0.0
  %v666 = vmax.f32 %v538, 0.0
  %v667 = vmax.f32 %v539, 0.0
  %v668 = vmax.f32 %v540, 0.0
  %v669 = vmax.f32 %v541, 0.0
  %v670 = vmax.f32 %v542, 0.0
  %v671 = vld [vmem:[%s3] sm:$0xf]
  %v672 = vld [vmem:[%s3 + $0x4] sm:$0xf]
  %v673 = vld [vmem:[%s3 + $0x8] sm:$0xf]
  %v674 = vld [vmem:[%s3 + $0xc] sm:$0xf]
  %v675 = vld [vmem:[%s3 + $0x10] sm:$0xf]
  %v676 = vld [vmem:[%s3 + $0x14] sm:$0xf]
  %v677 = vld [vmem:[%s3 + $0x18] sm:$0xf]
  %v678 = vld [vmem:[%s3 + $0x1c] sm:$0xf]
  %v679 = vld [vmem:[%s3 + $0x20] sm:$0xf]
  %v680 = vld [vmem:[%s3 + $0x24] sm:$0xf]
  %v681 = vld [vmem:[%s3 + $0x28] sm:$0xf]
  %v682 = vld [vmem:[%s3 + $0x2c] sm:$0xf]
  %v683 = vld [vmem:[%s3 + $0x30] sm:$0xf]
  %v684 = vld [vmem:[%s3 + $0x34] sm:$0xf]
  %v685 = vld [vmem:[%s3 + $0x38] sm:$0xf]
  %v686 = vld [vmem:[%s3 + $0x3c] sm:$0xf]
  %v687 = vld [vmem:[%s3 + $0x40] sm:$0xf]
  %v688 = vld [vmem:[%s3 + $0x44] sm:$0xf]
  %v689 = vld [vmem:[%s3 + $0x48] sm:$0xf]
  %v690 = vld [vmem:[%s3 + $0x4c] sm:$0xf]
  %v691 = vld [vmem:[%s3 + $0x50] sm:$0xf]
  %v692 = vld [vmem:[%s3 + $0x54] sm:$0xf]
  %v693 = vld [vmem:[%s3 + $0x58] sm:$0xf]
  %v694 = vld [vmem:[%s3 + $0x5c] sm:$0xf]
  %v695 = vld [vmem:[%s3 + $0x60] sm:$0xf]
  %v696 = vld [vmem:[%s3 + $0x64] sm:$0xf]
  %v697 = vld [vmem:[%s3 + $0x68] sm:$0xf]
  %v698 = vld [vmem:[%s3 + $0x6c] sm:$0xf]
  %v699 = vld [vmem:[%s3 + $0x70] sm:$0xf]
  %v700 = vld [vmem:[%s3 + $0x74] sm:$0xf]
  %v701 = vld [vmem:[%s3 + $0x78] sm:$0xf]
  %v702 = vld [vmem:[%s3 + $0x7c] sm:$0xf]
  %v703 = vld [vmem:[%s3 + $0x80] sm:$0xf]
  %v704 = vld [vmem:[%s3 + $0x84] sm:$0xf]
  %v705 = vld [vmem:[%s3 + $0x88] sm:$0xf]
  %v706 = vld [vmem:[%s3 + $0x8c] sm:$0xf]
  %v707 = vld [vmem:[%s3 + $0x90] sm:$0xf]
  %v708 = vld [vmem:[%s3 + $0x94] sm:$0xf]
  %v709 = vld [vmem:[%s3 + $0x98] sm:$0xf]
  %v710 = vld [vmem:[%s3 + $0x9c] sm:$0xf]
  %v711 = vld [vmem:[%s3 + $0xa0] sm:$0xf]
  %v712 = vld [vmem:[%s3 + $0xa4] sm:$0xf]
  %v713 = vld [vmem:[%s3 + $0xa8] sm:$0xf]
  %v714 = vld [vmem:[%s3 + $0xac] sm:$0xf]
  %v715 = vld [vmem:[%s3 + $0xb0] sm:$0xf]
  %v716 = vld [vmem:[%s3 + $0xb4] sm:$0xf]
  %v717 = vld [vmem:[%s3 + $0xb8] sm:$0xf]
  %v718 = vld [vmem:[%s3 + $0xbc] sm:$0xf]
  %v719 = vld [vmem:[%s3 + $0xc0] sm:$0xf]
  %v720 = vld [vmem:[%s3 + $0xc4] sm:$0xf]
  %v721 = vld [vmem:[%s3 + $0xc8] sm:$0xf]
  %v722 = vld [vmem:[%s3 + $0xcc] sm:$0xf]
  %v723 = vld [vmem:[%s3 + $0xd0] sm:$0xf]
  %v724 = vld [vmem:[%s3 + $0xd4] sm:$0xf]
  %v725 = vld [vmem:[%s3 + $0xd8] sm:$0xf]
  %v726 = vld [vmem:[%s3 + $0xdc] sm:$0xf]
  %v727 = vld [vmem:[%s3 + $0xe0] sm:$0xf]
  %v728 = vld [vmem:[%s3 + $0xe4] sm:$0xf]
  %v729 = vld [vmem:[%s3 + $0xe8] sm:$0xf]
  %v730 = vld [vmem:[%s3 + $0xec] sm:$0xf]
  %v731 = vld [vmem:[%s3 + $0xf0] sm:$0xf]
  %v732 = vld [vmem:[%s3 + $0xf4] sm:$0xf]
  %v733 = vld [vmem:[%s3 + $0xf8] sm:$0xf]
  %v734 = vld [vmem:[%s3 + $0xfc] sm:$0xf]
  %v735 = vld [vmem:[%s3 + $0x100] sm:$0xf]
  %v736 = vld [vmem:[%s3 + $0x104] sm:$0xf]
  %v737 = vld [vmem:[%s3 + $0x108] sm:$0xf]
  %v738 = vld [vmem:[%s3 + $0x10c] sm:$0xf]
  %v739 = vld [vmem:[%s3 + $0x110] sm:$0xf]
  %v740 = vld [vmem:[%s3 + $0x114] sm:$0xf]
  %v741 = vld [vmem:[%s3 + $0x118] sm:$0xf]
  %v742 = vld [vmem:[%s3 + $0x11c] sm:$0xf]
  %v743 = vld [vmem:[%s3 + $0x120] sm:$0xf]
  %v744 = vld [vmem:[%s3 + $0x124] sm:$0xf]
  %v745 = vld [vmem:[%s3 + $0x128] sm:$0xf]
  %v746 = vld [vmem:[%s3 + $0x12c] sm:$0xf]
  %v747 = vld [vmem:[%s3 + $0x130] sm:$0xf]
  %v748 = vld [vmem:[%s3 + $0x134] sm:$0xf]
  %v749 = vld [vmem:[%s3 + $0x138] sm:$0xf]
  %v750 = vld [vmem:[%s3 + $0x13c] sm:$0xf]
  %v751 = vld [vmem:[%s3 + $0x140] sm:$0xf]
  %v752 = vld [vmem:[%s3 + $0x144] sm:$0xf]
  %v753 = vld [vmem:[%s3 + $0x148] sm:$0xf]
  %v754 = vld [vmem:[%s3 + $0x14c] sm:$0xf]
  %v755 = vld [vmem:[%s3 + $0x150] sm:$0xf]
  %v756 = vld [vmem:[%s3 + $0x154] sm:$0xf]
  %v757 = vld [vmem:[%s3 + $0x158] sm:$0xf]
  %v758 = vld [vmem:[%s3 + $0x15c] sm:$0xf]
  %v759 = vld [vmem:[%s3 + $0x160] sm:$0xf]
  %v760 = vld [vmem:[%s3 + $0x164] sm:$0xf]
  %v761 = vld [vmem:[%s3 + $0x168] sm:$0xf]
  %v762 = vld [vmem:[%s3 + $0x16c] sm:$0xf]
  %v763 = vld [vmem:[%s3 + $0x170] sm:$0xf]
  %v764 = vld [vmem:[%s3 + $0x174] sm:$0xf]
  %v765 = vld [vmem:[%s3 + $0x178] sm:$0xf]
  %v766 = vld [vmem:[%s3 + $0x17c] sm:$0xf]
  %v767 = vld [vmem:[%s3 + $0x180] sm:$0xf]
  %v768 = vld [vmem:[%s3 + $0x184] sm:$0xf]
  %v769 = vld [vmem:[%s3 + $0x188] sm:$0xf]
  %v770 = vld [vmem:[%s3 + $0x18c] sm:$0xf]
  %v771 = vld [vmem:[%s3 + $0x190] sm:$0xf]
  %v772 = vld [vmem:[%s3 + $0x194] sm:$0xf]
  %v773 = vld [vmem:[%s3 + $0x198] sm:$0xf]
  %v774 = vld [vmem:[%s3 + $0x19c] sm:$0xf]
  %v775 = vld [vmem:[%s3 + $0x1a0] sm:$0xf]
  %v776 = vld [vmem:[%s3 + $0x1a4] sm:$0xf]
  %v777 = vld [vmem:[%s3 + $0x1a8] sm:$0xf]
  %v778 = vld [vmem:[%s3 + $0x1ac] sm:$0xf]
  %v779 = vld [vmem:[%s3 + $0x1b0] sm:$0xf]
  %v780 = vld [vmem:[%s3 + $0x1b4] sm:$0xf]
  %v781 = vld [vmem:[%s3 + $0x1b8] sm:$0xf]
  %v782 = vld [vmem:[%s3 + $0x1bc] sm:$0xf]
  %v783 = vld [vmem:[%s3 + $0x1c0] sm:$0xf]
  %v784 = vld [vmem:[%s3 + $0x1c4] sm:$0xf]
  %v785 = vld [vmem:[%s3 + $0x1c8] sm:$0xf]
  %v786 = vld [vmem:[%s3 + $0x1cc] sm:$0xf]
  %v787 = vld [vmem:[%s3 + $0x1d0] sm:$0xf]
  %v788 = vld [vmem:[%s3 + $0x1d4] sm:$0xf]
  %v789 = vld [vmem:[%s3 + $0x1d8] sm:$0xf]
  %v790 = vld [vmem:[%s3 + $0x1dc] sm:$0xf]
  %v791 = vld [vmem:[%s3 + $0x1e0] sm:$0xf]
  %v792 = vld [vmem:[%s3 + $0x1e4] sm:$0xf]
  %v793 = vld [vmem:[%s3 + $0x1e8] sm:$0xf]
  %v794 = vld [vmem:[%s3 + $0x1ec] sm:$0xf]
  %v795 = vld [vmem:[%s3 + $0x1f0] sm:$0xf]
  %v796 = vld [vmem:[%s3 + $0x1f4] sm:$0xf]
  %v797 = vld [vmem:[%s3 + $0x1f8] sm:$0xf]
  %v798 = vld [vmem:[%s3 + $0x1fc] sm:$0xf]
  %v799 = vunpack.c.l.bf16 %v671
  %v800 = vunpack.c.l.bf16 %v672
  %v801 = vunpack.c.l.bf16 %v673
  %v802 = vunpack.c.l.bf16 %v674
  %v803 = vunpack.c.l.bf16 %v675
  %v804 = vunpack.c.l.bf16 %v676
  %v805 = vunpack.c.l.bf16 %v677
  %v806 = vunpack.c.l.bf16 %v678
  %v807 = vunpack.c.l.bf16 %v679
  %v808 = vunpack.c.l.bf16 %v680
  %v809 = vunpack.c.l.bf16 %v681
  %v810 = vunpack.c.l.bf16 %v682
  %v811 = vunpack.c.l.bf16 %v683
  %v812 = vunpack.c.l.bf16 %v684
  %v813 = vunpack.c.l.bf16 %v685
  %v814 = vunpack.c.l.bf16 %v686
  %v815 = vunpack.c.l.bf16 %v687
  %v816 = vunpack.c.l.bf16 %v688
  %v817 = vunpack.c.l.bf16 %v689
  %v818 = vunpack.c.l.bf16 %v690
  %v819 = vunpack.c.l.bf16 %v691
  %v820 = vunpack.c.l.bf16 %v692
  %v821 = vunpack.c.l.bf16 %v693
  %v822 = vunpack.c.l.bf16 %v694
  %v823 = vunpack.c.l.bf16 %v695
  %v824 = vunpack.c.l.bf16 %v696
  %v825 = vunpack.c.l.bf16 %v697
  %v826 = vunpack.c.l.bf16 %v698
  %v827 = vunpack.c.l.bf16 %v699
  %v828 = vunpack.c.l.bf16 %v700
  %v829 = vunpack.c.l.bf16 %v701
  %v830 = vunpack.c.l.bf16 %v702
  %v831 = vunpack.c.l.bf16 %v703
  %v832 = vunpack.c.l.bf16 %v704
  %v833 = vunpack.c.l.bf16 %v705
  %v834 = vunpack.c.l.bf16 %v706
  %v835 = vunpack.c.l.bf16 %v707
  %v836 = vunpack.c.l.bf16 %v708
  %v837 = vunpack.c.l.bf16 %v709
  %v838 = vunpack.c.l.bf16 %v710
  %v839 = vunpack.c.l.bf16 %v711
  %v840 = vunpack.c.l.bf16 %v712
  %v841 = vunpack.c.l.bf16 %v713
  %v842 = vunpack.c.l.bf16 %v714
  %v843 = vunpack.c.l.bf16 %v715
  %v844 = vunpack.c.l.bf16 %v716
  %v845 = vunpack.c.l.bf16 %v717
  %v846 = vunpack.c.l.bf16 %v718
  %v847 = vunpack.c.l.bf16 %v719
  %v848 = vunpack.c.l.bf16 %v720
  %v849 = vunpack.c.l.bf16 %v721
  %v850 = vunpack.c.l.bf16 %v722
  %v851 = vunpack.c.l.bf16 %v723
  %v852 = vunpack.c.l.bf16 %v724
  %v853 = vunpack.c.l.bf16 %v725
  %v854 = vunpack.c.l.bf16 %v726
  %v855 = vunpack.c.l.bf16 %v727
  %v856 = vunpack.c.l.bf16 %v728
  %v857 = vunpack.c.l.bf16 %v729
  %v858 = vunpack.c.l.bf16 %v730
  %v859 = vunpack.c.l.bf16 %v731
  %v860 = vunpack.c.l.bf16 %v732
  %v861 = vunpack.c.l.bf16 %v733
  %v862 = vunpack.c.l.bf16 %v734
  %v863 = vunpack.c.l.bf16 %v735
  %v864 = vunpack.c.l.bf16 %v736
  %v865 = vunpack.c.l.bf16 %v737
  %v866 = vunpack.c.l.bf16 %v738
  %v867 = vunpack.c.l.bf16 %v739
  %v868 = vunpack.c.l.bf16 %v740
  %v869 = vunpack.c.l.bf16 %v741
  %v870 = vunpack.c.l.bf16 %v742
  %v871 = vunpack.c.l.bf16 %v743
  %v872 = vunpack.c.l.bf16 %v744
  %v873 = vunpack.c.l.bf16 %v745
  %v874 = vunpack.c.l.bf16 %v746
  %v875 = vunpack.c.l.bf16 %v747
  %v876 = vunpack.c.l.bf16 %v748
  %v877 = vunpack.c.l.bf16 %v749
  %v878 = vunpack.c.l.bf16 %v750
  %v879 = vunpack.c.l.bf16 %v751
  %v880 = vunpack.c.l.bf16 %v752
  %v881 = vunpack.c.l.bf16 %v753
  %v882 = vunpack.c.l.bf16 %v754
  %v883 = vunpack.c.l.bf16 %v755
  %v884 = vunpack.c.l.bf16 %v756
  %v885 = vunpack.c.l.bf16 %v757
  %v886 = vunpack.c.l.bf16 %v758
  %v887 = vunpack.c.l.bf16 %v759
  %v888 = vunpack.c.l.bf16 %v760
  %v889 = vunpack.c.l.bf16 %v761
  %v890 = vunpack.c.l.bf16 %v762
  %v891 = vunpack.c.l.bf16 %v763
  %v892 = vunpack.c.l.bf16 %v764
  %v893 = vunpack.c.l.bf16 %v765
  %v894 = vunpack.c.l.bf16 %v766
  %v895 = vunpack.c.l.bf16 %v767
  %v896 = vunpack.c.l.bf16 %v768
  %v897 = vunpack.c.l.bf16 %v769
  %v898 = vunpack.c.l.bf16 %v770
  %v899 = vunpack.c.l.bf16 %v771
  %v900 = vunpack.c.l.bf16 %v772
  %v901 = vunpack.c.l.bf16 %v773
  %v902 = vunpack.c.l.bf16 %v774
  %v903 = vunpack.c.l.bf16 %v775
  %v904 = vunpack.c.l.bf16 %v776
  %v905 = vunpack.c.l.bf16 %v777
  %v906 = vunpack.c.l.bf16 %v778
  %v907 = vunpack.c.l.bf16 %v779
  %v908 = vunpack.c.l.bf16 %v780
  %v909 = vunpack.c.l.bf16 %v781
  %v910 = vunpack.c.l.bf16 %v782
  %v911 = vunpack.c.l.bf16 %v783
  %v912 = vunpack.c.l.bf16 %v784
  %v913 = vunpack.c.l.bf16 %v785
  %v914 = vunpack.c.l.bf16 %v786
  %v915 = vunpack.c.l.bf16 %v787
  %v916 = vunpack.c.l.bf16 %v788
  %v917 = vunpack.c.l.bf16 %v789
  %v918 = vunpack.c.l.bf16 %v790
  %v919 = vunpack.c.l.bf16 %v791
  %v920 = vunpack.c.l.bf16 %v792
  %v921 = vunpack.c.l.bf16 %v793
  %v922 = vunpack.c.l.bf16 %v794
  %v923 = vunpack.c.l.bf16 %v795
  %v924 = vunpack.c.l.bf16 %v796
  %v925 = vunpack.c.l.bf16 %v797
  %v926 = vunpack.c.l.bf16 %v798
  %v927 = vadd.f32 %v543, %v799
  %v928 = vadd.f32 %v544, %v800
  %v929 = vadd.f32 %v545, %v801
  %v930 = vadd.f32 %v546, %v802
  %v931 = vadd.f32 %v547, %v803
  %v932 = vadd.f32 %v548, %v804
  %v933 = vadd.f32 %v549, %v805
  %v934 = vadd.f32 %v550, %v806
  %v935 = vadd.f32 %v551, %v807
  %v936 = vadd.f32 %v552, %v808
  %v937 = vadd.f32 %v553, %v809
  %v938 = vadd.f32 %v554, %v810
  %v939 = vadd.f32 %v555, %v811
  %v940 = vadd.f32 %v556, %v812
  %v941 = vadd.f32 %v557, %v813
  %v942 = vadd.f32 %v558, %v814
  %v943 = vadd.f32 %v559, %v815
  %v944 = vadd.f32 %v560, %v816
  %v945 = vadd.f32 %v561, %v817
  %v946 = vadd.f32 %v562, %v818
  %v947 = vadd.f32 %v563, %v819
  %v948 = vadd.f32 %v564, %v820
  %v949 = vadd.f32 %v565, %v821
  %v950 = vadd.f32 %v566, %v822
  %v951 = vadd.f32 %v567, %v823
  %v952 = vadd.f32 %v568, %v824
  %v953 = vadd.f32 %v569, %v825
  %v954 = vadd.f32 %v570, %v826
  %v955 = vadd.f32 %v571, %v827
  %v956 = vadd.f32 %v572, %v828
  %v957 = vadd.f32 %v573, %v829
  %v958 = vadd.f32 %v574, %v830
  %v959 = vadd.f32 %v575, %v831
  %v960 = vadd.f32 %v576, %v832
  %v961 = vadd.f32 %v577, %v833
  %v962 = vadd.f32 %v578, %v834
  %v963 = vadd.f32 %v579, %v835
  %v964 = vadd.f32 %v580, %v836
  %v965 = vadd.f32 %v581, %v837
  %v966 = vadd.f32 %v582, %v838
  %v967 = vadd.f32 %v583, %v839
  %v968 = vadd.f32 %v584, %v840
  %v969 = vadd.f32 %v585, %v841
  %v970 = vadd.f32 %v586, %v842
  %v971 = vadd.f32 %v587, %v843
  %v972 = vadd.f32 %v588, %v844
  %v973 = vadd.f32 %v589, %v845
  %v974 = vadd.f32 %v590, %v846
  %v975 = vadd.f32 %v591, %v847
  %v976 = vadd.f32 %v592, %v848
  %v977 = vadd.f32 %v593, %v849
  %v978 = vadd.f32 %v594, %v850
  %v979 = vadd.f32 %v595, %v851
  %v980 = vadd.f32 %v596, %v852
  %v981 = vadd.f32 %v597, %v853
  %v982 = vadd.f32 %v598, %v854
  %v983 = vadd.f32 %v599, %v855
  %v984 = vadd.f32 %v600, %v856
  %v985 = vadd.f32 %v601, %v857
  %v986 = vadd.f32 %v602, %v858
  %v987 = vadd.f32 %v603, %v859
  %v988 = vadd.f32 %v604, %v860
  %v989 = vadd.f32 %v605, %v861
  %v990 = vadd.f32 %v606, %v862
  %v991 = vadd.f32 %v607, %v863
  %v992 = vadd.f32 %v608, %v864
  %v993 = vadd.f32 %v609, %v865
  %v994 = vadd.f32 %v610, %v866
  %v995 = vadd.f32 %v611, %v867
  %v996 = vadd.f32 %v612, %v868
  %v997 = vadd.f32 %v613, %v869
  %v998 = vadd.f32 %v614, %v870
  %v999 = vadd.f32 %v615, %v871
  %v1000 = vadd.f32 %v616, %v872
  %v1001 = vadd.f32 %v617, %v873
  %v1002 = vadd.f32 %v618, %v874
  %v1003 = vadd.f32 %v619, %v875
  %v1004 = vadd.f32 %v620, %v876
  %v1005 = vadd.f32 %v621, %v877
  %v1006 = vadd.f32 %v622, %v878
  %v1007 = vadd.f32 %v623, %v879
  %v1008 = vadd.f32 %v624, %v880
  %v1009 = vadd.f32 %v625, %v881
  %v1010 = vadd.f32 %v626, %v882
  %v1011 = vadd.f32 %v627, %v883
  %v1012 = vadd.f32 %v628, %v884
  %v1013 = vadd.f32 %v629, %v885
  %v1014 = vadd.f32 %v630, %v886
  %v1015 = vadd.f32 %v631, %v887
  %v1016 = vadd.f32 %v632, %v888
  %v1017 = vadd.f32 %v633, %v889
  %v1018 = vadd.f32 %v634, %v890
  %v1019 = vadd.f32 %v635, %v891
  %v1020 = vadd.f32 %v636, %v892
  %v1021 = vadd.f32 %v637, %v893
  %v1022 = vadd.f32 %v638, %v894
  %v1023 = vadd.f32 %v639, %v895
  %v1024 = vadd.f32 %v640, %v896
  %v1025 = vadd.f32 %v641, %v897
  %v1026 = vadd.f32 %v642, %v898
  %v1027 = vadd.f32 %v643, %v899
  %v1028 = vadd.f32 %v644, %v900
  %v1029 = vadd.f32 %v645, %v901
  %v1030 = vadd.f32 %v646, %v902
  %v1031 = vadd.f32 %v647, %v903
  %v1032 = vadd.f32 %v648, %v904
  %v1033 = vadd.f32 %v649, %v905
  %v1034 = vadd.f32 %v650, %v906
  %v1035 = vadd.f32 %v651, %v907
  %v1036 = vadd.f32 %v652, %v908
  %v1037 = vadd.f32 %v653, %v909
  %v1038 = vadd.f32 %v654, %v910
  %v1039 = vadd.f32 %v655, %v911
  %v1040 = vadd.f32 %v656, %v912
  %v1041 = vadd.f32 %v657, %v913
  %v1042 = vadd.f32 %v658, %v914
  %v1043 = vadd.f32 %v659, %v915
  %v1044 = vadd.f32 %v660, %v916
  %v1045 = vadd.f32 %v661, %v917
  %v1046 = vadd.f32 %v662, %v918
  %v1047 = vadd.f32 %v663, %v919
  %v1048 = vadd.f32 %v664, %v920
  %v1049 = vadd.f32 %v665, %v921
  %v1050 = vadd.f32 %v666, %v922
  %v1051 = vadd.f32 %v667, %v923
  %v1052 = vadd.f32 %v668, %v924
  %v1053 = vadd.f32 %v669, %v925
  %v1054 = vadd.f32 %v670, %v926
  %v1055 = vpack.c.bf16 %v928, %v927
  %v1056 = vpack.c.bf16 %v930, %v929
  %v1057 = vpack.c.bf16 %v932, %v931
  %v1058 = vpack.c.bf16 %v934, %v933
  %v1059 = vpack.c.bf16 %v936, %v935
  %v1060 = vpack.c.bf16 %v938, %v937
  %v1061 = vpack.c.bf16 %v940, %v939
  %v1062 = vpack.c.bf16 %v942, %v941
  %v1063 = vpack.c.bf16 %v944, %v943
  %v1064 = vpack.c.bf16 %v946, %v945
  %v1065 = vpack.c.bf16 %v948, %v947
  %v1066 = vpack.c.bf16 %v950, %v949
  %v1067 = vpack.c.bf16 %v952, %v951
  %v1068 = vpack.c.bf16 %v954, %v953
  %v1069 = vpack.c.bf16 %v956, %v955
  %v1070 = vpack.c.bf16 %v958, %v957
  %v1071 = vpack.c.bf16 %v960, %v959
  %v1072 = vpack.c.bf16 %v962, %v961
  %v1073 = vpack.c.bf16 %v964, %v963
  %v1074 = vpack.c.bf16 %v966, %v965
  %v1075 = vpack.c.bf16 %v968, %v967
  %v1076 = vpack.c.bf16 %v970, %v969
  %v1077 = vpack.c.bf16 %v972, %v971
  %v1078 = vpack.c.bf16 %v974, %v973
  %v1079 = vpack.c.bf16 %v976, %v975
  %v1080 = vpack.c.bf16 %v978, %v977
  %v1081 = vpack.c.bf16 %v980, %v979
  %v1082 = vpack.c.bf16 %v982, %v981
  %v1083 = vpack.c.bf16 %v984, %v983
  %v1084 = vpack.c.bf16 %v986, %v985
  %v1085 = vpack.c.bf16 %v988, %v987
  %v1086 = vpack.c.bf16 %v990, %v989
  %v1087 = vpack.c.bf16 %v992, %v991
  %v1088 = vpack.c.bf16 %v994, %v993
  %v1089 = vpack.c.bf16 %v996, %v995
  %v1090 = vpack.c.bf16 %v998, %v997
  %v1091 = vpack.c.bf16 %v1000, %v999
  %v1092 = vpack.c.bf16 %v1002, %v1001
  %v1093 = vpack.c.bf16 %v1004, %v1003
  %v1094 = vpack.c.bf16 %v1006, %v1005
  %v1095 = vpack.c.bf16 %v1008, %v1007
  %v1096 = vpack.c.bf16 %v1010, %v1009
  %v1097 = vpack.c.bf16 %v1012, %v1011
  %v1098 = vpack.c.bf16 %v1014, %v1013
  %v1099 = vpack.c.bf16 %v1016, %v1015
  %v1100 = vpack.c.bf16 %v1018, %v1017
  %v1101 = vpack.c.bf16 %v1020, %v1019
  %v1102 = vpack.c.bf16 %v1022, %v1021
  %v1103 = vpack.c.bf16 %v1024, %v1023
  %v1104 = vpack.c.bf16 %v1026, %v1025
  %v1105 = vpack.c.bf16 %v1028, %v1027
  %v1106 = vpack.c.bf16 %v1030, %v1029
  %v1107 = vpack.c.bf16 %v1032, %v1031
  %v1108 = vpack.c.bf16 %v1034, %v1033
  %v1109 = vpack.c.bf16 %v1036, %v1035
  %v1110 = vpack.c.bf16 %v1038, %v1037
  %v1111 = vpack.c.bf16 %v1040, %v1039
  %v1112 = vpack.c.bf16 %v1042, %v1041
  %v1113 = vpack.c.bf16 %v1044, %v1043
  %v1114 = vpack.c.bf16 %v1046, %v1045
  %v1115 = vpack.c.bf16 %v1048, %v1047
  %v1116 = vpack.c.bf16 %v1050, %v1049
  %v1117 = vpack.c.bf16 %v1052, %v1051
  %v1118 = vpack.c.bf16 %v1054, %v1053
  %v1183 = vunpack.c.l.b16 %v1055
  %v1184 = vunpack.c.h.b16 %v1055
  %v1185 = vunpack.c.l.b16 %v1056
  %v1186 = vunpack.c.h.b16 %v1056
  %v1187 = vunpack.c.l.b16 %v1057
  %v1188 = vunpack.c.h.b16 %v1057
  %v1189 = vunpack.c.l.b16 %v1058
  %v1190 = vunpack.c.h.b16 %v1058
  %v1191 = vunpack.c.l.b16 %v1059
  %v1192 = vunpack.c.h.b16 %v1059
  %v1193 = vunpack.c.l.b16 %v1060
  %v1194 = vunpack.c.h.b16 %v1060
  %v1195 = vunpack.c.l.b16 %v1061
  %v1196 = vunpack.c.h.b16 %v1061
  %v1197 = vunpack.c.l.b16 %v1062
  %v1198 = vunpack.c.h.b16 %v1062
  %v1199 = vunpack.c.l.b16 %v1063
  %v1200 = vunpack.c.h.b16 %v1063
  %v1201 = vunpack.c.l.b16 %v1064
  %v1202 = vunpack.c.h.b16 %v1064
  %v1203 = vunpack.c.l.b16 %v1065
  %v1204 = vunpack.c.h.b16 %v1065
  %v1205 = vunpack.c.l.b16 %v1066
  %v1206 = vunpack.c.h.b16 %v1066
  %v1207 = vunpack.c.l.b16 %v1067
  %v1208 = vunpack.c.h.b16 %v1067
  %v1209 = vunpack.c.l.b16 %v1068
  %v1210 = vunpack.c.h.b16 %v1068
  %v1211 = vunpack.c.l.b16 %v1069
  %v1212 = vunpack.c.h.b16 %v1069
  %v1213 = vunpack.c.l.b16 %v1070
  %v1214 = vunpack.c.h.b16 %v1070
  %v1215 = vunpack.c.l.b16 %v1071
  %v1216 = vunpack.c.h.b16 %v1071
  %v1217 = vunpack.c.l.b16 %v1072
  %v1218 = vunpack.c.h.b16 %v1072
  %v1219 = vunpack.c.l.b16 %v1073
  %v1220 = vunpack.c.h.b16 %v1073
  %v1221 = vunpack.c.l.b16 %v1074
  %v1222 = vunpack.c.h.b16 %v1074
  %v1223 = vunpack.c.l.b16 %v1075
  %v1224 = vunpack.c.h.b16 %v1075
  %v1225 = vunpack.c.l.b16 %v1076
  %v1226 = vunpack.c.h.b16 %v1076
  %v1227 = vunpack.c.l.b16 %v1077
  %v1228 = vunpack.c.h.b16 %v1077
  %v1229 = vunpack.c.l.b16 %v1078
  %v1230 = vunpack.c.h.b16 %v1078
  %v1231 = vunpack.c.l.b16 %v1079
  %v1232 = vunpack.c.h.b16 %v1079
  %v1233 = vunpack.c.l.b16 %v1080
  %v1234 = vunpack.c.h.b16 %v1080
  %v1235 = vunpack.c.l.b16 %v1081
  %v1236 = vunpack.c.h.b16 %v1081
  %v1237 = vunpack.c.l.b16 %v1082
  %v1238 = vunpack.c.h.b16 %v1082
  %v1239 = vunpack.c.l.b16 %v1083
  %v1240 = vunpack.c.h.b16 %v1083
  %v1241 = vunpack.c.l.b16 %v1084
  %v1242 = vunpack.c.h.b16 %v1084
  %v1243 = vunpack.c.l.b16 %v1085
  %v1244 = vunpack.c.h.b16 %v1085
  %v1245 = vunpack.c.l.b16 %v1086
  %v1246 = vunpack.c.h.b16 %v1086
  %v1247 = vunpack.c.l.b16 %v1087
  %v1248 = vunpack.c.h.b16 %v1087
  %v1249 = vunpack.c.l.b16 %v1088
  %v1250 = vunpack.c.h.b16 %v1088
  %v1251 = vunpack.c.l.b16 %v1089
  %v1252 = vunpack.c.h.b16 %v1089
  %v1253 = vunpack.c.l.b16 %v1090
  %v1254 = vunpack.c.h.b16 %v1090
  %v1255 = vunpack.c.l.b16 %v1091
  %v1256 = vunpack.c.h.b16 %v1091
  %v1257 = vunpack.c.l.b16 %v1092
  %v1258 = vunpack.c.h.b16 %v1092
  %v1259 = vunpack.c.l.b16 %v1093
  %v1260 = vunpack.c.h.b16 %v1093
  %v1261 = vunpack.c.l.b16 %v1094
  %v1262 = vunpack.c.h.b16 %v1094
  %v1263 = vunpack.c.l.b16 %v1095
  %v1264 = vunpack.c.h.b16 %v1095
  %v1265 = vunpack.c.l.b16 %v1096
  %v1266 = vunpack.c.h.b16 %v1096
  %v1267 = vunpack.c.l.b16 %v1097
  %v1268 = vunpack.c.h.b16 %v1097
  %v1269 = vunpack.c.l.b16 %v1098
  %v1270 = vunpack.c.h.b16 %v1098
  %v1271 = vunpack.c.l.b16 %v1099
  %v1272 = vunpack.c.h.b16 %v1099
  %v1273 = vunpack.c.l.b16 %v1100
  %v1274 = vunpack.c.h.b16 %v1100
  %v1275 = vunpack.c.l.b16 %v1101
  %v1276 = vunpack.c.h.b16 %v1101
  %v1277 = vunpack.c.l.b16 %v1102
  %v1278 = vunpack.c.h.b16 %v1102
  %v1279 = vunpack.c.l.b16 %v1103
  %v1280 = vunpack.c.h.b16 %v1103
  %v1281 = vunpack.c.l.b16 %v1104
  %v1282 = vunpack.c.h.b16 %v1104
  %v1283 = vunpack.c.l.b16 %v1105
  %v1284 = vunpack.c.h.b16 %v1105
  %v1285 = vunpack.c.l.b16 %v1106
  %v1286 = vunpack.c.h.b16 %v1106
  %v1287 = vunpack.c.l.b16 %v1107
  %v1288 = vunpack.c.h.b16 %v1107
  %v1289 = vunpack.c.l.b16 %v1108
  %v1290 = vunpack.c.h.b16 %v1108
  %v1291 = vunpack.c.l.b16 %v1109
  %v1292 = vunpack.c.h.b16 %v1109
  %v1293 = vunpack.c.l.b16 %v1110
  %v1294 = vunpack.c.h.b16 %v1110
  %v1295 = vunpack.c.l.b16 %v1111
  %v1296 = vunpack.c.h.b16 %v1111
  %v1297 = vunpack.c.l.b16 %v1112
  %v1298 = vunpack.c.h.b16 %v1112
  %v1299 = vunpack.c.l.b16 %v1113
  %v1300 = vunpack.c.h.b16 %v1113
  %v1301 = vunpack.c.l.b16 %v1114
  %v1302 = vunpack.c.h.b16 %v1114
  %v1303 = vunpack.c.l.b16 %v1115
  %v1304 = vunpack.c.h.b16 %v1115
  %v1305 = vunpack.c.l.b16 %v1116
  %v1306 = vunpack.c.h.b16 %v1116
  %v1307 = vunpack.c.l.b16 %v1117
  %v1308 = vunpack.c.h.b16 %v1117
  %v1309 = vunpack.c.l.b16 %v1118
  %v1310 = vunpack.c.h.b16 %v1118
  %v1311 = vpack.c.b16 %v1183, %v1183
  %v1312 = vpack.c.b16 %v1184, %v1184
  %v1313 = vpack.c.b16 %v1185, %v1185
  %v1314 = vpack.c.b16 %v1186, %v1186
  %v1315 = vpack.c.b16 %v1187, %v1187
  %v1316 = vpack.c.b16 %v1188, %v1188
  %v1317 = vpack.c.b16 %v1189, %v1189
  %v1318 = vpack.c.b16 %v1190, %v1190
  %v1319 = vpack.c.b16 %v1191, %v1191
  %v1320 = vpack.c.b16 %v1192, %v1192
  %v1321 = vpack.c.b16 %v1193, %v1193
  %v1322 = vpack.c.b16 %v1194, %v1194
  %v1323 = vpack.c.b16 %v1195, %v1195
  %v1324 = vpack.c.b16 %v1196, %v1196
  %v1325 = vpack.c.b16 %v1197, %v1197
  %v1326 = vpack.c.b16 %v1198, %v1198
  %v1327 = vpack.c.b16 %v1199, %v1199
  %v1328 = vpack.c.b16 %v1200, %v1200
  %v1329 = vpack.c.b16 %v1201, %v1201
  %v1330 = vpack.c.b16 %v1202, %v1202
  %v1331 = vpack.c.b16 %v1203, %v1203
  %v1332 = vpack.c.b16 %v1204, %v1204
  %v1333 = vpack.c.b16 %v1205, %v1205
  %v1334 = vpack.c.b16 %v1206, %v1206
  %v1335 = vpack.c.b16 %v1207, %v1207
  %v1336 = vpack.c.b16 %v1208, %v1208
  %v1337 = vpack.c.b16 %v1209, %v1209
  %v1338 = vpack.c.b16 %v1210, %v1210
  %v1339 = vpack.c.b16 %v1211, %v1211
  %v1340 = vpack.c.b16 %v1212, %v1212
  %v1341 = vpack.c.b16 %v1213, %v1213
  %v1342 = vpack.c.b16 %v1214, %v1214
  %v1343 = vpack.c.b16 %v1215, %v1215
  %v1344 = vpack.c.b16 %v1216, %v1216
  %v1345 = vpack.c.b16 %v1217, %v1217
  %v1346 = vpack.c.b16 %v1218, %v1218
  %v1347 = vpack.c.b16 %v1219, %v1219
  %v1348 = vpack.c.b16 %v1220, %v1220
  %v1349 = vpack.c.b16 %v1221, %v1221
  %v1350 = vpack.c.b16 %v1222, %v1222
  %v1351 = vpack.c.b16 %v1223, %v1223
  %v1352 = vpack.c.b16 %v1224, %v1224
  %v1353 = vpack.c.b16 %v1225, %v1225
  %v1354 = vpack.c.b16 %v1226, %v1226
  %v1355 = vpack.c.b16 %v1227, %v1227
  %v1356 = vpack.c.b16 %v1228, %v1228
  %v1357 = vpack.c.b16 %v1229, %v1229
  %v1358 = vpack.c.b16 %v1230, %v1230
  %v1359 = vpack.c.b16 %v1231, %v1231
  %v1360 = vpack.c.b16 %v1232, %v1232
  %v1361 = vpack.c.b16 %v1233, %v1233
  %v1362 = vpack.c.b16 %v1234, %v1234
  %v1363 = vpack.c.b16 %v1235, %v1235
  %v1364 = vpack.c.b16 %v1236, %v1236
  %v1365 = vpack.c.b16 %v1237, %v1237
  %v1366 = vpack.c.b16 %v1238, %v1238
  %v1367 = vpack.c.b16 %v1239, %v1239
  %v1368 = vpack.c.b16 %v1240, %v1240
  %v1369 = vpack.c.b16 %v1241, %v1241
  %v1370 = vpack.c.b16 %v1242, %v1242
  %v1371 = vpack.c.b16 %v1243, %v1243
  %v1372 = vpack.c.b16 %v1244, %v1244
  %v1373 = vpack.c.b16 %v1245, %v1245
  %v1374 = vpack.c.b16 %v1246, %v1246
  %v1375 = vpack.c.b16 %v1247, %v1247
  %v1376 = vpack.c.b16 %v1248, %v1248
  %v1377 = vpack.c.b16 %v1249, %v1249
  %v1378 = vpack.c.b16 %v1250, %v1250
  %v1379 = vpack.c.b16 %v1251, %v1251
  %v1380 = vpack.c.b16 %v1252, %v1252
  %v1381 = vpack.c.b16 %v1253, %v1253
  %v1382 = vpack.c.b16 %v1254, %v1254
  %v1383 = vpack.c.b16 %v1255, %v1255
  %v1384 = vpack.c.b16 %v1256, %v1256
  %v1385 = vpack.c.b16 %v1257, %v1257
  %v1386 = vpack.c.b16 %v1258, %v1258
  %v1387 = vpack.c.b16 %v1259, %v1259
  %v1388 = vpack.c.b16 %v1260, %v1260
  %v1389 = vpack.c.b16 %v1261, %v1261
  %v1390 = vpack.c.b16 %v1262, %v1262
  %v1391 = vpack.c.b16 %v1263, %v1263
  %v1392 = vpack.c.b16 %v1264, %v1264
  %v1393 = vpack.c.b16 %v1265, %v1265
  %v1394 = vpack.c.b16 %v1266, %v1266
  %v1395 = vpack.c.b16 %v1267, %v1267
  %v1396 = vpack.c.b16 %v1268, %v1268
  %v1397 = vpack.c.b16 %v1269, %v1269
  %v1398 = vpack.c.b16 %v1270, %v1270
  %v1399 = vpack.c.b16 %v1271, %v1271
  %v1400 = vpack.c.b16 %v1272, %v1272
  %v1401 = vpack.c.b16 %v1273, %v1273
  %v1402 = vpack.c.b16 %v1274, %v1274
  %v1403 = vpack.c.b16 %v1275, %v1275
  %v1404 = vpack.c.b16 %v1276, %v1276
  %v1405 = vpack.c.b16 %v1277, %v1277
  %v1406 = vpack.c.b16 %v1278, %v1278
  %v1407 = vpack.c.b16 %v1279, %v1279
  %v1408 = vpack.c.b16 %v1280, %v1280
  %v1409 = vpack.c.b16 %v1281, %v1281
  %v1410 = vpack.c.b16 %v1282, %v1282
  %v1411 = vpack.c.b16 %v1283, %v1283
  %v1412 = vpack.c.b16 %v1284, %v1284
  %v1413 = vpack.c.b16 %v1285, %v1285
  %v1414 = vpack.c.b16 %v1286, %v1286
  %v1415 = vpack.c.b16 %v1287, %v1287
  %v1416 = vpack.c.b16 %v1288, %v1288
  %v1417 = vpack.c.b16 %v1289, %v1289
  %v1418 = vpack.c.b16 %v1290, %v1290
  %v1419 = vpack.c.b16 %v1291, %v1291
  %v1420 = vpack.c.b16 %v1292, %v1292
  %v1421 = vpack.c.b16 %v1293, %v1293
  %v1422 = vpack.c.b16 %v1294, %v1294
  %v1423 = vpack.c.b16 %v1295, %v1295
  %v1424 = vpack.c.b16 %v1296, %v1296
  %v1425 = vpack.c.b16 %v1297, %v1297
  %v1426 = vpack.c.b16 %v1298, %v1298
  %v1427 = vpack.c.b16 %v1299, %v1299
  %v1428 = vpack.c.b16 %v1300, %v1300
  %v1429 = vpack.c.b16 %v1301, %v1301
  %v1430 = vpack.c.b16 %v1302, %v1302
  %v1431 = vpack.c.b16 %v1303, %v1303
  %v1432 = vpack.c.b16 %v1304, %v1304
  %v1433 = vpack.c.b16 %v1305, %v1305
  %v1434 = vpack.c.b16 %v1306, %v1306
  %v1435 = vpack.c.b16 %v1307, %v1307
  %v1436 = vpack.c.b16 %v1308, %v1308
  %v1437 = vpack.c.b16 %v1309, %v1309
  %v1438 = vpack.c.b16 %v1310, %v1310
  %1567 = vst [vmem:[%s4] sm:$0xf] %v1311
  %1568 = vst [vmem:[%s4 + $0x4] sm:$0xf] %v1312
  %1569 = vst [vmem:[%s4 + $0x8] sm:$0xf] %v1313
  %1570 = vst [vmem:[%s4 + $0xc] sm:$0xf] %v1314
  %1571 = vst [vmem:[%s4 + $0x10] sm:$0xf] %v1315
  %1572 = vst [vmem:[%s4 + $0x14] sm:$0xf] %v1316
  %1573 = vst [vmem:[%s4 + $0x18] sm:$0xf] %v1317
  %1574 = vst [vmem:[%s4 + $0x1c] sm:$0xf] %v1318
  %1575 = vst [vmem:[%s4 + $0x20] sm:$0xf] %v1319
  %1576 = vst [vmem:[%s4 + $0x24] sm:$0xf] %v1320
  %1577 = vst [vmem:[%s4 + $0x28] sm:$0xf] %v1321
  %1578 = vst [vmem:[%s4 + $0x2c] sm:$0xf] %v1322
  %1579 = vst [vmem:[%s4 + $0x30] sm:$0xf] %v1323
  %1580 = vst [vmem:[%s4 + $0x34] sm:$0xf] %v1324
  %1581 = vst [vmem:[%s4 + $0x38] sm:$0xf] %v1325
  %1582 = vst [vmem:[%s4 + $0x3c] sm:$0xf] %v1326
  %1583 = vst [vmem:[%s4 + $0x40] sm:$0xf] %v1327
  %1584 = vst [vmem:[%s4 + $0x44] sm:$0xf] %v1328
  %1585 = vst [vmem:[%s4 + $0x48] sm:$0xf] %v1329
  %1586 = vst [vmem:[%s4 + $0x4c] sm:$0xf] %v1330
  %1587 = vst [vmem:[%s4 + $0x50] sm:$0xf] %v1331
  %1588 = vst [vmem:[%s4 + $0x54] sm:$0xf] %v1332
  %1589 = vst [vmem:[%s4 + $0x58] sm:$0xf] %v1333
  %1590 = vst [vmem:[%s4 + $0x5c] sm:$0xf] %v1334
  %1591 = vst [vmem:[%s4 + $0x60] sm:$0xf] %v1335
  %1592 = vst [vmem:[%s4 + $0x64] sm:$0xf] %v1336
  %1593 = vst [vmem:[%s4 + $0x68] sm:$0xf] %v1337
  %1594 = vst [vmem:[%s4 + $0x6c] sm:$0xf] %v1338
  %1595 = vst [vmem:[%s4 + $0x70] sm:$0xf] %v1339
  %1596 = vst [vmem:[%s4 + $0x74] sm:$0xf] %v1340
  %1597 = vst [vmem:[%s4 + $0x78] sm:$0xf] %v1341
  %1598 = vst [vmem:[%s4 + $0x7c] sm:$0xf] %v1342
  %1599 = vst [vmem:[%s4 + $0x80] sm:$0xf] %v1343
  %1600 = vst [vmem:[%s4 + $0x84] sm:$0xf] %v1344
  %1601 = vst [vmem:[%s4 + $0x88] sm:$0xf] %v1345
  %1602 = vst [vmem:[%s4 + $0x8c] sm:$0xf] %v1346
  %1603 = vst [vmem:[%s4 + $0x90] sm:$0xf] %v1347
  %1604 = vst [vmem:[%s4 + $0x94] sm:$0xf] %v1348
  %1605 = vst [vmem:[%s4 + $0x98] sm:$0xf] %v1349
  %1606 = vst [vmem:[%s4 + $0x9c] sm:$0xf] %v1350
  %1607 = vst [vmem:[%s4 + $0xa0] sm:$0xf] %v1351
  %1608 = vst [vmem:[%s4 + $0xa4] sm:$0xf] %v1352
  %1609 = vst [vmem:[%s4 + $0xa8] sm:$0xf] %v1353
  %1610 = vst [vmem:[%s4 + $0xac] sm:$0xf] %v1354
  %1611 = vst [vmem:[%s4 + $0xb0] sm:$0xf] %v1355
  %1612 = vst [vmem:[%s4 + $0xb4] sm:$0xf] %v1356
  %1613 = vst [vmem:[%s4 + $0xb8] sm:$0xf] %v1357
  %1614 = vst [vmem:[%s4 + $0xbc] sm:$0xf] %v1358
  %1615 = vst [vmem:[%s4 + $0xc0] sm:$0xf] %v1359
  %1616 = vst [vmem:[%s4 + $0xc4] sm:$0xf] %v1360
  %1617 = vst [vmem:[%s4 + $0xc8] sm:$0xf] %v1361
  %1618 = vst [vmem:[%s4 + $0xcc] sm:$0xf] %v1362
  %1619 = vst [vmem:[%s4 + $0xd0] sm:$0xf] %v1363
  %1620 = vst [vmem:[%s4 + $0xd4] sm:$0xf] %v1364
  %1621 = vst [vmem:[%s4 + $0xd8] sm:$0xf] %v1365
  %1622 = vst [vmem:[%s4 + $0xdc] sm:$0xf] %v1366
  %1623 = vst [vmem:[%s4 + $0xe0] sm:$0xf] %v1367
  %1624 = vst [vmem:[%s4 + $0xe4] sm:$0xf] %v1368
  %1625 = vst [vmem:[%s4 + $0xe8] sm:$0xf] %v1369
  %1626 = vst [vmem:[%s4 + $0xec] sm:$0xf] %v1370
  %1627 = vst [vmem:[%s4 + $0xf0] sm:$0xf] %v1371
  %1628 = vst [vmem:[%s4 + $0xf4] sm:$0xf] %v1372
  %1629 = vst [vmem:[%s4 + $0xf8] sm:$0xf] %v1373
  %1630 = vst [vmem:[%s4 + $0xfc] sm:$0xf] %v1374
  %1631 = vst [vmem:[%s4 + $0x100] sm:$0xf] %v1375
  %1632 = vst [vmem:[%s4 + $0x104] sm:$0xf] %v1376
  %1633 = vst [vmem:[%s4 + $0x108] sm:$0xf] %v1377
  %1634 = vst [vmem:[%s4 + $0x10c] sm:$0xf] %v1378
  %1635 = vst [vmem:[%s4 + $0x110] sm:$0xf] %v1379
  %1636 = vst [vmem:[%s4 + $0x114] sm:$0xf] %v1380
  %1637 = vst [vmem:[%s4 + $0x118] sm:$0xf] %v1381
  %1638 = vst [vmem:[%s4 + $0x11c] sm:$0xf] %v1382
  %1639 = vst [vmem:[%s4 + $0x120] sm:$0xf] %v1383
  %1640 = vst [vmem:[%s4 + $0x124] sm:$0xf] %v1384
  %1641 = vst [vmem:[%s4 + $0x128] sm:$0xf] %v1385
  %1642 = vst [vmem:[%s4 + $0x12c] sm:$0xf] %v1386
  %1643 = vst [vmem:[%s4 + $0x130] sm:$0xf] %v1387
  %1644 = vst [vmem:[%s4 + $0x134] sm:$0xf] %v1388
  %1645 = vst [vmem:[%s4 + $0x138] sm:$0xf] %v1389
  %1646 = vst [vmem:[%s4 + $0x13c] sm:$0xf] %v1390
  %1647 = vst [vmem:[%s4 + $0x140] sm:$0xf] %v1391
  %1648 = vst [vmem:[%s4 + $0x144] sm:$0xf] %v1392
  %1649 = vst [vmem:[%s4 + $0x148] sm:$0xf] %v1393
  %1650 = vst [vmem:[%s4 + $0x14c] sm:$0xf] %v1394
  %1651 = vst [vmem:[%s4 + $0x150] sm:$0xf] %v1395
  %1652 = vst [vmem:[%s4 + $0x154] sm:$0xf] %v1396
  %1653 = vst [vmem:[%s4 + $0x158] sm:$0xf] %v1397
  %1654 = vst [vmem:[%s4 + $0x15c] sm:$0xf] %v1398
  %1655 = vst [vmem:[%s4 + $0x160] sm:$0xf] %v1399
  %1656 = vst [vmem:[%s4 + $0x164] sm:$0xf] %v1400
  %1657 = vst [vmem:[%s4 + $0x168] sm:$0xf] %v1401
  %1658 = vst [vmem:[%s4 + $0x16c] sm:$0xf] %v1402
  %1659 = vst [vmem:[%s4 + $0x170] sm:$0xf] %v1403
  %1660 = vst [vmem:[%s4 + $0x174] sm:$0xf] %v1404
  %1661 = vst [vmem:[%s4 + $0x178] sm:$0xf] %v1405
  %1662 = vst [vmem:[%s4 + $0x17c] sm:$0xf] %v1406
  %1663 = vst [vmem:[%s4 + $0x180] sm:$0xf] %v1407
  %1664 = vst [vmem:[%s4 + $0x184] sm:$0xf] %v1408
  %1665 = vst [vmem:[%s4 + $0x188] sm:$0xf] %v1409
  %1666 = vst [vmem:[%s4 + $0x18c] sm:$0xf] %v1410
  %1667 = vst [vmem:[%s4 + $0x190] sm:$0xf] %v1411
  %1668 = vst [vmem:[%s4 + $0x194] sm:$0xf] %v1412
  %1669 = vst [vmem:[%s4 + $0x198] sm:$0xf] %v1413
  %1670 = vst [vmem:[%s4 + $0x19c] sm:$0xf] %v1414
  %1671 = vst [vmem:[%s4 + $0x1a0] sm:$0xf] %v1415
  %1672 = vst [vmem:[%s4 + $0x1a4] sm:$0xf] %v1416
  %1673 = vst [vmem:[%s4 + $0x1a8] sm:$0xf] %v1417
  %1674 = vst [vmem:[%s4 + $0x1ac] sm:$0xf] %v1418
  %1675 = vst [vmem:[%s4 + $0x1b0] sm:$0xf] %v1419
  %1676 = vst [vmem:[%s4 + $0x1b4] sm:$0xf] %v1420
  %1677 = vst [vmem:[%s4 + $0x1b8] sm:$0xf] %v1421
  %1678 = vst [vmem:[%s4 + $0x1bc] sm:$0xf] %v1422
  %1679 = vst [vmem:[%s4 + $0x1c0] sm:$0xf] %v1423
  %1680 = vst [vmem:[%s4 + $0x1c4] sm:$0xf] %v1424
  %1681 = vst [vmem:[%s4 + $0x1c8] sm:$0xf] %v1425
  %1682 = vst [vmem:[%s4 + $0x1cc] sm:$0xf] %v1426
  %1683 = vst [vmem:[%s4 + $0x1d0] sm:$0xf] %v1427
  %1684 = vst [vmem:[%s4 + $0x1d4] sm:$0xf] %v1428
  %1685 = vst [vmem:[%s4 + $0x1d8] sm:$0xf] %v1429
  %1686 = vst [vmem:[%s4 + $0x1dc] sm:$0xf] %v1430
  %1687 = vst [vmem:[%s4 + $0x1e0] sm:$0xf] %v1431
  %1688 = vst [vmem:[%s4 + $0x1e4] sm:$0xf] %v1432
  %1689 = vst [vmem:[%s4 + $0x1e8] sm:$0xf] %v1433
  %1690 = vst [vmem:[%s4 + $0x1ec] sm:$0xf] %v1434
  %1691 = vst [vmem:[%s4 + $0x1f0] sm:$0xf] %v1435
  %1692 = vst [vmem:[%s4 + $0x1f4] sm:$0xf] %v1436
  %1693 = vst [vmem:[%s4 + $0x1f8] sm:$0xf] %v1437
  %1694 = vst [vmem:[%s4 + $0x1fc] sm:$0xf] %v1438
  // Predicated region
  $region18: #{rsu4_forward.31} parent=0 // pred_check
    _
  $region19: #{rsu4_forward.31} parent=0 // pred_check_branch
    %1696 = sbr.rel (0) target = $region21
  $region20: #{rsu4_forward.31} parent=0 // pred_region
    _
  $region21: #{rsu4_forward.31} parent=0 // pred_fallthru
    _
  // Predicated region
  $region22: #{rsu4_forward.31} parent=0 // pred_check
    _
  $region23: #{rsu4_forward.31} parent=0 // pred_check_branch
    %1698 = sbr.rel (0) target = $region25
  $region24: #{rsu4_forward.31} parent=0 // pred_region
    _
  $region25: #{rsu4_forward.31} parent=0 // pred_fallthru
    _

</llo_original>
